<compile_context>
chip_gen: v7x
topology: tpu7x:2x2x1
jax: 0.10.0
libtpu: 0.0.40
codegen_flags: <defaults>
</compile_context>

<pallas_src>
import functools

import jax
import jax.numpy as jnp
import numpy as np
from jax.experimental import pallas as pl
from jax.experimental.pallas import tpu as pltpu


# ----------------------------------------------------------------------------
# Tiling helper
# ----------------------------------------------------------------------------
def _pick_tile_m(M, cap=512):
    """Row-tile size: whole array if small, else the largest multiple of 8
    <= cap that divides M (avoids edge blocks); falls back to cap (Pallas
    masks out-of-bounds writes on the last block)."""
    if M <= cap:
        return M
    for t in range(cap, 127, -8):
        if M % t == 0:
            return t
    return cap


# ----------------------------------------------------------------------------
# Pallas kernel 1: fused  out = [relu](x @ w + b)   (used for the conv matmuls)
# ----------------------------------------------------------------------------
def _matmul_bias_relu_kernel(x_ref, w_ref, b_ref, o_ref, *, apply_relu: bool):
    acc = jnp.dot(x_ref[...], w_ref[...], preferred_element_type=jnp.float32)
    acc = acc + b_ref[...]                       # (1, N) f32, broadcasts over rows
    if apply_relu:
        acc = jnp.maximum(acc, 0.0)
    o_ref[...] = acc.astype(o_ref.dtype)


def pallas_matmul_bias_relu(x, w, b, *, relu=True, out_dtype=jnp.bfloat16):
    """x: (M, K) bf16, w: (K, N) bf16, b: (N,) f32 -> (M, N) out_dtype."""
    M, K = x.shape
    K2, N = w.shape
    assert K == K2, (K, K2)
    tm = _pick_tile_m(M)
    grid = (pl.cdiv(M, tm),)
    kernel = functools.partial(_matmul_bias_relu_kernel, apply_relu=relu)
    cost = pl.CostEstimate(
        flops=2 * M * K * N,
        transcendentals=0,
        bytes_accessed=int(M * K * x.dtype.itemsize + K * N * w.dtype.itemsize
                           + N * 4 + M * N * jnp.dtype(out_dtype).itemsize),
    )
    return pl.pallas_call(
        kernel,
        out_shape=jax.ShapeDtypeStruct((M, N), out_dtype),
        grid=grid,
        in_specs=[
            pl.BlockSpec((tm, K), lambda i: (i, 0)),   # row tile, pipelined
            pl.BlockSpec((K, N), lambda i: (0, 0)),    # weight resident across M
            pl.BlockSpec((1, N), lambda i: (0, 0)),    # bias resident
        ],
        out_specs=pl.BlockSpec((tm, N), lambda i: (i, 0)),
        compiler_params=pltpu.CompilerParams(dimension_semantics=("parallel",)),
        cost_estimate=cost,
    )(x, w, b.reshape(1, N).astype(jnp.float32))


# ----------------------------------------------------------------------------
# Pallas kernel 2: fused head  h = relu(x @ w1 + b1); out = h @ w2 + b2
# w2/b2 are padded to 128 output lanes ([pi(4) | value(1) | zeros(123)]) so the
# store is lane-dense; pi/value are sliced out in the wrapper.
# ----------------------------------------------------------------------------
def _fused_head_kernel(x_ref, w1_ref, b1_ref, w2_ref, b2_ref, o_ref):
    h = jnp.dot(x_ref[...], w1_ref[...], preferred_element_type=jnp.float32)
    h = jnp.maximum(h + b1_ref[...], 0.0)
    out = jnp.dot(h.astype(w2_ref.dtype), w2_ref[...],
                  preferred_element_type=jnp.float32)
    o_ref[...] = out + b2_ref[...]


def pallas_fused_head(x, w1, b1, w2, b2):
    """x: (M, K) bf16, w1: (K, D) bf16, w2: (D, N) bf16 -> (M, N) f32."""
    M, K = x.shape
    K1, D = w1.shape
    D2, N = w2.shape
    assert K == K1 and D == D2
    tm = _pick_tile_m(M)
    grid = (pl.cdiv(M, tm),)
    cost = pl.CostEstimate(
        flops=2 * M * K * D + 2 * M * D * N,
        transcendentals=0,
        bytes_accessed=int(M * K * 2 + K * D * 2 + D * N * 2 + (D + N) * 4 + M * N * 4),
    )
    return pl.pallas_call(
        _fused_head_kernel,
        out_shape=jax.ShapeDtypeStruct((M, N), jnp.float32),
        grid=grid,
        in_specs=[
            pl.BlockSpec((tm, K), lambda i: (i, 0)),
            pl.BlockSpec((K, D), lambda i: (0, 0)),
            pl.BlockSpec((1, D), lambda i: (0, 0)),
            pl.BlockSpec((D, N), lambda i: (0, 0)),
            pl.BlockSpec((1, N), lambda i: (0, 0)),
        ],
        out_specs=pl.BlockSpec((tm, N), lambda i: (i, 0)),
        compiler_params=pltpu.CompilerParams(dimension_semantics=("parallel",)),
        cost_estimate=cost,
    )(x, w1, b1.reshape(1, D).astype(jnp.float32),
      w2, b2.reshape(1, N).astype(jnp.float32))


# ----------------------------------------------------------------------------
# im2col glue (plain JAX), NHWC, no transposes.  Feature ordering of a patch
# row is (KH, KW, Cin), matching the one-time weight permutation below.
# ----------------------------------------------------------------------------
def im2col_nhwc(x, kh, kw, stride):
    B, H, W, C = x.shape
    OH = (H - kh) // stride + 1
    OW = (W - kw) // stride + 1
    cols = []
    for i in range(kh):
        for j in range(kw):
            cols.append(
                x[:, i:i + stride * OH:stride, j:j + stride * OW:stride, :]
            )                                     # (B, OH, OW, C)
    p = jnp.stack(cols, axis=3)                   # (B, OH, OW, KH*KW, C)
    return p.reshape(B * OH * OW, kh * kw * C), OH, OW


def conv2d_relu_nhwc(x_nhwc, w_mat, b, *, stride, kh, kw, cout):
    """x_nhwc bf16, w_mat: (KH*KW*Cin, Cout) bf16 -> NHWC bf16 output, ReLU'd."""
    B = x_nhwc.shape[0]
    patches, OH, OW = im2col_nhwc(x_nhwc, kh, kw, stride)
    out = pallas_matmul_bias_relu(patches, w_mat, b, relu=True,
                                  out_dtype=jnp.bfloat16)
    return out.reshape(B, OH, OW, cout)           # contiguous reshape, no copy


# ----------------------------------------------------------------------------
# Parameter init (PyTorch layout / PyTorch-like uniform init) and a one-time
# conversion to the kernel layout (NHWC conv weights, NHWC-permuted lin_w,
# concatenated+padded head weights, bf16 matmul operands).
# ----------------------------------------------------------------------------
def init_torch_params(key):
    def uni(k, shape, fan_in):
        bound = 1.0 / np.sqrt(fan_in)
        return jax.random.uniform(k, shape, jnp.float32, -bound, bound)

    ks = jax.random.split(key, 12)
    return {
        "conv1_w": uni(ks[0], (32, 4, 8, 8), 4 * 8 * 8),
        "conv1_b": uni(ks[1], (32,), 4 * 8 * 8),
        "conv2_w": uni(ks[2], (64, 32, 4, 4), 32 * 4 * 4),
        "conv2_b": uni(ks[3], (64,), 32 * 4 * 4),
        "conv3_w": uni(ks[4], (64, 64, 3, 3), 64 * 3 * 3),
        "conv3_b": uni(ks[5], (64,), 64 * 3 * 3),
        "lin_w": uni(ks[6], (128, 7 * 7 * 64), 7 * 7 * 64),
        "lin_b": uni(ks[7], (128,), 7 * 7 * 64),
        "pi_w": uni(ks[8], (4, 128), 128),
        "pi_b": uni(ks[9], (4,), 128),
        "val_w": uni(ks[10], (1, 128), 128),
        "val_b": uni(ks[11], (1,), 128),
    }


def prepare_params(tp):
    def conv_w(w):  # (Cout, Cin, KH, KW) -> (KH*KW*Cin, Cout), bf16
        co, ci, kh, kw = w.shape
        return jnp.transpose(w, (2, 3, 1, 0)).reshape(kh * kw * ci, co).astype(jnp.bfloat16)

    # lin_w.T rows are in PyTorch (C, H, W) flatten order; permute once to the
    # NHWC (H, W, C) flatten order the kernel path uses.
    lin_w_t = tp["lin_w"].T                                     # (3136, 128)
    lin_w_nhwc = (lin_w_t.reshape(64, 7, 7, 128)
                         .transpose(1, 2, 0, 3)
                         .reshape(7 * 7 * 64, 128))

    head_w = jnp.zeros((128, 128), jnp.float32)
    head_w = head_w.at[:, 0:4].set(tp["pi_w"].T)                # pi logits cols 0..3
    head_w = head_w.at[:, 4:5].set(tp["val_w"].T)               # value col 4
    head_b = jnp.zeros((128,), jnp.float32)
    head_b = head_b.at[0:4].set(tp["pi_b"]).at[4].set(tp["val_b"][0])

    return {
        "conv1_w": conv_w(tp["conv1_w"]), "conv1_b": tp["conv1_b"],
        "conv2_w": conv_w(tp["conv2_w"]), "conv2_b": tp["conv2_b"],
        "conv3_w": conv_w(tp["conv3_w"]), "conv3_b": tp["conv3_b"],
        "lin_w": lin_w_nhwc.astype(jnp.bfloat16), "lin_b": tp["lin_b"],
        "head_w": head_w.astype(jnp.bfloat16), "head_b": head_b,
    }


# ----------------------------------------------------------------------------
# Full forward pass.  Accepts NCHW observations (PyTorch convention), returns
# (pi_logits, value) — the Categorical's sufficient statistic is the logits.
# ----------------------------------------------------------------------------
@jax.jit
def model_forward(params, obs_nchw):
    B = obs_nchw.shape[0]
    x = jnp.transpose(obs_nchw, (0, 2, 3, 1)).astype(jnp.bfloat16)   # one-time NHWC
    h = conv2d_relu_nhwc(x, params["conv1_w"], params["conv1_b"],
                         stride=4, kh=8, kw=8, cout=32)               # (B,20,20,32)
    h = conv2d_relu_nhwc(h, params["conv2_w"], params["conv2_b"],
                         stride=2, kh=4, kw=4, cout=64)               # (B,9,9,64)
    h = conv2d_relu_nhwc(h, params["conv3_w"], params["conv3_b"],
                         stride=1, kh=3, kw=3, cout=64)               # (B,7,7,64)
    h = h.reshape(B, 7 * 7 * 64)                                      # NHWC flatten
    out = pallas_fused_head(h, params["lin_w"], params["lin_b"],
                            params["head_w"], params["head_b"])       # (B,128) f32
    pi_logits = out[:, :4]
    value = out[:, 4]
    return pi_logits, value


# ----------------------------------------------------------------------------
# Pure-JAX f32 reference (PyTorch-layout params) for a correctness check.
# ----------------------------------------------------------------------------
def reference_forward(tp, obs):
    def conv(x, w, b, s):
        y = jax.lax.conv_general_dilated(
            x, w, window_strides=(s, s), padding="VALID",
            dimension_numbers=("NCHW", "OIHW", "NCHW"))
        return jnp.maximum(y + b[None, :, None, None], 0.0)

    h = conv(obs, tp["conv1_w"], tp["conv1_b"], 4)
    h = conv(h, tp["conv2_w"], tp["conv2_b"], 2)
    h = conv(h, tp["conv3_w"], tp["conv3_b"], 1)
    h = h.reshape(h.shape[0], -1)
    h = jnp.maximum(h @ tp["lin_w"].T + tp["lin_b"], 0.0)
    pi = h @ tp["pi_w"].T + tp["pi_b"]
    v = (h @ tp["val_w"].T + tp["val_b"]).reshape(-1)
    return pi, v


if __name__ == "__main__":
    key = jax.random.PRNGKey(0)
    pkey, xkey = jax.random.split(key)
    torch_params = init_torch_params(pkey)
    params = prepare_params(torch_params)

    # Architecture implies 84x84x4 observations (Atari frame stack); batch=2.
    obs = jax.random.uniform(xkey, (2, 4, 84, 84), jnp.float32)

    pi_logits, value = model_forward(params, obs)
    jax.block_until_ready((pi_logits, value))

    assert pi_logits.shape == (2, 4), pi_logits.shape
    assert value.shape == (2,), value.shape
    assert bool(jnp.all(jnp.isfinite(pi_logits))) and bool(jnp.all(jnp.isfinite(value)))

    # bf16 MXU inputs vs f32 reference -> loose tolerance.
    pi_ref, v_ref = reference_forward(torch_params, obs)
    np.testing.assert_allclose(np.asarray(pi_logits), np.asarray(pi_ref),
                               rtol=3e-2, atol=3e-2)
    np.testing.assert_allclose(np.asarray(value), np.asarray(v_ref),
                               rtol=3e-2, atol=3e-2)
    print("KERNEL_OK")
</pallas_src>

<mosaic_0001>
module attributes {stable_mosaic.version = 11 : i64} {
  func.func @_matmul_bias_relu_kernel(%arg0: i32, %arg1: memref<400x256xbf16, #tpu.memory_space<vmem>>, %arg2: memref<256x32xbf16, #tpu.memory_space<vmem>>, %arg3: memref<1x32xf32, #tpu.memory_space<vmem>>, %arg4: memref<400x32xbf16, #tpu.memory_space<vmem>>) attributes {dimension_semantics = [#tpu.dimension_semantics<parallel>], iteration_bounds = array<i64: 2>, scalar_prefetch = 0 : i64, scratch_operands = 0 : i64, tpu.core_type = #tpu.core_type<tc>, window_params = [{transform_indices = @transform_0, window_bounds = array<i64: 400, 256>}, {pipeline_mode = #tpu.pipeline_mode<synchronous>, transform_indices = @transform_1, window_bounds = array<i64: 256, 32>}, {pipeline_mode = #tpu.pipeline_mode<synchronous>, transform_indices = @transform_2, window_bounds = array<i64: 1, 32>}, {transform_indices = @transform_3, window_bounds = array<i64: 400, 32>}]} {
    %c0 = arith.constant 0 : index
    %c0_0 = arith.constant 0 : index
    %0 = vector.load %arg1[%c0, %c0_0] : memref<400x256xbf16, #tpu.memory_space<vmem>>, vector<400x256xbf16>
    %c0_1 = arith.constant 0 : index
    %c0_2 = arith.constant 0 : index
    %1 = vector.load %arg2[%c0_1, %c0_2] : memref<256x32xbf16, #tpu.memory_space<vmem>>, vector<256x32xbf16>
    %cst = arith.constant dense<0.000000e+00> : vector<400x32xf32>
    %2 = tpu.matmul %0, %1, %cst {dimension_numbers = #tpu.dot_dimension_numbers<[1], [0], [0], [1], [0, 0, 1, 1], [], []>} : vector<400x256xbf16>, vector<256x32xbf16>, vector<400x32xf32> -> vector<400x32xf32>
    %c0_3 = arith.constant 0 : index
    %c0_4 = arith.constant 0 : index
    %3 = vector.load %arg3[%c0_3, %c0_4] : memref<1x32xf32, #tpu.memory_space<vmem>>, vector<1x32xf32>
    %4 = vector.broadcast %3 : vector<1x32xf32> to vector<400x32xf32>
    %5 = arith.addf %2, %4 : vector<400x32xf32>
    %cst_5 = arith.constant 0.000000e+00 : f32
    %6 = vector.broadcast %cst_5 : f32 to vector<400x32xf32>
    %7 = arith.maximumf %5, %6 : vector<400x32xf32>
    %8 = arith.truncf %7 : vector<400x32xf32> to vector<400x32xbf16>
    %c0_6 = arith.constant 0 : index
    %c0_7 = arith.constant 0 : index
    %9 = vector.load %arg4[%c0_6, %c0_7] : memref<400x32xbf16, #tpu.memory_space<vmem>>, vector<400x32xbf16>
    tpu.vector_store %arg4[%c0_6, %c0_7], %8 {strides = array<i32>} : memref<400x32xbf16, #tpu.memory_space<vmem>>, vector<400x32xbf16>,
    return
  }
  func.func @transform_0(%arg0: i32) -> (i32, i32) {
    %c0_i32 = arith.constant 0 : i32
    %c0_i32_0 = arith.constant 0 : i32
    return %arg0, %c0_i32 : i32, i32
  }
  func.func @transform_1(%arg0: i32) -> (i32, i32) {
    %c0_i32 = arith.constant 0 : i32
    %c0_i32_0 = arith.constant 0 : i32
    %c0_i32_1 = arith.constant 0 : i32
    return %c0_i32, %c0_i32_0 : i32, i32
  }
  func.func @transform_2(%arg0: i32) -> (i32, i32) {
    %c0_i32 = arith.constant 0 : i32
    %c0_i32_0 = arith.constant 0 : i32
    %c0_i32_1 = arith.constant 0 : i32
    return %c0_i32, %c0_i32_0 : i32, i32
  }
  func.func @transform_3(%arg0: i32) -> (i32, i32) {
    %c0_i32 = arith.constant 0 : i32
    %c0_i32_0 = arith.constant 0 : i32
    return %arg0, %c0_i32 : i32, i32
  }
}

module attributes {stable_mosaic.version = 11 : i64} {
  func.func @_matmul_bias_relu_kernel(%arg0: i32, %arg1: memref<162x512xbf16, #tpu.memory_space<vmem>>, %arg2: memref<512x64xbf16, #tpu.memory_space<vmem>>, %arg3: memref<1x64xf32, #tpu.memory_space<vmem>>, %arg4: memref<162x64xbf16, #tpu.memory_space<vmem>>) attributes {dimension_semantics = [#tpu.dimension_semantics<parallel>], iteration_bounds = array<i64: 1>, scalar_prefetch = 0 : i64, scratch_operands = 0 : i64, tpu.core_type = #tpu.core_type<tc>, window_params = [{transform_indices = @transform_0, window_bounds = array<i64: 162, 512>}, {pipeline_mode = #tpu.pipeline_mode<synchronous>, transform_indices = @transform_1, window_bounds = array<i64: 512, 64>}, {pipeline_mode = #tpu.pipeline_mode<synchronous>, transform_indices = @transform_2, window_bounds = array<i64: 1, 64>}, {transform_indices = @transform_3, window_bounds = array<i64: 162, 64>}]} {
    %c0 = arith.constant 0 : index
    %c0_0 = arith.constant 0 : index
    %0 = vector.load %arg1[%c0, %c0_0] : memref<162x512xbf16, #tpu.memory_space<vmem>>, vector<162x512xbf16>
    %c0_1 = arith.constant 0 : index
    %c0_2 = arith.constant 0 : index
    %1 = vector.load %arg2[%c0_1, %c0_2] : memref<512x64xbf16, #tpu.memory_space<vmem>>, vector<512x64xbf16>
    %cst = arith.constant dense<0.000000e+00> : vector<162x64xf32>
    %2 = tpu.matmul %0, %1, %cst {dimension_numbers = #tpu.dot_dimension_numbers<[1], [0], [0], [1], [0, 0, 1, 1], [], []>} : vector<162x512xbf16>, vector<512x64xbf16>, vector<162x64xf32> -> vector<162x64xf32>
    %c0_3 = arith.constant 0 : index
    %c0_4 = arith.constant 0 : index
    %3 = vector.load %arg3[%c0_3, %c0_4] : memref<1x64xf32, #tpu.memory_space<vmem>>, vector<1x64xf32>
    %4 = vector.broadcast %3 : vector<1x64xf32> to vector<162x64xf32>
    %5 = arith.addf %2, %4 : vector<162x64xf32>
    %cst_5 = arith.constant 0.000000e+00 : f32
    %6 = vector.broadcast %cst_5 : f32 to vector<162x64xf32>
    %7 = arith.maximumf %5, %6 : vector<162x64xf32>
    %8 = arith.truncf %7 : vector<162x64xf32> to vector<162x64xbf16>
    %c0_6 = arith.constant 0 : index
    %c0_7 = arith.constant 0 : index
    %9 = vector.load %arg4[%c0_6, %c0_7] : memref<162x64xbf16, #tpu.memory_space<vmem>>, vector<162x64xbf16>
    tpu.vector_store %arg4[%c0_6, %c0_7], %8 {strides = array<i32>} : memref<162x64xbf16, #tpu.memory_space<vmem>>, vector<162x64xbf16>,
    return
  }
  func.func @transform_0(%arg0: i32) -> (i32, i32) {
    %c0_i32 = arith.constant 0 : i32
    %c0_i32_0 = arith.constant 0 : i32
    return %arg0, %c0_i32 : i32, i32
  }
  func.func @transform_1(%arg0: i32) -> (i32, i32) {
    %c0_i32 = arith.constant 0 : i32
    %c0_i32_0 = arith.constant 0 : i32
    %c0_i32_1 = arith.constant 0 : i32
    return %c0_i32, %c0_i32_0 : i32, i32
  }
  func.func @transform_2(%arg0: i32) -> (i32, i32) {
    %c0_i32 = arith.constant 0 : i32
    %c0_i32_0 = arith.constant 0 : i32
    %c0_i32_1 = arith.constant 0 : i32
    return %c0_i32, %c0_i32_0 : i32, i32
  }
  func.func @transform_3(%arg0: i32) -> (i32, i32) {
    %c0_i32 = arith.constant 0 : i32
    %c0_i32_0 = arith.constant 0 : i32
    return %arg0, %c0_i32 : i32, i32
  }
}

module attributes {stable_mosaic.version = 11 : i64} {
  func.func @_matmul_bias_relu_kernel(%arg0: i32, %arg1: memref<98x576xbf16, #tpu.memory_space<vmem>>, %arg2: memref<576x64xbf16, #tpu.memory_space<vmem>>, %arg3: memref<1x64xf32, #tpu.memory_space<vmem>>, %arg4: memref<98x64xbf16, #tpu.memory_space<vmem>>) attributes {dimension_semantics = [#tpu.dimension_semantics<parallel>], iteration_bounds = array<i64: 1>, scalar_prefetch = 0 : i64, scratch_operands = 0 : i64, tpu.core_type = #tpu.core_type<tc>, window_params = [{transform_indices = @transform_0, window_bounds = array<i64: 98, 576>}, {pipeline_mode = #tpu.pipeline_mode<synchronous>, transform_indices = @transform_1, window_bounds = array<i64: 576, 64>}, {pipeline_mode = #tpu.pipeline_mode<synchronous>, transform_indices = @transform_2, window_bounds = array<i64: 1, 64>}, {transform_indices = @transform_3, window_bounds = array<i64: 98, 64>}]} {
    %c0 = arith.constant 0 : index
    %c0_0 = arith.constant 0 : index
    %0 = vector.load %arg1[%c0, %c0_0] : memref<98x576xbf16, #tpu.memory_space<vmem>>, vector<98x576xbf16>
    %c0_1 = arith.constant 0 : index
    %c0_2 = arith.constant 0 : index
    %1 = vector.load %arg2[%c0_1, %c0_2] : memref<576x64xbf16, #tpu.memory_space<vmem>>, vector<576x64xbf16>
    %cst = arith.constant dense<0.000000e+00> : vector<98x64xf32>
    %2 = tpu.matmul %0, %1, %cst {dimension_numbers = #tpu.dot_dimension_numbers<[1], [0], [0], [1], [0, 0, 1, 1], [], []>} : vector<98x576xbf16>, vector<576x64xbf16>, vector<98x64xf32> -> vector<98x64xf32>
    %c0_3 = arith.constant 0 : index
    %c0_4 = arith.constant 0 : index
    %3 = vector.load %arg3[%c0_3, %c0_4] : memref<1x64xf32, #tpu.memory_space<vmem>>, vector<1x64xf32>
    %4 = vector.broadcast %3 : vector<1x64xf32> to vector<98x64xf32>
    %5 = arith.addf %2, %4 : vector<98x64xf32>
    %cst_5 = arith.constant 0.000000e+00 : f32
    %6 = vector.broadcast %cst_5 : f32 to vector<98x64xf32>
    %7 = arith.maximumf %5, %6 : vector<98x64xf32>
    %8 = arith.truncf %7 : vector<98x64xf32> to vector<98x64xbf16>
    %c0_6 = arith.constant 0 : index
    %c0_7 = arith.constant 0 : index
    %9 = vector.load %arg4[%c0_6, %c0_7] : memref<98x64xbf16, #tpu.memory_space<vmem>>, vector<98x64xbf16>
    tpu.vector_store %arg4[%c0_6, %c0_7], %8 {strides = array<i32>} : memref<98x64xbf16, #tpu.memory_space<vmem>>, vector<98x64xbf16>,
    return
  }
  func.func @transform_0(%arg0: i32) -> (i32, i32) {
    %c0_i32 = arith.constant 0 : i32
    %c0_i32_0 = arith.constant 0 : i32
    return %arg0, %c0_i32 : i32, i32
  }
  func.func @transform_1(%arg0: i32) -> (i32, i32) {
    %c0_i32 = arith.constant 0 : i32
    %c0_i32_0 = arith.constant 0 : i32
    %c0_i32_1 = arith.constant 0 : i32
    return %c0_i32, %c0_i32_0 : i32, i32
  }
  func.func @transform_2(%arg0: i32) -> (i32, i32) {
    %c0_i32 = arith.constant 0 : i32
    %c0_i32_0 = arith.constant 0 : i32
    %c0_i32_1 = arith.constant 0 : i32
    return %c0_i32, %c0_i32_0 : i32, i32
  }
  func.func @transform_3(%arg0: i32) -> (i32, i32) {
    %c0_i32 = arith.constant 0 : i32
    %c0_i32_0 = arith.constant 0 : i32
    return %arg0, %c0_i32 : i32, i32
  }
}

module attributes {stable_mosaic.version = 11 : i64} {
  func.func @_fused_head_kernel(%arg0: i32, %arg1: memref<2x3136xbf16, #tpu.memory_space<vmem>>, %arg2: memref<3136x128xbf16, #tpu.memory_space<vmem>>, %arg3: memref<1x128xf32, #tpu.memory_space<vmem>>, %arg4: memref<128x128xbf16, #tpu.memory_space<vmem>>, %arg5: memref<1x128xf32, #tpu.memory_space<vmem>>, %arg6: memref<2x128xf32, #tpu.memory_space<vmem>>) attributes {dimension_semantics = [#tpu.dimension_semantics<parallel>], iteration_bounds = array<i64: 1>, scalar_prefetch = 0 : i64, scratch_operands = 0 : i64, tpu.core_type = #tpu.core_type<tc>, window_params = [{transform_indices = @transform_0, window_bounds = array<i64: 2, 3136>}, {pipeline_mode = #tpu.pipeline_mode<synchronous>, transform_indices = @transform_1, window_bounds = array<i64: 3136, 128>}, {pipeline_mode = #tpu.pipeline_mode<synchronous>, transform_indices = @transform_2, window_bounds = array<i64: 1, 128>}, {pipeline_mode = #tpu.pipeline_mode<synchronous>, transform_indices = @transform_3, window_bounds = array<i64: 128, 128>}, {pipeline_mode = #tpu.pipeline_mode<synchronous>, transform_indices = @transform_4, window_bounds = array<i64: 1, 128>}, {transform_indices = @transform_5, window_bounds = array<i64: 2, 128>}]} {
    %c0 = arith.constant 0 : index
    %c0_0 = arith.constant 0 : index
    %0 = vector.load %arg1[%c0, %c0_0] : memref<2x3136xbf16, #tpu.memory_space<vmem>>, vector<2x3136xbf16>
    %c0_1 = arith.constant 0 : index
    %c0_2 = arith.constant 0 : index
    %1 = vector.load %arg2[%c0_1, %c0_2] : memref<3136x128xbf16, #tpu.memory_space<vmem>>, vector<3136x128xbf16>
    %cst = arith.constant dense<0.000000e+00> : vector<2x128xf32>
    %2 = tpu.matmul %0, %1, %cst {dimension_numbers = #tpu.dot_dimension_numbers<[1], [0], [0], [1], [0, 0, 1, 1], [], []>} : vector<2x3136xbf16>, vector<3136x128xbf16>, vector<2x128xf32> -> vector<2x128xf32>
    %c0_3 = arith.constant 0 : index
    %c0_4 = arith.constant 0 : index
    %3 = vector.load %arg3[%c0_3, %c0_4] : memref<1x128xf32, #tpu.memory_space<vmem>>, vector<1x128xf32>
    %4 = vector.broadcast %3 : vector<1x128xf32> to vector<2x128xf32>
    %5 = arith.addf %2, %4 : vector<2x128xf32>
    %cst_5 = arith.constant 0.000000e+00 : f32
    %6 = vector.broadcast %cst_5 : f32 to vector<2x128xf32>
    %7 = arith.maximumf %5, %6 : vector<2x128xf32>
    %8 = arith.truncf %7 : vector<2x128xf32> to vector<2x128xbf16>
    %c0_6 = arith.constant 0 : index
    %c0_7 = arith.constant 0 : index
    %9 = vector.load %arg4[%c0_6, %c0_7] : memref<128x128xbf16, #tpu.memory_space<vmem>>, vector<128x128xbf16>
    %cst_8 = arith.constant dense<0.000000e+00> : vector<2x128xf32>
    %10 = tpu.matmul %8, %9, %cst_8 {dimension_numbers = #tpu.dot_dimension_numbers<[1], [0], [0], [1], [0, 0, 1, 1], [], []>} : vector<2x128xbf16>, vector<128x128xbf16>, vector<2x128xf32> -> vector<2x128xf32>
    %c0_9 = arith.constant 0 : index
    %c0_10 = arith.constant 0 : index
    %11 = vector.load %arg5[%c0_9, %c0_10] : memref<1x128xf32, #tpu.memory_space<vmem>>, vector<1x128xf32>
    %12 = vector.broadcast %11 : vector<1x128xf32> to vector<2x128xf32>
    %13 = arith.addf %10, %12 : vector<2x128xf32>
    %c0_11 = arith.constant 0 : index
    %c0_12 = arith.constant 0 : index
    %14 = vector.load %arg6[%c0_11, %c0_12] : memref<2x128xf32, #tpu.memory_space<vmem>>, vector<2x128xf32>
    tpu.vector_store %arg6[%c0_11, %c0_12], %13 {strides = array<i32>} : memref<2x128xf32, #tpu.memory_space<vmem>>, vector<2x128xf32>,
    return
  }
  func.func @transform_0(%arg0: i32) -> (i32, i32) {
    %c0_i32 = arith.constant 0 : i32
    %c0_i32_0 = arith.constant 0 : i32
    return %arg0, %c0_i32 : i32, i32
  }
  func.func @transform_1(%arg0: i32) -> (i32, i32) {
    %c0_i32 = arith.constant 0 : i32
    %c0_i32_0 = arith.constant 0 : i32
    %c0_i32_1 = arith.constant 0 : i32
    return %c0_i32, %c0_i32_0 : i32, i32
  }
  func.func @transform_2(%arg0: i32) -> (i32, i32) {
    %c0_i32 = arith.constant 0 : i32
    %c0_i32_0 = arith.constant 0 : i32
    %c0_i32_1 = arith.constant 0 : i32
    return %c0_i32, %c0_i32_0 : i32, i32
  }
  func.func @transform_3(%arg0: i32) -> (i32, i32) {
    %c0_i32 = arith.constant 0 : i32
    %c0_i32_0 = arith.constant 0 : i32
    %c0_i32_1 = arith.constant 0 : i32
    return %c0_i32, %c0_i32_0 : i32, i32
  }
  func.func @transform_4(%arg0: i32) -> (i32, i32) {
    %c0_i32 = arith.constant 0 : i32
    %c0_i32_0 = arith.constant 0 : i32
    %c0_i32_1 = arith.constant 0 : i32
    return %c0_i32, %c0_i32_0 : i32, i32
  }
  func.func @transform_5(%arg0: i32) -> (i32, i32) {
    %c0_i32 = arith.constant 0 : i32
    %c0_i32_0 = arith.constant 0 : i32
    return %arg0, %c0_i32 : i32, i32
  }
}

</mosaic_0001>

<llo_original>
// kernel: model_forward.4
$region0: #{model_forward.4}
  #allocation0 [shape = 'u32[]', space=smem, size = 0x4, offset = 0x4, fixed_abs, tag = 'smem constant byte address 0x4 - core index']
  #allocation1 [shape = 'u32[144,128]{1,0:T(1,128)}', space=vmem, size = 0x12000, scoped, tag = 'internal scratch']
  %s0 = inlined_call_operand.vmem [shape: bf16[800,256], index: 0, kind: input, shape index: {}]
  %s1 = inlined_call_operand.vmem [shape: bf16[256,32], index: 1, kind: input, shape index: {}]
  %s2 = inlined_call_operand.vmem [shape: f32[1,32], index: 2, kind: input, shape index: {}]
  %s3 = inlined_call_operand.vmem [shape: bf16[800,32], index: 3, kind: output, shape index: {}]
  %s4 = sld [smem:[#allocation0]]
  $region45: #{model_forward.4} parent=0
    _
  %s6 = ssub.s32 1, %s4
  %s7 = scalar_select 0, %s6, %s4
  loop: start=0, step=1, limit=4
  $region2: #{model_forward.4} parent=0 // loop_pre_header
    _
  $region3: #{model_forward.4} parent=0 // loop_header
    %s9 = sphi 0, %s13
    %p10 = scmp.ge.s32.totalorder %s9, 4
    %s19 = sphi 0, %s21
    %s22 = sphi 0, %s19
    %s23 = sphi 0, %s22
    %s39 = sphi 0, %s23
    %s43 = sphi 0, %s43
    %s45 = sphi 0, %s43
    %s46 = sphi 0, %s45
    %s60 = sphi 0, %s46
    %s64 = sphi 0, %s64
    %s66 = sphi 0, %s64
    %s67 = sphi 0, %s66
    %s81 = sphi 0, %s67
    %s87 = sphi 0, %s89
    %s90 = sphi 0, %s87
    %s91 = sphi 0, %s90
    %s107 = sphi 0, %s91
  $region4: #{model_forward.4} parent=0 // loop_header_branch
    %12 = sbr.rel (%p10) target = $region8
  $region5: #{model_forward.4} parent=0 // loop_body
    %s14 = ssub.s32 %s9, 1
    %s15 = ssub.s32 %s9, 2
    %s16 = sadd.s32 %s9, 1
    %s17 = ssub.s32 %s9, %s16
    %p18 = scmp.eq.s32.totalorder %s17, 0
    %s20 = sadd.s32 %s19, 1
    %s21 = scalar_select %p18, %s19, %s20
    %p24 = pneg %p18
    %p25 = scmp.eq.s32.totalorder %s9, 1
    %p26 = por %p24, %p25
    %p27 = scmp.ne.s32.totalorder %s19, %s22
    %p28 = scmp.eq.s32.totalorder %s9, 0
    %p29 = por %p27, %p28
    %p30 = scmp.ne.s32.totalorder %s19, %s22
    %p31 = scmp.eq.s32.totalorder %s14, 1
    %p32 = por %p30, %p31
    %p33 = scmp.ne.s32.totalorder %s22, %s23
    %p34 = scmp.eq.s32.totalorder %s14, 0
    %p35 = por %p33, %p34
    %p36 = scmp.ne.s32.totalorder %s22, %s23
    %p37 = scmp.eq.s32.totalorder %s15, 1
    %p38 = por %p36, %p37
    %p40 = scmp.ne.s32.totalorder %s23, %s39
    %p41 = scmp.eq.s32.totalorder %s15, 0
    %p42 = por %p40, %p41
    %s44 = sadd.s32 %s43, 1
    %p47 = scmp.eq.s32.totalorder %s9, 1
    %p48 = scmp.ne.s32.totalorder %s43, %s45
    %p49 = scmp.eq.s32.totalorder %s9, 0
    %p50 = por %p48, %p49
    %p51 = scmp.ne.s32.totalorder %s43, %s45
    %p52 = scmp.eq.s32.totalorder %s14, 1
    %p53 = por %p51, %p52
    %p54 = scmp.ne.s32.totalorder %s45, %s46
    %p55 = scmp.eq.s32.totalorder %s14, 0
    %p56 = por %p54, %p55
    %p57 = scmp.ne.s32.totalorder %s45, %s46
    %p58 = scmp.eq.s32.totalorder %s15, 1
    %p59 = por %p57, %p58
    %p61 = scmp.ne.s32.totalorder %s46, %s60
    %p62 = scmp.eq.s32.totalorder %s15, 0
    %p63 = por %p61, %p62
    %s65 = sadd.s32 %s64, 1
    %p68 = scmp.eq.s32.totalorder %s9, 1
    %p69 = scmp.ne.s32.totalorder %s64, %s66
    %p70 = scmp.eq.s32.totalorder %s9, 0
    %p71 = por %p69, %p70
    %p72 = scmp.ne.s32.totalorder %s64, %s66
    %p73 = scmp.eq.s32.totalorder %s14, 1
    %p74 = por %p72, %p73
    %p75 = scmp.ne.s32.totalorder %s66, %s67
    %p76 = scmp.eq.s32.totalorder %s14, 0
    %p77 = por %p75, %p76
    %p78 = scmp.ne.s32.totalorder %s66, %s67
    %p79 = scmp.eq.s32.totalorder %s15, 1
    %p80 = por %p78, %p79
    %p82 = scmp.ne.s32.totalorder %s67, %s81
    %p83 = scmp.eq.s32.totalorder %s15, 0
    %p84 = por %p82, %p83
    %s85 = ssub.s32 %s9, %s16
    %p86 = scmp.eq.s32.totalorder %s85, 0
    %s88 = sadd.s32 %s87, 1
    %s89 = scalar_select %p86, %s87, %s88
    %p92 = pneg %p86
    %p93 = scmp.eq.s32.totalorder %s9, 1
    %p94 = por %p92, %p93
    %p95 = scmp.ne.s32.totalorder %s87, %s90
    %p96 = scmp.eq.s32.totalorder %s9, 0
    %p97 = por %p95, %p96
    %p98 = scmp.ne.s32.totalorder %s87, %s90
    %p99 = scmp.eq.s32.totalorder %s14, 1
    %p100 = por %p98, %p99
    %p101 = scmp.ne.s32.totalorder %s90, %s91
    %p102 = scmp.eq.s32.totalorder %s14, 0
    %p103 = por %p101, %p102
    %p104 = scmp.ne.s32.totalorder %s90, %s91
    %p105 = scmp.eq.s32.totalorder %s15, 1
    %p106 = por %p104, %p105
    %p108 = scmp.ne.s32.totalorder %s91, %s107
    %p109 = scmp.eq.s32.totalorder %s15, 0
    %p110 = por %p108, %p109
    %p111 = scmp.le.s32.totalorder 1, %s9
    %p112 = scmp.lt.s32.totalorder %s9, 3
    %p113 = pnand %p111, %p112
    %p114 = pneg %p113
    // Predicated region
    $region9: #{model_forward.4} parent=5 // pred_check
      _
    $region10: #{model_forward.4} parent=5 // pred_check_branch
      %116 = sbr.rel (%p113) target = $region12
    $region11: #{model_forward.4} parent=5 // pred_region
      %s117 = ssub.s32 %s9, 1
      // Predicated region
      $region13: #{model_forward.4} parent=11 // pred_check
        %p118 = pneg %p56
      $region14: #{model_forward.4} parent=11 // pred_check_branch
        %120 = sbr.rel (%p118) target = $region16
      $region15: #{model_forward.4} parent=11 // pred_region
        _
      $region16: #{model_forward.4} parent=11 // pred_fallthru
        _
      // Predicated region
      $region17: #{model_forward.4} parent=11 // pred_check
        %p121 = pneg %p77
      $region18: #{model_forward.4} parent=11 // pred_check_branch
        %123 = sbr.rel (%p121) target = $region20
      $region19: #{model_forward.4} parent=11 // pred_region
        _
      $region20: #{model_forward.4} parent=11 // pred_fallthru
        _
    $region12: #{model_forward.4} parent=5 // pred_fallthru
      _
    %p124 = scmp.lt.s32.totalorder %s9, 2
    // Predicated region
    $region21: #{model_forward.4} parent=5 // pred_check
      %p125 = pneg %p124
    $region22: #{model_forward.4} parent=5 // pred_check_branch
      %127 = sbr.rel (%p125) target = $region24
    $region23: #{model_forward.4} parent=5 // pred_region
      // Predicated region
      $region25: #{model_forward.4} parent=23 // pred_check
        %p128 = pneg %p29
      $region26: #{model_forward.4} parent=23 // pred_check_branch
        %130 = sbr.rel (%p128) target = $region28
      $region27: #{model_forward.4} parent=23 // pred_region
        %s131 = smul.u32 50, %s9
        %p132 = scmp.lt.s32.totalorder %s131, 99
        %s133 = scalar_select %p132, %s131, 99
        %s134 = smul.addr %s133, 2
        %s135 = smul.addr %s134, 4
        %s136 = scalar_lea.vmem %s0, %s135
        %s137 = smul.u32 50, %s9
      $region28: #{model_forward.4} parent=23 // pred_fallthru
        _
    $region24: #{model_forward.4} parent=5 // pred_fallthru
      _
    %p138 = scmp.le.s32.totalorder 1, %s9
    %p139 = scmp.lt.s32.totalorder %s9, 3
    %p140 = pnand %p138, %p139
    %p141 = pneg %p140
    // Predicated region
    $region29: #{model_forward.4} parent=5 // pred_check
      _
    $region30: #{model_forward.4} parent=5 // pred_check_branch
      %143 = sbr.rel (%p140) target = $region32
    $region31: #{model_forward.4} parent=5 // pred_region
      %s144 = ssub.s32 %s9, 1
      %s145 = smul.u32 50, %s14
      %p146 = scmp.lt.s32.totalorder %s145, 99
      %s147 = scalar_select %p146, %s145, 99
      %s148 = smul.addr %s147, 2
      %s149 = smul.addr %s148, 4
      %s150 = scalar_lea.vmem %s0, %s149
      %p151 = pneg %p35
      %p152 = pneg %p32
      %p153 = pneg %p56
      %p154 = pneg %p53
      %p155 = pneg %p77
      %p156 = pneg %p74
      %p157 = pneg %p103
      %p158 = pneg %p100
      %s159 = smul.u32 50, %s14
      %p160 = scmp.lt.s32.totalorder %s159, 99
      %s161 = scalar_select %p160, %s159, 99
      %s162 = smul.addr %s161, 4
      %s163 = scalar_lea.vmem %s3, %s162
      %s164 = smul.u32 50, %s14
      %p165 = scmp.lt.s32.totalorder %s164, 99
      %s166 = scalar_select %p165, %s164, 99
      %s167 = smul.addr %s166, 2
      %s168 = smul.addr %s167, 4
      %s169 = scalar_lea.vmem %s0, %s168
      %s170 = smul.u32 50, %s14
      %s171 = smul.u32 50, %s14
      %p172 = scmp.lt.s32.totalorder %s171, 99
      %s173 = scalar_select %p172, %s171, 99
      %s174 = smul.addr %s173, 4
      %s175 = scalar_lea.vmem %s3, %s174
      %s176 = smul.u32 50, %s14
      %v178 = vld [vmem:[%s169] sm:$0xff]
      %v179 = vld [vmem:[%s169 + $0x8] sm:$0xff]
      %v180 = vld [vmem:[%s169 + $0x10] sm:$0xff]
      %v181 = vld [vmem:[%s169 + $0x18] sm:$0xff]
      %v182 = vld [vmem:[%s169 + $0x20] sm:$0xff]
      %v183 = vld [vmem:[%s169 + $0x28] sm:$0xff]
      %v184 = vld [vmem:[%s169 + $0x30] sm:$0xff]
      %v185 = vld [vmem:[%s169 + $0x38] sm:$0xff]
      %v186 = vld [vmem:[%s169 + $0x40] sm:$0xff]
      %v187 = vld [vmem:[%s169 + $0x48] sm:$0xff]
      %v188 = vld [vmem:[%s169 + $0x50] sm:$0xff]
      %v189 = vld [vmem:[%s169 + $0x58] sm:$0xff]
      %v190 = vld [vmem:[%s169 + $0x60] sm:$0xff]
      %v191 = vld [vmem:[%s169 + $0x68] sm:$0xff]
      %v192 = vld [vmem:[%s169 + $0x70] sm:$0xff]
      %v193 = vld [vmem:[%s169 + $0x78] sm:$0xff]
      %v194 = vld [vmem:[%s169 + $0x80] sm:$0xff]
      %v195 = vld [vmem:[%s169 + $0x88] sm:$0xff]
      %v196 = vld [vmem:[%s169 + $0x90] sm:$0xff]
      %v197 = vld [vmem:[%s169 + $0x98] sm:$0xff]
      %v198 = vld [vmem:[%s169 + $0xa0] sm:$0xff]
      %v199 = vld [vmem:[%s169 + $0xa8] sm:$0xff]
      %v200 = vld [vmem:[%s169 + $0xb0] sm:$0xff]
      %v201 = vld [vmem:[%s169 + $0xb8] sm:$0xff]
      %v202 = vld [vmem:[%s169 + $0xc0] sm:$0xff]
      %v203 = vld [vmem:[%s169 + $0xc8] sm:$0xff]
      %v204 = vld [vmem:[%s169 + $0xd0] sm:$0xff]
      %v205 = vld [vmem:[%s169 + $0xd8] sm:$0xff]
      %v206 = vld [vmem:[%s169 + $0xe0] sm:$0xff]
      %v207 = vld [vmem:[%s169 + $0xe8] sm:$0xff]
      %v208 = vld [vmem:[%s169 + $0xf0] sm:$0xff]
      %v209 = vld [vmem:[%s169 + $0xf8] sm:$0xff]
      %v210 = vld [vmem:[%s169 + $0x100] sm:$0xff]
      %v211 = vld [vmem:[%s169 + $0x108] sm:$0xff]
      %v212 = vld [vmem:[%s169 + $0x110] sm:$0xff]
      %v213 = vld [vmem:[%s169 + $0x118] sm:$0xff]
      %v214 = vld [vmem:[%s169 + $0x120] sm:$0xff]
      %v215 = vld [vmem:[%s169 + $0x128] sm:$0xff]
      %v216 = vld [vmem:[%s169 + $0x130] sm:$0xff]
      %v217 = vld [vmem:[%s169 + $0x138] sm:$0xff]
      %v218 = vld [vmem:[%s169 + $0x140] sm:$0xff]
      %v219 = vld [vmem:[%s169 + $0x148] sm:$0xff]
      %v220 = vld [vmem:[%s169 + $0x150] sm:$0xff]
      %v221 = vld [vmem:[%s169 + $0x158] sm:$0xff]
      %v222 = vld [vmem:[%s169 + $0x160] sm:$0xff]
      %v223 = vld [vmem:[%s169 + $0x168] sm:$0xff]
      %v224 = vld [vmem:[%s169 + $0x170] sm:$0xff]
      %v225 = vld [vmem:[%s169 + $0x178] sm:$0xff]
      %v226 = vld [vmem:[%s169 + $0x180] sm:$0xff]
      %v227 = vld [vmem:[%s169 + $0x188] sm:$0xff]
      %v228 = vld [vmem:[%s1] sm:$0xf]
      %v229 = vld [vmem:[%s1 + $0x4] sm:$0xf]
      %v230 = vld [vmem:[%s1 + $0x8] sm:$0xf]
      %v231 = vld [vmem:[%s1 + $0xc] sm:$0xf]
      %v232 = vld [vmem:[%s1 + $0x10] sm:$0xf]
      %v233 = vld [vmem:[%s1 + $0x14] sm:$0xf]
      %v234 = vld [vmem:[%s1 + $0x18] sm:$0xf]
      %v235 = vld [vmem:[%s1 + $0x1c] sm:$0xf]
      %v236 = vld [vmem:[%s1 + $0x20] sm:$0xf]
      %v237 = vld [vmem:[%s1 + $0x24] sm:$0xf]
      %v238 = vld [vmem:[%s1 + $0x28] sm:$0xf]
      %v239 = vld [vmem:[%s1 + $0x2c] sm:$0xf]
      %v240 = vld [vmem:[%s1 + $0x30] sm:$0xf]
      %v241 = vld [vmem:[%s1 + $0x34] sm:$0xf]
      %v242 = vld [vmem:[%s1 + $0x38] sm:$0xf]
      %v243 = vld [vmem:[%s1 + $0x3c] sm:$0xf]
      %v244 = vld [vmem:[%s1 + $0x40] sm:$0xf]
      %v245 = vld [vmem:[%s1 + $0x44] sm:$0xf]
      %v246 = vld [vmem:[%s1 + $0x48] sm:$0xf]
      %v247 = vld [vmem:[%s1 + $0x4c] sm:$0xf]
      %v248 = vld [vmem:[%s1 + $0x50] sm:$0xf]
      %v249 = vld [vmem:[%s1 + $0x54] sm:$0xf]
      %v250 = vld [vmem:[%s1 + $0x58] sm:$0xf]
      %v251 = vld [vmem:[%s1 + $0x5c] sm:$0xf]
      %v252 = vld [vmem:[%s1 + $0x60] sm:$0xf]
      %v253 = vld [vmem:[%s1 + $0x64] sm:$0xf]
      %v254 = vld [vmem:[%s1 + $0x68] sm:$0xf]
      %v255 = vld [vmem:[%s1 + $0x6c] sm:$0xf]
      %v256 = vld [vmem:[%s1 + $0x70] sm:$0xf]
      %v257 = vld [vmem:[%s1 + $0x74] sm:$0xf]
      %v258 = vld [vmem:[%s1 + $0x78] sm:$0xf]
      %v259 = vld [vmem:[%s1 + $0x7c] sm:$0xf]
      %v260 = vld [vmem:[%s2] sm:$0x1]
      %v262 = vlaneseq
      %v263 = vshrl.u32 %v262, 7
      %v264 = vsub.s32 0, %v263
      %v265 = vrot.slane %v260, %v264
      %v317 = vunpack.c.l.b16 %v178
      %v318 = vunpack.c.h.b16 %v178
      %v319 = vunpack.c.l.b16 %v179
      %v320 = vunpack.c.h.b16 %v179
      %v321 = vunpack.c.l.b16 %v180
      %v322 = vunpack.c.h.b16 %v180
      %v323 = vunpack.c.l.b16 %v181
      %v324 = vunpack.c.h.b16 %v181
      %v325 = vunpack.c.l.b16 %v182
      %v326 = vunpack.c.h.b16 %v182
      %v327 = vunpack.c.l.b16 %v183
      %v328 = vunpack.c.h.b16 %v183
      %v329 = vunpack.c.l.b16 %v184
      %v330 = vunpack.c.h.b16 %v184
      %v331 = vunpack.c.l.b16 %v185
      %v332 = vunpack.c.h.b16 %v185
      %v333 = vunpack.c.l.b16 %v186
      %v334 = vunpack.c.h.b16 %v186
      %v335 = vunpack.c.l.b16 %v187
      %v336 = vunpack.c.h.b16 %v187
      %v337 = vunpack.c.l.b16 %v188
      %v338 = vunpack.c.h.b16 %v188
      %v339 = vunpack.c.l.b16 %v189
      %v340 = vunpack.c.h.b16 %v189
      %v341 = vunpack.c.l.b16 %v190
      %v342 = vunpack.c.h.b16 %v190
      %v343 = vunpack.c.l.b16 %v191
      %v344 = vunpack.c.h.b16 %v191
      %v345 = vunpack.c.l.b16 %v192
      %v346 = vunpack.c.h.b16 %v192
      %v347 = vunpack.c.l.b16 %v193
      %v348 = vunpack.c.h.b16 %v193
      %v349 = vunpack.c.l.b16 %v194
      %v350 = vunpack.c.h.b16 %v194
      %v351 = vunpack.c.l.b16 %v195
      %v352 = vunpack.c.h.b16 %v195
      %v353 = vunpack.c.l.b16 %v196
      %v354 = vunpack.c.h.b16 %v196
      %v355 = vunpack.c.l.b16 %v197
      %v356 = vunpack.c.h.b16 %v197
      %v357 = vunpack.c.l.b16 %v198
      %v358 = vunpack.c.h.b16 %v198
      %v359 = vunpack.c.l.b16 %v199
      %v360 = vunpack.c.h.b16 %v199
      %v361 = vunpack.c.l.b16 %v200
      %v362 = vunpack.c.h.b16 %v200
      %v363 = vunpack.c.l.b16 %v201
      %v364 = vunpack.c.h.b16 %v201
      %v365 = vunpack.c.l.b16 %v202
      %v366 = vunpack.c.h.b16 %v202
      %v367 = vunpack.c.l.b16 %v203
      %v368 = vunpack.c.h.b16 %v203
      %v369 = vunpack.c.l.b16 %v204
      %v370 = vunpack.c.h.b16 %v204
      %v371 = vunpack.c.l.b16 %v205
      %v372 = vunpack.c.h.b16 %v205
      %v373 = vunpack.c.l.b16 %v206
      %v374 = vunpack.c.h.b16 %v206
      %v375 = vunpack.c.l.b16 %v207
      %v376 = vunpack.c.h.b16 %v207
      %v377 = vunpack.c.l.b16 %v208
      %v378 = vunpack.c.h.b16 %v208
      %v379 = vunpack.c.l.b16 %v209
      %v380 = vunpack.c.h.b16 %v209
      %v381 = vunpack.c.l.b16 %v210
      %v382 = vunpack.c.h.b16 %v210
      %v383 = vunpack.c.l.b16 %v211
      %v384 = vunpack.c.h.b16 %v211
      %v385 = vunpack.c.l.b16 %v212
      %v386 = vunpack.c.h.b16 %v212
      %v387 = vunpack.c.l.b16 %v213
      %v388 = vunpack.c.h.b16 %v213
      %v389 = vunpack.c.l.b16 %v214
      %v390 = vunpack.c.h.b16 %v214
      %v391 = vunpack.c.l.b16 %v215
      %v392 = vunpack.c.h.b16 %v215
      %v393 = vunpack.c.l.b16 %v216
      %v394 = vunpack.c.h.b16 %v216
      %v395 = vunpack.c.l.b16 %v217
      %v396 = vunpack.c.h.b16 %v217
      %v397 = vunpack.c.l.b16 %v218
      %v398 = vunpack.c.h.b16 %v218
      %v399 = vunpack.c.l.b16 %v219
      %v400 = vunpack.c.h.b16 %v219
      %v401 = vunpack.c.l.b16 %v220
      %v402 = vunpack.c.h.b16 %v220
      %v403 = vunpack.c.l.b16 %v221
      %v404 = vunpack.c.h.b16 %v221
      %v405 = vunpack.c.l.b16 %v222
      %v406 = vunpack.c.h.b16 %v222
      %v407 = vunpack.c.l.b16 %v223
      %v408 = vunpack.c.h.b16 %v223
      %v409 = vunpack.c.l.b16 %v224
      %v410 = vunpack.c.h.b16 %v224
      %v411 = vunpack.c.l.b16 %v225
      %v412 = vunpack.c.h.b16 %v225
      %v413 = vunpack.c.l.b16 %v226
      %v414 = vunpack.c.h.b16 %v226
      %v415 = vunpack.c.l.b16 %v227
      %v416 = vunpack.c.h.b16 %v227
      %v417 = vpack.c.b16 %v319, %v317
      %v418 = vpack.c.b16 %v320, %v318
      %v419 = vpack.c.b16 %v323, %v321
      %v420 = vpack.c.b16 %v324, %v322
      %v421 = vpack.c.b16 %v327, %v325
      %v422 = vpack.c.b16 %v328, %v326
      %v423 = vpack.c.b16 %v331, %v329
      %v424 = vpack.c.b16 %v332, %v330
      %v425 = vpack.c.b16 %v335, %v333
      %v426 = vpack.c.b16 %v336, %v334
      %v427 = vpack.c.b16 %v339, %v337
      %v428 = vpack.c.b16 %v340, %v338
      %v429 = vpack.c.b16 %v343, %v341
      %v430 = vpack.c.b16 %v344, %v342
      %v431 = vpack.c.b16 %v347, %v345
      %v432 = vpack.c.b16 %v348, %v346
      %v433 = vpack.c.b16 %v351, %v349
      %v434 = vpack.c.b16 %v352, %v350
      %v435 = vpack.c.b16 %v355, %v353
      %v436 = vpack.c.b16 %v356, %v354
      %v437 = vpack.c.b16 %v359, %v357
      %v438 = vpack.c.b16 %v360, %v358
      %v439 = vpack.c.b16 %v363, %v361
      %v440 = vpack.c.b16 %v364, %v362
      %v441 = vpack.c.b16 %v367, %v365
      %v442 = vpack.c.b16 %v368, %v366
      %v443 = vpack.c.b16 %v371, %v369
      %v444 = vpack.c.b16 %v372, %v370
      %v445 = vpack.c.b16 %v375, %v373
      %v446 = vpack.c.b16 %v376, %v374
      %v447 = vpack.c.b16 %v379, %v377
      %v448 = vpack.c.b16 %v380, %v378
      %v449 = vpack.c.b16 %v383, %v381
      %v450 = vpack.c.b16 %v384, %v382
      %v451 = vpack.c.b16 %v387, %v385
      %v452 = vpack.c.b16 %v388, %v386
      %v453 = vpack.c.b16 %v391, %v389
      %v454 = vpack.c.b16 %v392, %v390
      %v455 = vpack.c.b16 %v395, %v393
      %v456 = vpack.c.b16 %v396, %v394
      %v457 = vpack.c.b16 %v399, %v397
      %v458 = vpack.c.b16 %v400, %v398
      %v459 = vpack.c.b16 %v403, %v401
      %v460 = vpack.c.b16 %v404, %v402
      %v461 = vpack.c.b16 %v407, %v405
      %v462 = vpack.c.b16 %v408, %v406
      %v463 = vpack.c.b16 %v411, %v409
      %v464 = vpack.c.b16 %v412, %v410
      %v465 = vpack.c.b16 %v415, %v413
      %v466 = vpack.c.b16 %v416, %v414
      %v549 = vunpack.c.l.b16 %v228
      %v550 = vunpack.c.l.b16 %v229
      %v551 = vunpack.c.l.b16 %v230
      %v552 = vunpack.c.l.b16 %v231
      %v553 = vunpack.c.l.b16 %v232
      %v554 = vunpack.c.l.b16 %v233
      %v555 = vunpack.c.l.b16 %v234
      %v556 = vunpack.c.l.b16 %v235
      %v557 = vunpack.c.l.b16 %v236
      %v558 = vunpack.c.l.b16 %v237
      %v559 = vunpack.c.l.b16 %v238
      %v560 = vunpack.c.l.b16 %v239
      %v561 = vunpack.c.l.b16 %v240
      %v562 = vunpack.c.l.b16 %v241
      %v563 = vunpack.c.l.b16 %v242
      %v564 = vunpack.c.l.b16 %v243
      %v565 = vunpack.c.l.b16 %v244
      %v566 = vunpack.c.l.b16 %v245
      %v567 = vunpack.c.l.b16 %v246
      %v568 = vunpack.c.l.b16 %v247
      %v569 = vunpack.c.l.b16 %v248
      %v570 = vunpack.c.l.b16 %v249
      %v571 = vunpack.c.l.b16 %v250
      %v572 = vunpack.c.l.b16 %v251
      %v573 = vunpack.c.l.b16 %v252
      %v574 = vunpack.c.l.b16 %v253
      %v575 = vunpack.c.l.b16 %v254
      %v576 = vunpack.c.l.b16 %v255
      %v577 = vunpack.c.l.b16 %v256
      %v578 = vunpack.c.l.b16 %v257
      %v579 = vunpack.c.l.b16 %v258
      %v580 = vunpack.c.l.b16 %v259
      %v581 = vpack.c.b16 %v550, %v549
      %v582 = vpack.c.b16 %v552, %v551
      %v583 = vpack.c.b16 %v554, %v553
      %v584 = vpack.c.b16 %v556, %v555
      %v585 = vpack.c.b16 %v558, %v557
      %v586 = vpack.c.b16 %v560, %v559
      %v587 = vpack.c.b16 %v562, %v561
      %v588 = vpack.c.b16 %v564, %v563
      %v589 = vpack.c.b16 %v566, %v565
      %v590 = vpack.c.b16 %v568, %v567
      %v591 = vpack.c.b16 %v570, %v569
      %v592 = vpack.c.b16 %v572, %v571
      %v593 = vpack.c.b16 %v574, %v573
      %v594 = vpack.c.b16 %v576, %v575
      %v595 = vpack.c.b16 %v578, %v577
      %v596 = vpack.c.b16 %v580, %v579
      %613 = vmatprep.subr.bf16.mxu0 0
      %614 = vmatpush1.bf16.msra.mxu0 %v581
      %615 = vmatprep.subr.bf16.mxu0 0
      %616 = vmatpush1.bf16.msra.mxu0 %v582
      %617 = vmatprep.subr.bf16.mxu0 0
      %618 = vmatpush1.bf16.msra.mxu0 %v583
      %619 = vmatprep.subr.bf16.mxu0 0
      %620 = vmatpush1.bf16.msra.mxu0 %v584
      %621 = vmatprep.subr.bf16.mxu0 0
      %622 = vmatpush1.bf16.msra.mxu0 %v585
      %623 = vmatprep.subr.bf16.mxu0 0
      %624 = vmatpush1.bf16.msra.mxu0 %v586
      %625 = vmatprep.subr.bf16.mxu0 0
      %626 = vmatpush1.bf16.msra.mxu0 %v587
      %627 = vmatprep.subr.bf16.mxu0 0
      %628 = vmatpush1.bf16.msra.mxu0 %v588
      %629 = vmatprep.subr.bf16.mxu0 0
      %630 = vmatpush1.bf16.msra.mxu0 %v589
      %631 = vmatprep.subr.bf16.mxu0 0
      %632 = vmatpush1.bf16.msra.mxu0 %v590
      %633 = vmatprep.subr.bf16.mxu0 0
      %634 = vmatpush1.bf16.msra.mxu0 %v591
      %635 = vmatprep.subr.bf16.mxu0 0
      %636 = vmatpush1.bf16.msra.mxu0 %v592
      %637 = vmatprep.subr.bf16.mxu0 0
      %638 = vmatpush1.bf16.msra.mxu0 %v593
      %639 = vmatprep.subr.bf16.mxu0 0
      %640 = vmatpush1.bf16.msra.mxu0 %v594
      %641 = vmatprep.subr.bf16.mxu0 0
      %642 = vmatpush1.bf16.msra.mxu0 %v595
      %643 = vmatprep.subr.bf16.mxu0 0
      %644 = vmatpush1.bf16.msra.mxu0 %v596
      %645 = vmatprep.mubr.bf16.mxu0 %v418
      %646 = vmatmul.mubr.bf16.gmra.mrb[0].mxu0 %v417
      %v647 = vpop.f32.mrb[0].mxu0
      %v648 = vadd.f32 %v265, %v647
      %v649 = vpop.f32.mrb[0].mxu0
      %v650 = vpop.f32.mrb[0].mxu0
      %v651 = vadd.f32 %v265, %v650
      %v652 = vpop.f32.mrb[0].mxu0
      %653 = vmatprep.mubr.bf16.mxu0 %v420
      %654 = vmatmul.mubr.bf16.gmra.mrb[0].mxu0 %v419
      %v655 = vpop.f32.mrb[0].mxu0
      %v656 = vadd.f32 %v265, %v655
      %v657 = vpop.f32.mrb[0].mxu0
      %v658 = vpop.f32.mrb[0].mxu0
      %v659 = vadd.f32 %v265, %v658
      %v660 = vpop.f32.mrb[0].mxu0
      %661 = vmatprep.mubr.bf16.mxu0 %v422
      %662 = vmatmul.mubr.bf16.gmra.mrb[0].mxu0 %v421
      %v663 = vpop.f32.mrb[0].mxu0
      %v664 = vadd.f32 %v265, %v663
      %v665 = vpop.f32.mrb[0].mxu0
      %v666 = vpop.f32.mrb[0].mxu0
      %v667 = vadd.f32 %v265, %v666
      %v668 = vpop.f32.mrb[0].mxu0
      %669 = vmatprep.mubr.bf16.mxu0 %v424
      %670 = vmatmul.mubr.bf16.gmra.mrb[0].mxu0 %v423
      %v671 = vpop.f32.mrb[0].mxu0
      %v672 = vadd.f32 %v265, %v671
      %v673 = vpop.f32.mrb[0].mxu0
      %v674 = vpop.f32.mrb[0].mxu0
      %v675 = vadd.f32 %v265, %v674
      %v676 = vpop.f32.mrb[0].mxu0
      %677 = vmatprep.mubr.bf16.mxu0 %v426
      %678 = vmatmul.mubr.bf16.gmra.mrb[0].mxu0 %v425
      %v679 = vpop.f32.mrb[0].mxu0
      %v680 = vadd.f32 %v265, %v679
      %v681 = vpop.f32.mrb[0].mxu0
      %v682 = vpop.f32.mrb[0].mxu0
      %v683 = vadd.f32 %v265, %v682
      %v684 = vpop.f32.mrb[0].mxu0
      %685 = vmatprep.mubr.bf16.mxu0 %v428
      %686 = vmatmul.mubr.bf16.gmra.mrb[0].mxu0 %v427
      %v687 = vpop.f32.mrb[0].mxu0
      %v688 = vadd.f32 %v265, %v687
      %v689 = vpop.f32.mrb[0].mxu0
      %v690 = vpop.f32.mrb[0].mxu0
      %v691 = vadd.f32 %v265, %v690
      %v692 = vpop.f32.mrb[0].mxu0
      %693 = vmatprep.mubr.bf16.mxu0 %v430
      %694 = vmatmul.mubr.bf16.gmra.mrb[0].mxu0 %v429
      %v695 = vpop.f32.mrb[0].mxu0
      %v696 = vadd.f32 %v265, %v695
      %v697 = vpop.f32.mrb[0].mxu0
      %v698 = vpop.f32.mrb[0].mxu0
      %v699 = vadd.f32 %v265, %v698
      %v700 = vpop.f32.mrb[0].mxu0
      %701 = vmatprep.mubr.bf16.mxu0 %v432
      %702 = vmatmul.mubr.bf16.gmra.mrb[0].mxu0 %v431
      %v703 = vpop.f32.mrb[0].mxu0
      %v704 = vadd.f32 %v265, %v703
      %v705 = vpop.f32.mrb[0].mxu0
      %v706 = vpop.f32.mrb[0].mxu0
      %v707 = vadd.f32 %v265, %v706
      %v708 = vpop.f32.mrb[0].mxu0
      %709 = vmatprep.mubr.bf16.mxu0 %v434
      %710 = vmatmul.mubr.bf16.gmra.mrb[0].mxu0 %v433
      %v711 = vpop.f32.mrb[0].mxu0
      %v712 = vadd.f32 %v265, %v711
      %v713 = vpop.f32.mrb[0].mxu0
      %v714 = vpop.f32.mrb[0].mxu0
      %v715 = vadd.f32 %v265, %v714
      %v716 = vpop.f32.mrb[0].mxu0
      %717 = vmatprep.mubr.bf16.mxu0 %v436
      %718 = vmatmul.mubr.bf16.gmra.mrb[0].mxu0 %v435
      %v719 = vpop.f32.mrb[0].mxu0
      %v720 = vadd.f32 %v265, %v719
      %v721 = vpop.f32.mrb[0].mxu0
      %v722 = vpop.f32.mrb[0].mxu0
      %v723 = vadd.f32 %v265, %v722
      %v724 = vpop.f32.mrb[0].mxu0
      %725 = vmatprep.mubr.bf16.mxu0 %v438
      %726 = vmatmul.mubr.bf16.gmra.mrb[0].mxu0 %v437
      %v727 = vpop.f32.mrb[0].mxu0
      %v728 = vadd.f32 %v265, %v727
      %v729 = vpop.f32.mrb[0].mxu0
      %v730 = vpop.f32.mrb[0].mxu0
      %v731 = vadd.f32 %v265, %v730
      %v732 = vpop.f32.mrb[0].mxu0
      %733 = vmatprep.mubr.bf16.mxu0 %v440
      %734 = vmatmul.mubr.bf16.gmra.mrb[0].mxu0 %v439
      %v735 = vpop.f32.mrb[0].mxu0
      %v736 = vadd.f32 %v265, %v735
      %v737 = vpop.f32.mrb[0].mxu0
      %v738 = vpop.f32.mrb[0].mxu0
      %v739 = vadd.f32 %v265, %v738
      %v740 = vpop.f32.mrb[0].mxu0
      %741 = vmatprep.mubr.bf16.mxu0 %v442
      %742 = vmatmul.mubr.bf16.gmra.mrb[0].mxu0 %v441
      %v743 = vpop.f32.mrb[0].mxu0
      %v744 = vadd.f32 %v265, %v743
      %v745 = vpop.f32.mrb[0].mxu0
      %v746 = vpop.f32.mrb[0].mxu0
      %v747 = vadd.f32 %v265, %v746
      %v748 = vpop.f32.mrb[0].mxu0
      %749 = vmatprep.mubr.bf16.mxu0 %v444
      %750 = vmatmul.mubr.bf16.gmra.mrb[0].mxu0 %v443
      %v751 = vpop.f32.mrb[0].mxu0
      %v752 = vadd.f32 %v265, %v751
      %v753 = vpop.f32.mrb[0].mxu0
      %v754 = vpop.f32.mrb[0].mxu0
      %v755 = vadd.f32 %v265, %v754
      %v756 = vpop.f32.mrb[0].mxu0
      %757 = vmatprep.mubr.bf16.mxu0 %v446
      %758 = vmatmul.mubr.bf16.gmra.mrb[0].mxu0 %v445
      %v759 = vpop.f32.mrb[0].mxu0
      %v760 = vadd.f32 %v265, %v759
      %v761 = vpop.f32.mrb[0].mxu0
      %v762 = vpop.f32.mrb[0].mxu0
      %v763 = vadd.f32 %v265, %v762
      %v764 = vpop.f32.mrb[0].mxu0
      %765 = vmatprep.mubr.bf16.mxu0 %v448
      %766 = vmatmul.mubr.bf16.gmra.mrb[0].mxu0 %v447
      %v767 = vpop.f32.mrb[0].mxu0
      %v768 = vadd.f32 %v265, %v767
      %v769 = vpop.f32.mrb[0].mxu0
      %v770 = vpop.f32.mrb[0].mxu0
      %v771 = vadd.f32 %v265, %v770
      %v772 = vpop.f32.mrb[0].mxu0
      %773 = vmatprep.mubr.bf16.mxu0 %v450
      %774 = vmatmul.mubr.bf16.gmra.mrb[0].mxu0 %v449
      %v775 = vpop.f32.mrb[0].mxu0
      %v776 = vadd.f32 %v265, %v775
      %v777 = vpop.f32.mrb[0].mxu0
      %v778 = vpop.f32.mrb[0].mxu0
      %v779 = vadd.f32 %v265, %v778
      %v780 = vpop.f32.mrb[0].mxu0
      %781 = vmatprep.mubr.bf16.mxu0 %v452
      %782 = vmatmul.mubr.bf16.gmra.mrb[0].mxu0 %v451
      %v783 = vpop.f32.mrb[0].mxu0
      %v784 = vadd.f32 %v265, %v783
      %v785 = vpop.f32.mrb[0].mxu0
      %v786 = vpop.f32.mrb[0].mxu0
      %v787 = vadd.f32 %v265, %v786
      %v788 = vpop.f32.mrb[0].mxu0
      %789 = vmatprep.mubr.bf16.mxu0 %v454
      %790 = vmatmul.mubr.bf16.gmra.mrb[0].mxu0 %v453
      %v791 = vpop.f32.mrb[0].mxu0
      %v792 = vadd.f32 %v265, %v791
      %v793 = vpop.f32.mrb[0].mxu0
      %v794 = vpop.f32.mrb[0].mxu0
      %v795 = vadd.f32 %v265, %v794
      %v796 = vpop.f32.mrb[0].mxu0
      %797 = vmatprep.mubr.bf16.mxu0 %v456
      %798 = vmatmul.mubr.bf16.gmra.mrb[0].mxu0 %v455
      %v799 = vpop.f32.mrb[0].mxu0
      %v800 = vadd.f32 %v265, %v799
      %v801 = vpop.f32.mrb[0].mxu0
      %v802 = vpop.f32.mrb[0].mxu0
      %v803 = vadd.f32 %v265, %v802
      %v804 = vpop.f32.mrb[0].mxu0
      %805 = vmatprep.mubr.bf16.mxu0 %v458
      %806 = vmatmul.mubr.bf16.gmra.mrb[0].mxu0 %v457
      %v807 = vpop.f32.mrb[0].mxu0
      %v808 = vadd.f32 %v265, %v807
      %v809 = vpop.f32.mrb[0].mxu0
      %v810 = vpop.f32.mrb[0].mxu0
      %v811 = vadd.f32 %v265, %v810
      %v812 = vpop.f32.mrb[0].mxu0
      %813 = vmatprep.mubr.bf16.mxu0 %v460
      %814 = vmatmul.mubr.bf16.gmra.mrb[0].mxu0 %v459
      %v815 = vpop.f32.mrb[0].mxu0
      %v816 = vadd.f32 %v265, %v815
      %v817 = vpop.f32.mrb[0].mxu0
      %v818 = vpop.f32.mrb[0].mxu0
      %v819 = vadd.f32 %v265, %v818
      %v820 = vpop.f32.mrb[0].mxu0
      %821 = vmatprep.mubr.bf16.mxu0 %v462
      %822 = vmatmul.mubr.bf16.gmra.mrb[0].mxu0 %v461
      %v823 = vpop.f32.mrb[0].mxu0
      %v824 = vadd.f32 %v265, %v823
      %v825 = vpop.f32.mrb[0].mxu0
      %v826 = vpop.f32.mrb[0].mxu0
      %v827 = vadd.f32 %v265, %v826
      %v828 = vpop.f32.mrb[0].mxu0
      %829 = vmatprep.mubr.bf16.mxu0 %v464
      %830 = vmatmul.mubr.bf16.gmra.mrb[0].mxu0 %v463
      %v831 = vpop.f32.mrb[0].mxu0
      %v832 = vadd.f32 %v265, %v831
      %v833 = vpop.f32.mrb[0].mxu0
      %v834 = vpop.f32.mrb[0].mxu0
      %v835 = vadd.f32 %v265, %v834
      %v836 = vpop.f32.mrb[0].mxu0
      %837 = vmatprep.mubr.bf16.mxu0 %v466
      %838 = vmatmul.mubr.bf16.gmra.mrb[0].mxu0 %v465
      %v839 = vpop.f32.mrb[0].mxu0
      %v840 = vadd.f32 %v265, %v839
      %v841 = vpop.f32.mrb[0].mxu0
      %v842 = vpop.f32.mrb[0].mxu0
      %v843 = vadd.f32 %v265, %v842
      %v844 = vpop.f32.mrb[0].mxu0
      %845 = vdwg.mxu0
      %v846 = vmax.f32 %v648, 0.0
      %v847 = vmax.f32 %v651, 0.0
      %v848 = vmax.f32 %v656, 0.0
      %v849 = vmax.f32 %v659, 0.0
      %v850 = vmax.f32 %v664, 0.0
      %v851 = vmax.f32 %v667, 0.0
      %v852 = vmax.f32 %v672, 0.0
      %v853 = vmax.f32 %v675, 0.0
      %v854 = vmax.f32 %v680, 0.0
      %v855 = vmax.f32 %v683, 0.0
      %v856 = vmax.f32 %v688, 0.0
      %v857 = vmax.f32 %v691, 0.0
      %v858 = vmax.f32 %v696, 0.0
      %v859 = vmax.f32 %v699, 0.0
      %v860 = vmax.f32 %v704, 0.0
      %v861 = vmax.f32 %v707, 0.0
      %v862 = vmax.f32 %v712, 0.0
      %v863 = vmax.f32 %v715, 0.0
      %v864 = vmax.f32 %v720, 0.0
      %v865 = vmax.f32 %v723, 0.0
      %v866 = vmax.f32 %v728, 0.0
      %v867 = vmax.f32 %v731, 0.0
      %v868 = vmax.f32 %v736, 0.0
      %v869 = vmax.f32 %v739, 0.0
      %v870 = vmax.f32 %v744, 0.0
      %v871 = vmax.f32 %v747, 0.0
      %v872 = vmax.f32 %v752, 0.0
      %v873 = vmax.f32 %v755, 0.0
      %v874 = vmax.f32 %v760, 0.0
      %v875 = vmax.f32 %v763, 0.0
      %v876 = vmax.f32 %v768, 0.0
      %v877 = vmax.f32 %v771, 0.0
      %v878 = vmax.f32 %v776, 0.0
      %v879 = vmax.f32 %v779, 0.0
      %v880 = vmax.f32 %v784, 0.0
      %v881 = vmax.f32 %v787, 0.0
      %v882 = vmax.f32 %v792, 0.0
      %v883 = vmax.f32 %v795, 0.0
      %v884 = vmax.f32 %v800, 0.0
      %v885 = vmax.f32 %v803, 0.0
      %v886 = vmax.f32 %v808, 0.0
      %v887 = vmax.f32 %v811, 0.0
      %v888 = vmax.f32 %v816, 0.0
      %v889 = vmax.f32 %v819, 0.0
      %v890 = vmax.f32 %v824, 0.0
      %v891 = vmax.f32 %v827, 0.0
      %v892 = vmax.f32 %v832, 0.0
      %v893 = vmax.f32 %v835, 0.0
      %v894 = vmax.f32 %v840, 0.0
      %v895 = vmax.f32 %v843, 0.0
      %v896 = vpack.c.bf16 %v847, %v846
      %v897 = vpack.c.bf16 %v849, %v848
      %v898 = vpack.c.bf16 %v851, %v850
      %v899 = vpack.c.bf16 %v853, %v852
      %v900 = vpack.c.bf16 %v855, %v854
      %v901 = vpack.c.bf16 %v857, %v856
      %v902 = vpack.c.bf16 %v859, %v858
      %v903 = vpack.c.bf16 %v861, %v860
      %v904 = vpack.c.bf16 %v863, %v862
      %v905 = vpack.c.bf16 %v865, %v864
      %v906 = vpack.c.bf16 %v867, %v866
      %v907 = vpack.c.bf16 %v869, %v868
      %v908 = vpack.c.bf16 %v871, %v870
      %v909 = vpack.c.bf16 %v873, %v872
      %v910 = vpack.c.bf16 %v875, %v874
      %v911 = vpack.c.bf16 %v877, %v876
      %v912 = vpack.c.bf16 %v879, %v878
      %v913 = vpack.c.bf16 %v881, %v880
      %v914 = vpack.c.bf16 %v883, %v882
      %v915 = vpack.c.bf16 %v885, %v884
      %v916 = vpack.c.bf16 %v887, %v886
      %v917 = vpack.c.bf16 %v889, %v888
      %v918 = vpack.c.bf16 %v891, %v890
      %v919 = vpack.c.bf16 %v893, %v892
      %v920 = vpack.c.bf16 %v895, %v894
      %v946 = vunpack.c.l.b16 %v896
      %v947 = vunpack.c.h.b16 %v896
      %v948 = vunpack.c.l.b16 %v897
      %v949 = vunpack.c.h.b16 %v897
      %v950 = vunpack.c.l.b16 %v898
      %v951 = vunpack.c.h.b16 %v898
      %v952 = vunpack.c.l.b16 %v899
      %v953 = vunpack.c.h.b16 %v899
      %v954 = vunpack.c.l.b16 %v900
      %v955 = vunpack.c.h.b16 %v900
      %v956 = vunpack.c.l.b16 %v901
      %v957 = vunpack.c.h.b16 %v901
      %v958 = vunpack.c.l.b16 %v902
      %v959 = vunpack.c.h.b16 %v902
      %v960 = vunpack.c.l.b16 %v903
      %v961 = vunpack.c.h.b16 %v903
      %v962 = vunpack.c.l.b16 %v904
      %v963 = vunpack.c.h.b16 %v904
      %v964 = vunpack.c.l.b16 %v905
      %v965 = vunpack.c.h.b16 %v905
      %v966 = vunpack.c.l.b16 %v906
      %v967 = vunpack.c.h.b16 %v906
      %v968 = vunpack.c.l.b16 %v907
      %v969 = vunpack.c.h.b16 %v907
      %v970 = vunpack.c.l.b16 %v908
      %v971 = vunpack.c.h.b16 %v908
      %v972 = vunpack.c.l.b16 %v909
      %v973 = vunpack.c.h.b16 %v909
      %v974 = vunpack.c.l.b16 %v910
      %v975 = vunpack.c.h.b16 %v910
      %v976 = vunpack.c.l.b16 %v911
      %v977 = vunpack.c.h.b16 %v911
      %v978 = vunpack.c.l.b16 %v912
      %v979 = vunpack.c.h.b16 %v912
      %v980 = vunpack.c.l.b16 %v913
      %v981 = vunpack.c.h.b16 %v913
      %v982 = vunpack.c.l.b16 %v914
      %v983 = vunpack.c.h.b16 %v914
      %v984 = vunpack.c.l.b16 %v915
      %v985 = vunpack.c.h.b16 %v915
      %v986 = vunpack.c.l.b16 %v916
      %v987 = vunpack.c.h.b16 %v916
      %v988 = vunpack.c.l.b16 %v917
      %v989 = vunpack.c.h.b16 %v917
      %v990 = vunpack.c.l.b16 %v918
      %v991 = vunpack.c.h.b16 %v918
      %v992 = vunpack.c.l.b16 %v919
      %v993 = vunpack.c.h.b16 %v919
      %v994 = vunpack.c.l.b16 %v920
      %v995 = vunpack.c.h.b16 %v920
      %v996 = vpack.c.b16 %v946, %v946
      %v997 = vpack.c.b16 %v947, %v947
      %v998 = vpack.c.b16 %v948, %v948
      %v999 = vpack.c.b16 %v949, %v949
      %v1000 = vpack.c.b16 %v950, %v950
      %v1001 = vpack.c.b16 %v951, %v951
      %v1002 = vpack.c.b16 %v952, %v952
      %v1003 = vpack.c.b16 %v953, %v953
      %v1004 = vpack.c.b16 %v954, %v954
      %v1005 = vpack.c.b16 %v955, %v955
      %v1006 = vpack.c.b16 %v956, %v956
      %v1007 = vpack.c.b16 %v957, %v957
      %v1008 = vpack.c.b16 %v958, %v958
      %v1009 = vpack.c.b16 %v959, %v959
      %v1010 = vpack.c.b16 %v960, %v960
      %v1011 = vpack.c.b16 %v961, %v961
      %v1012 = vpack.c.b16 %v962, %v962
      %v1013 = vpack.c.b16 %v963, %v963
      %v1014 = vpack.c.b16 %v964, %v964
      %v1015 = vpack.c.b16 %v965, %v965
      %v1016 = vpack.c.b16 %v966, %v966
      %v1017 = vpack.c.b16 %v967, %v967
      %v1018 = vpack.c.b16 %v968, %v968
      %v1019 = vpack.c.b16 %v969, %v969
      %v1020 = vpack.c.b16 %v970, %v970
      %v1021 = vpack.c.b16 %v971, %v971
      %v1022 = vpack.c.b16 %v972, %v972
      %v1023 = vpack.c.b16 %v973, %v973
      %v1024 = vpack.c.b16 %v974, %v974
      %v1025 = vpack.c.b16 %v975, %v975
      %v1026 = vpack.c.b16 %v976, %v976
      %v1027 = vpack.c.b16 %v977, %v977
      %v1028 = vpack.c.b16 %v978, %v978
      %v1029 = vpack.c.b16 %v979, %v979
      %v1030 = vpack.c.b16 %v980, %v980
      %v1031 = vpack.c.b16 %v981, %v981
      %v1032 = vpack.c.b16 %v982, %v982
      %v1033 = vpack.c.b16 %v983, %v983
      %v1034 = vpack.c.b16 %v984, %v984
      %v1035 = vpack.c.b16 %v985, %v985
      %v1036 = vpack.c.b16 %v986, %v986
      %v1037 = vpack.c.b16 %v987, %v987
      %v1038 = vpack.c.b16 %v988, %v988
      %v1039 = vpack.c.b16 %v989, %v989
      %v1040 = vpack.c.b16 %v990, %v990
      %v1041 = vpack.c.b16 %v991, %v991
      %v1042 = vpack.c.b16 %v992, %v992
      %v1043 = vpack.c.b16 %v993, %v993
      %v1044 = vpack.c.b16 %v994, %v994
      %v1045 = vpack.c.b16 %v995, %v995
      %vm1096 = vcmask 257024
      %1097 = vst.msk [vmem:[%s175] sm:$0xf] %vm1096, %v996
      %1098 = vst.msk [vmem:[%s175 + $0x4] sm:$0xf] %vm1096, %v997
      %1099 = vst.msk [vmem:[%s175 + $0x8] sm:$0xf] %vm1096, %v998
      %1100 = vst.msk [vmem:[%s175 + $0xc] sm:$0xf] %vm1096, %v999
      %1101 = vst.msk [vmem:[%s175 + $0x10] sm:$0xf] %vm1096, %v1000
      %1102 = vst.msk [vmem:[%s175 + $0x14] sm:$0xf] %vm1096, %v1001
      %1103 = vst.msk [vmem:[%s175 + $0x18] sm:$0xf] %vm1096, %v1002
      %1104 = vst.msk [vmem:[%s175 + $0x1c] sm:$0xf] %vm1096, %v1003
      %1105 = vst.msk [vmem:[%s175 + $0x20] sm:$0xf] %vm1096, %v1004
      %1106 = vst.msk [vmem:[%s175 + $0x24] sm:$0xf] %vm1096, %v1005
      %1107 = vst.msk [vmem:[%s175 + $0x28] sm:$0xf] %vm1096, %v1006
      %1108 = vst.msk [vmem:[%s175 + $0x2c] sm:$0xf] %vm1096, %v1007
      %1109 = vst.msk [vmem:[%s175 + $0x30] sm:$0xf] %vm1096, %v1008
      %1110 = vst.msk [vmem:[%s175 + $0x34] sm:$0xf] %vm1096, %v1009
      %1111 = vst.msk [vmem:[%s175 + $0x38] sm:$0xf] %vm1096, %v1010
      %1112 = vst.msk [vmem:[%s175 + $0x3c] sm:$0xf] %vm1096, %v1011
      %1113 = vst.msk [vmem:[%s175 + $0x40] sm:$0xf] %vm1096, %v1012
      %1114 = vst.msk [vmem:[%s175 + $0x44] sm:$0xf] %vm1096, %v1013
      %1115 = vst.msk [vmem:[%s175 + $0x48] sm:$0xf] %vm1096, %v1014
      %1116 = vst.msk [vmem:[%s175 + $0x4c] sm:$0xf] %vm1096, %v1015
      %1117 = vst.msk [vmem:[%s175 + $0x50] sm:$0xf] %vm1096, %v1016
      %1118 = vst.msk [vmem:[%s175 + $0x54] sm:$0xf] %vm1096, %v1017
      %1119 = vst.msk [vmem:[%s175 + $0x58] sm:$0xf] %vm1096, %v1018
      %1120 = vst.msk [vmem:[%s175 + $0x5c] sm:$0xf] %vm1096, %v1019
      %1121 = vst.msk [vmem:[%s175 + $0x60] sm:$0xf] %vm1096, %v1020
      %1122 = vst.msk [vmem:[%s175 + $0x64] sm:$0xf] %vm1096, %v1021
      %1123 = vst.msk [vmem:[%s175 + $0x68] sm:$0xf] %vm1096, %v1022
      %1124 = vst.msk [vmem:[%s175 + $0x6c] sm:$0xf] %vm1096, %v1023
      %1125 = vst.msk [vmem:[%s175 + $0x70] sm:$0xf] %vm1096, %v1024
      %1126 = vst.msk [vmem:[%s175 + $0x74] sm:$0xf] %vm1096, %v1025
      %1127 = vst.msk [vmem:[%s175 + $0x78] sm:$0xf] %vm1096, %v1026
      %1128 = vst.msk [vmem:[%s175 + $0x7c] sm:$0xf] %vm1096, %v1027
      %1129 = vst.msk [vmem:[%s175 + $0x80] sm:$0xf] %vm1096, %v1028
      %1130 = vst.msk [vmem:[%s175 + $0x84] sm:$0xf] %vm1096, %v1029
      %1131 = vst.msk [vmem:[%s175 + $0x88] sm:$0xf] %vm1096, %v1030
      %1132 = vst.msk [vmem:[%s175 + $0x8c] sm:$0xf] %vm1096, %v1031
      %1133 = vst.msk [vmem:[%s175 + $0x90] sm:$0xf] %vm1096, %v1032
      %1134 = vst.msk [vmem:[%s175 + $0x94] sm:$0xf] %vm1096, %v1033
      %1135 = vst.msk [vmem:[%s175 + $0x98] sm:$0xf] %vm1096, %v1034
      %1136 = vst.msk [vmem:[%s175 + $0x9c] sm:$0xf] %vm1096, %v1035
      %1137 = vst.msk [vmem:[%s175 + $0xa0] sm:$0xf] %vm1096, %v1036
      %1138 = vst.msk [vmem:[%s175 + $0xa4] sm:$0xf] %vm1096, %v1037
      %1139 = vst.msk [vmem:[%s175 + $0xa8] sm:$0xf] %vm1096, %v1038
      %1140 = vst.msk [vmem:[%s175 + $0xac] sm:$0xf] %vm1096, %v1039
      %1141 = vst.msk [vmem:[%s175 + $0xb0] sm:$0xf] %vm1096, %v1040
      %1142 = vst.msk [vmem:[%s175 + $0xb4] sm:$0xf] %vm1096, %v1041
      %1143 = vst.msk [vmem:[%s175 + $0xb8] sm:$0xf] %vm1096, %v1042
      %1144 = vst.msk [vmem:[%s175 + $0xbc] sm:$0xf] %vm1096, %v1043
      %1145 = vst.msk [vmem:[%s175 + $0xc0] sm:$0xf] %vm1096, %v1044
      %1146 = vst.msk [vmem:[%s175 + $0xc4] sm:$0xf] %vm1096, %v1045
      %s1147 = smul.u32 50, %s14
      %p1148 = scmp.lt.s32.totalorder %s1147, 99
      %s1149 = scalar_select %p1148, %s1147, 99
      %s1150 = smul.addr %s1149, 4
      %s1151 = scalar_lea.vmem %s3, %s1150
      // Predicated region
      $region33: #{model_forward.4} parent=31 // pred_check
        %p1152 = pneg %p100
      $region34: #{model_forward.4} parent=31 // pred_check_branch
        %1154 = sbr.rel (%p1152) target = $region36
      $region35: #{model_forward.4} parent=31 // pred_region
        %s1155 = smul.u32 50, %s14
      $region36: #{model_forward.4} parent=31 // pred_fallthru
        _
    $region32: #{model_forward.4} parent=5 // pred_fallthru
      _
    %p1156 = scmp.le.s32.totalorder 2, %s9
    // Predicated region
    $region37: #{model_forward.4} parent=5 // pred_check
      %p1157 = pneg %p1156
    $region38: #{model_forward.4} parent=5 // pred_check_branch
      %1159 = sbr.rel (%p1157) target = $region40
    $region39: #{model_forward.4} parent=5 // pred_region
      %s1160 = ssub.s32 %s9, 2
      // Predicated region
      $region41: #{model_forward.4} parent=39 // pred_check
        %p1161 = pneg %p106
      $region42: #{model_forward.4} parent=39 // pred_check_branch
        %1163 = sbr.rel (%p1161) target = $region44
      $region43: #{model_forward.4} parent=39 // pred_region
        %s1164 = smul.u32 50, %s15
        %p1165 = scmp.lt.s32.totalorder %s1164, 99
        %s1166 = scalar_select %p1165, %s1164, 99
        %s1167 = smul.addr %s1166, 4
        %s1168 = scalar_lea.vmem %s3, %s1167
      $region44: #{model_forward.4} parent=39 // pred_fallthru
        _
    $region40: #{model_forward.4} parent=5 // pred_fallthru
      _
  $region6: #{model_forward.4} parent=0 // loop_footer
    %s13 = sadd.s32 1, %s9
  $region7: #{model_forward.4} parent=0 // loop_footer_branch
    %8 = sbr.rel target = $region3
  $region8: #{model_forward.4} parent=0 // loop_exit
    _

// kernel: model_forward.5
$region0: #{model_forward.5}
  #allocation0 [shape = 'u32[]', space=smem, size = 0x4, offset = 0x4, fixed_abs, tag = 'smem constant byte address 0x4 - core index']
  #allocation1 [shape = 'u32[144,128]{1,0:T(1,128)}', space=vmem, size = 0x12000, scoped, tag = 'internal scratch']
  %s0 = inlined_call_operand.vmem [shape: bf16[162,512], index: 0, kind: input, shape index: {}]
  %s1 = inlined_call_operand.vmem [shape: bf16[512,64], index: 1, kind: input, shape index: {}]
  %s2 = inlined_call_operand.vmem [shape: f32[1,64], index: 2, kind: input, shape index: {}]
  %s3 = inlined_call_operand.vmem [shape: bf16[162,64], index: 3, kind: output, shape index: {}]
  %s4 = sld [smem:[#allocation0]]
  $region22: #{model_forward.5} parent=0
    _
  %s6 = ssub.s32 1, %s4
  %s7 = scalar_select 0, %s6, %s4
  // Predicated region
  $region2: #{model_forward.5} parent=0 // pred_check
    _
  $region3: #{model_forward.5} parent=0 // pred_check_branch
    %9 = sbr.rel (0) target = $region5
  $region4: #{model_forward.5} parent=0 // pred_region
    _
  $region5: #{model_forward.5} parent=0 // pred_fallthru
    _
  // Predicated region
  $region6: #{model_forward.5} parent=0 // pred_check
    _
  $region7: #{model_forward.5} parent=0 // pred_check_branch
    %11 = sbr.rel (0) target = $region9
  $region8: #{model_forward.5} parent=0 // pred_region
    _
  $region9: #{model_forward.5} parent=0 // pred_fallthru
    _
  // Predicated region
  $region10: #{model_forward.5} parent=0 // pred_check
    _
  $region11: #{model_forward.5} parent=0 // pred_check_branch
    %13 = sbr.rel (0) target = $region13
  $region12: #{model_forward.5} parent=0 // pred_region
    _
  $region13: #{model_forward.5} parent=0 // pred_fallthru
    _
  %v15 = vld [vmem:[%s0] sm:$0xff]
  %v16 = vld [vmem:[%s0 + $0x8] sm:$0xff]
  %v17 = vld [vmem:[%s0 + $0x10] sm:$0xff]
  %v18 = vld [vmem:[%s0 + $0x18] sm:$0xff]
  %v19 = vld [vmem:[%s0 + $0x20] sm:$0xff]
  %v20 = vld [vmem:[%s0 + $0x28] sm:$0xff]
  %v21 = vld [vmem:[%s0 + $0x30] sm:$0xff]
  %v22 = vld [vmem:[%s0 + $0x38] sm:$0xff]
  %v23 = vld [vmem:[%s0 + $0x40] sm:$0xff]
  %v24 = vld [vmem:[%s0 + $0x48] sm:$0xff]
  %v25 = vld [vmem:[%s0 + $0x50] sm:$0xff]
  %v26 = vld [vmem:[%s0 + $0x58] sm:$0xff]
  %v27 = vld [vmem:[%s0 + $0x60] sm:$0xff]
  %v28 = vld [vmem:[%s0 + $0x68] sm:$0xff]
  %v29 = vld [vmem:[%s0 + $0x70] sm:$0xff]
  %v30 = vld [vmem:[%s0 + $0x78] sm:$0xff]
  %v31 = vld [vmem:[%s0 + $0x80] sm:$0xff]
  %v32 = vld [vmem:[%s0 + $0x88] sm:$0xff]
  %v33 = vld [vmem:[%s0 + $0x90] sm:$0xff]
  %v34 = vld [vmem:[%s0 + $0x98] sm:$0xff]
  %v35 = vld [vmem:[%s0 + $0xa0] sm:$0xff]
  %v36 = vld [vmem:[%s0 + $0xa8] sm:$0xff]
  %v37 = vld [vmem:[%s0 + $0xb0] sm:$0xff]
  %v38 = vld [vmem:[%s0 + $0xb8] sm:$0xff]
  %v39 = vld [vmem:[%s0 + $0xc0] sm:$0xff]
  %v40 = vld [vmem:[%s0 + $0xc8] sm:$0xff]
  %v41 = vld [vmem:[%s0 + $0xd0] sm:$0xff]
  %v42 = vld [vmem:[%s0 + $0xd8] sm:$0xff]
  %v43 = vld [vmem:[%s0 + $0xe0] sm:$0xff]
  %v44 = vld [vmem:[%s0 + $0xe8] sm:$0xff]
  %v45 = vld [vmem:[%s0 + $0xf0] sm:$0xff]
  %v46 = vld [vmem:[%s0 + $0xf8] sm:$0xff]
  %v47 = vld [vmem:[%s0 + $0x100] sm:$0xff]
  %v48 = vld [vmem:[%s0 + $0x108] sm:$0xff]
  %v49 = vld [vmem:[%s0 + $0x110] sm:$0xff]
  %v50 = vld [vmem:[%s0 + $0x118] sm:$0xff]
  %v51 = vld [vmem:[%s0 + $0x120] sm:$0xff]
  %v52 = vld [vmem:[%s0 + $0x128] sm:$0xff]
  %v53 = vld [vmem:[%s0 + $0x130] sm:$0xff]
  %v54 = vld [vmem:[%s0 + $0x138] sm:$0xff]
  %v55 = vld [vmem:[%s0 + $0x140] sm:$0x11]
  %v56 = vld [vmem:[%s0 + $0x148] sm:$0x11]
  %v57 = vld [vmem:[%s1] sm:$0xf]
  %v58 = vld [vmem:[%s1 + $0x4] sm:$0xf]
  %v59 = vld [vmem:[%s1 + $0x8] sm:$0xf]
  %v60 = vld [vmem:[%s1 + $0xc] sm:$0xf]
  %v61 = vld [vmem:[%s1 + $0x10] sm:$0xf]
  %v62 = vld [vmem:[%s1 + $0x14] sm:$0xf]
  %v63 = vld [vmem:[%s1 + $0x18] sm:$0xf]
  %v64 = vld [vmem:[%s1 + $0x1c] sm:$0xf]
  %v65 = vld [vmem:[%s1 + $0x20] sm:$0xf]
  %v66 = vld [vmem:[%s1 + $0x24] sm:$0xf]
  %v67 = vld [vmem:[%s1 + $0x28] sm:$0xf]
  %v68 = vld [vmem:[%s1 + $0x2c] sm:$0xf]
  %v69 = vld [vmem:[%s1 + $0x30] sm:$0xf]
  %v70 = vld [vmem:[%s1 + $0x34] sm:$0xf]
  %v71 = vld [vmem:[%s1 + $0x38] sm:$0xf]
  %v72 = vld [vmem:[%s1 + $0x3c] sm:$0xf]
  %v73 = vld [vmem:[%s1 + $0x40] sm:$0xf]
  %v74 = vld [vmem:[%s1 + $0x44] sm:$0xf]
  %v75 = vld [vmem:[%s1 + $0x48] sm:$0xf]
  %v76 = vld [vmem:[%s1 + $0x4c] sm:$0xf]
  %v77 = vld [vmem:[%s1 + $0x50] sm:$0xf]
  %v78 = vld [vmem:[%s1 + $0x54] sm:$0xf]
  %v79 = vld [vmem:[%s1 + $0x58] sm:$0xf]
  %v80 = vld [vmem:[%s1 + $0x5c] sm:$0xf]
  %v81 = vld [vmem:[%s1 + $0x60] sm:$0xf]
  %v82 = vld [vmem:[%s1 + $0x64] sm:$0xf]
  %v83 = vld [vmem:[%s1 + $0x68] sm:$0xf]
  %v84 = vld [vmem:[%s1 + $0x6c] sm:$0xf]
  %v85 = vld [vmem:[%s1 + $0x70] sm:$0xf]
  %v86 = vld [vmem:[%s1 + $0x74] sm:$0xf]
  %v87 = vld [vmem:[%s1 + $0x78] sm:$0xf]
  %v88 = vld [vmem:[%s1 + $0x7c] sm:$0xf]
  %v89 = vld [vmem:[%s1 + $0x80] sm:$0xf]
  %v90 = vld [vmem:[%s1 + $0x84] sm:$0xf]
  %v91 = vld [vmem:[%s1 + $0x88] sm:$0xf]
  %v92 = vld [vmem:[%s1 + $0x8c] sm:$0xf]
  %v93 = vld [vmem:[%s1 + $0x90] sm:$0xf]
  %v94 = vld [vmem:[%s1 + $0x94] sm:$0xf]
  %v95 = vld [vmem:[%s1 + $0x98] sm:$0xf]
  %v96 = vld [vmem:[%s1 + $0x9c] sm:$0xf]
  %v97 = vld [vmem:[%s1 + $0xa0] sm:$0xf]
  %v98 = vld [vmem:[%s1 + $0xa4] sm:$0xf]
  %v99 = vld [vmem:[%s1 + $0xa8] sm:$0xf]
  %v100 = vld [vmem:[%s1 + $0xac] sm:$0xf]
  %v101 = vld [vmem:[%s1 + $0xb0] sm:$0xf]
  %v102 = vld [vmem:[%s1 + $0xb4] sm:$0xf]
  %v103 = vld [vmem:[%s1 + $0xb8] sm:$0xf]
  %v104 = vld [vmem:[%s1 + $0xbc] sm:$0xf]
  %v105 = vld [vmem:[%s1 + $0xc0] sm:$0xf]
  %v106 = vld [vmem:[%s1 + $0xc4] sm:$0xf]
  %v107 = vld [vmem:[%s1 + $0xc8] sm:$0xf]
  %v108 = vld [vmem:[%s1 + $0xcc] sm:$0xf]
  %v109 = vld [vmem:[%s1 + $0xd0] sm:$0xf]
  %v110 = vld [vmem:[%s1 + $0xd4] sm:$0xf]
  %v111 = vld [vmem:[%s1 + $0xd8] sm:$0xf]
  %v112 = vld [vmem:[%s1 + $0xdc] sm:$0xf]
  %v113 = vld [vmem:[%s1 + $0xe0] sm:$0xf]
  %v114 = vld [vmem:[%s1 + $0xe4] sm:$0xf]
  %v115 = vld [vmem:[%s1 + $0xe8] sm:$0xf]
  %v116 = vld [vmem:[%s1 + $0xec] sm:$0xf]
  %v117 = vld [vmem:[%s1 + $0xf0] sm:$0xf]
  %v118 = vld [vmem:[%s1 + $0xf4] sm:$0xf]
  %v119 = vld [vmem:[%s1 + $0xf8] sm:$0xf]
  %v120 = vld [vmem:[%s1 + $0xfc] sm:$0xf]
  %v121 = vld [vmem:[%s2] sm:$0x1]
  %v123 = vlaneseq
  %v124 = vshrl.u32 %v123, 7
  %v125 = vsub.s32 0, %v124
  %v126 = vrot.slane %v121, %v125
  %v170 = vunpack.c.l.b16 %v15
  %v171 = vunpack.c.h.b16 %v15
  %v172 = vunpack.c.l.b16 %v16
  %v173 = vunpack.c.h.b16 %v16
  %v174 = vunpack.c.l.b16 %v17
  %v175 = vunpack.c.h.b16 %v17
  %v176 = vunpack.c.l.b16 %v18
  %v177 = vunpack.c.h.b16 %v18
  %v178 = vunpack.c.l.b16 %v19
  %v179 = vunpack.c.h.b16 %v19
  %v180 = vunpack.c.l.b16 %v20
  %v181 = vunpack.c.h.b16 %v20
  %v182 = vunpack.c.l.b16 %v21
  %v183 = vunpack.c.h.b16 %v21
  %v184 = vunpack.c.l.b16 %v22
  %v185 = vunpack.c.h.b16 %v22
  %v186 = vunpack.c.l.b16 %v23
  %v187 = vunpack.c.h.b16 %v23
  %v188 = vunpack.c.l.b16 %v24
  %v189 = vunpack.c.h.b16 %v24
  %v190 = vunpack.c.l.b16 %v25
  %v191 = vunpack.c.h.b16 %v25
  %v192 = vunpack.c.l.b16 %v26
  %v193 = vunpack.c.h.b16 %v26
  %v194 = vunpack.c.l.b16 %v27
  %v195 = vunpack.c.h.b16 %v27
  %v196 = vunpack.c.l.b16 %v28
  %v197 = vunpack.c.h.b16 %v28
  %v198 = vunpack.c.l.b16 %v29
  %v199 = vunpack.c.h.b16 %v29
  %v200 = vunpack.c.l.b16 %v30
  %v201 = vunpack.c.h.b16 %v30
  %v202 = vunpack.c.l.b16 %v31
  %v203 = vunpack.c.h.b16 %v31
  %v204 = vunpack.c.l.b16 %v32
  %v205 = vunpack.c.h.b16 %v32
  %v206 = vunpack.c.l.b16 %v33
  %v207 = vunpack.c.h.b16 %v33
  %v208 = vunpack.c.l.b16 %v34
  %v209 = vunpack.c.h.b16 %v34
  %v210 = vunpack.c.l.b16 %v35
  %v211 = vunpack.c.h.b16 %v35
  %v212 = vunpack.c.l.b16 %v36
  %v213 = vunpack.c.h.b16 %v36
  %v214 = vunpack.c.l.b16 %v37
  %v215 = vunpack.c.h.b16 %v37
  %v216 = vunpack.c.l.b16 %v38
  %v217 = vunpack.c.h.b16 %v38
  %v218 = vunpack.c.l.b16 %v39
  %v219 = vunpack.c.h.b16 %v39
  %v220 = vunpack.c.l.b16 %v40
  %v221 = vunpack.c.h.b16 %v40
  %v222 = vunpack.c.l.b16 %v41
  %v223 = vunpack.c.h.b16 %v41
  %v224 = vunpack.c.l.b16 %v42
  %v225 = vunpack.c.h.b16 %v42
  %v226 = vunpack.c.l.b16 %v43
  %v227 = vunpack.c.h.b16 %v43
  %v228 = vunpack.c.l.b16 %v44
  %v229 = vunpack.c.h.b16 %v44
  %v230 = vunpack.c.l.b16 %v45
  %v231 = vunpack.c.h.b16 %v45
  %v232 = vunpack.c.l.b16 %v46
  %v233 = vunpack.c.h.b16 %v46
  %v234 = vunpack.c.l.b16 %v47
  %v235 = vunpack.c.h.b16 %v47
  %v236 = vunpack.c.l.b16 %v48
  %v237 = vunpack.c.h.b16 %v48
  %v238 = vunpack.c.l.b16 %v49
  %v239 = vunpack.c.h.b16 %v49
  %v240 = vunpack.c.l.b16 %v50
  %v241 = vunpack.c.h.b16 %v50
  %v242 = vunpack.c.l.b16 %v51
  %v243 = vunpack.c.h.b16 %v51
  %v244 = vunpack.c.l.b16 %v52
  %v245 = vunpack.c.h.b16 %v52
  %v246 = vunpack.c.l.b16 %v53
  %v247 = vunpack.c.h.b16 %v53
  %v248 = vunpack.c.l.b16 %v54
  %v249 = vunpack.c.h.b16 %v54
  %v250 = vunpack.c.l.b16 %v55
  %v251 = vunpack.c.h.b16 %v55
  %v252 = vunpack.c.l.b16 %v56
  %v253 = vunpack.c.h.b16 %v56
  %v254 = vpack.c.b16 %v174, %v170
  %v255 = vpack.c.b16 %v175, %v171
  %v256 = vpack.c.b16 %v176, %v172
  %v257 = vpack.c.b16 %v177, %v173
  %v258 = vpack.c.b16 %v182, %v178
  %v259 = vpack.c.b16 %v183, %v179
  %v260 = vpack.c.b16 %v184, %v180
  %v261 = vpack.c.b16 %v185, %v181
  %v262 = vpack.c.b16 %v190, %v186
  %v263 = vpack.c.b16 %v191, %v187
  %v264 = vpack.c.b16 %v192, %v188
  %v265 = vpack.c.b16 %v193, %v189
  %v266 = vpack.c.b16 %v198, %v194
  %v267 = vpack.c.b16 %v199, %v195
  %v268 = vpack.c.b16 %v200, %v196
  %v269 = vpack.c.b16 %v201, %v197
  %v270 = vpack.c.b16 %v206, %v202
  %v271 = vpack.c.b16 %v207, %v203
  %v272 = vpack.c.b16 %v208, %v204
  %v273 = vpack.c.b16 %v209, %v205
  %v274 = vpack.c.b16 %v214, %v210
  %v275 = vpack.c.b16 %v215, %v211
  %v276 = vpack.c.b16 %v216, %v212
  %v277 = vpack.c.b16 %v217, %v213
  %v278 = vpack.c.b16 %v222, %v218
  %v279 = vpack.c.b16 %v223, %v219
  %v280 = vpack.c.b16 %v224, %v220
  %v281 = vpack.c.b16 %v225, %v221
  %v282 = vpack.c.b16 %v230, %v226
  %v283 = vpack.c.b16 %v231, %v227
  %v284 = vpack.c.b16 %v232, %v228
  %v285 = vpack.c.b16 %v233, %v229
  %v286 = vpack.c.b16 %v238, %v234
  %v287 = vpack.c.b16 %v239, %v235
  %v288 = vpack.c.b16 %v240, %v236
  %v289 = vpack.c.b16 %v241, %v237
  %v290 = vpack.c.b16 %v246, %v242
  %v291 = vpack.c.b16 %v247, %v243
  %v292 = vpack.c.b16 %v248, %v244
  %v293 = vpack.c.b16 %v249, %v245
  %v294 = vpack.c.b16 %v250, %v250
  %v295 = vpack.c.b16 %v251, %v251
  %v296 = vpack.c.b16 %v252, %v252
  %v297 = vpack.c.b16 %v253, %v253
  %v406 = vunpack.c.l.b16 %v57
  %v407 = vunpack.c.l.b16 %v58
  %v408 = vunpack.c.l.b16 %v59
  %v409 = vunpack.c.l.b16 %v60
  %v410 = vunpack.c.l.b16 %v61
  %v411 = vunpack.c.l.b16 %v62
  %v412 = vunpack.c.l.b16 %v63
  %v413 = vunpack.c.l.b16 %v64
  %v414 = vunpack.c.l.b16 %v65
  %v415 = vunpack.c.l.b16 %v66
  %v416 = vunpack.c.l.b16 %v67
  %v417 = vunpack.c.l.b16 %v68
  %v418 = vunpack.c.l.b16 %v69
  %v419 = vunpack.c.l.b16 %v70
  %v420 = vunpack.c.l.b16 %v71
  %v421 = vunpack.c.l.b16 %v72
  %v422 = vunpack.c.l.b16 %v73
  %v423 = vunpack.c.l.b16 %v74
  %v424 = vunpack.c.l.b16 %v75
  %v425 = vunpack.c.l.b16 %v76
  %v426 = vunpack.c.l.b16 %v77
  %v427 = vunpack.c.l.b16 %v78
  %v428 = vunpack.c.l.b16 %v79
  %v429 = vunpack.c.l.b16 %v80
  %v430 = vunpack.c.l.b16 %v81
  %v431 = vunpack.c.l.b16 %v82
  %v432 = vunpack.c.l.b16 %v83
  %v433 = vunpack.c.l.b16 %v84
  %v434 = vunpack.c.l.b16 %v85
  %v435 = vunpack.c.l.b16 %v86
  %v436 = vunpack.c.l.b16 %v87
  %v437 = vunpack.c.l.b16 %v88
  %v438 = vunpack.c.l.b16 %v89
  %v439 = vunpack.c.l.b16 %v90
  %v440 = vunpack.c.l.b16 %v91
  %v441 = vunpack.c.l.b16 %v92
  %v442 = vunpack.c.l.b16 %v93
  %v443 = vunpack.c.l.b16 %v94
  %v444 = vunpack.c.l.b16 %v95
  %v445 = vunpack.c.l.b16 %v96
  %v446 = vunpack.c.l.b16 %v97
  %v447 = vunpack.c.l.b16 %v98
  %v448 = vunpack.c.l.b16 %v99
  %v449 = vunpack.c.l.b16 %v100
  %v450 = vunpack.c.l.b16 %v101
  %v451 = vunpack.c.l.b16 %v102
  %v452 = vunpack.c.l.b16 %v103
  %v453 = vunpack.c.l.b16 %v104
  %v454 = vunpack.c.l.b16 %v105
  %v455 = vunpack.c.l.b16 %v106
  %v456 = vunpack.c.l.b16 %v107
  %v457 = vunpack.c.l.b16 %v108
  %v458 = vunpack.c.l.b16 %v109
  %v459 = vunpack.c.l.b16 %v110
  %v460 = vunpack.c.l.b16 %v111
  %v461 = vunpack.c.l.b16 %v112
  %v462 = vunpack.c.l.b16 %v113
  %v463 = vunpack.c.l.b16 %v114
  %v464 = vunpack.c.l.b16 %v115
  %v465 = vunpack.c.l.b16 %v116
  %v466 = vunpack.c.l.b16 %v117
  %v467 = vunpack.c.l.b16 %v118
  %v468 = vunpack.c.l.b16 %v119
  %v469 = vunpack.c.l.b16 %v120
  %v470 = vpack.c.b16 %v407, %v406
  %v471 = vpack.c.b16 %v409, %v408
  %v472 = vpack.c.b16 %v411, %v410
  %v473 = vpack.c.b16 %v413, %v412
  %v474 = vpack.c.b16 %v415, %v414
  %v475 = vpack.c.b16 %v417, %v416
  %v476 = vpack.c.b16 %v419, %v418
  %v477 = vpack.c.b16 %v421, %v420
  %v478 = vpack.c.b16 %v423, %v422
  %v479 = vpack.c.b16 %v425, %v424
  %v480 = vpack.c.b16 %v427, %v426
  %v481 = vpack.c.b16 %v429, %v428
  %v482 = vpack.c.b16 %v431, %v430
  %v483 = vpack.c.b16 %v433, %v432
  %v484 = vpack.c.b16 %v435, %v434
  %v485 = vpack.c.b16 %v437, %v436
  %v486 = vpack.c.b16 %v439, %v438
  %v487 = vpack.c.b16 %v441, %v440
  %v488 = vpack.c.b16 %v443, %v442
  %v489 = vpack.c.b16 %v445, %v444
  %v490 = vpack.c.b16 %v447, %v446
  %v491 = vpack.c.b16 %v449, %v448
  %v492 = vpack.c.b16 %v451, %v450
  %v493 = vpack.c.b16 %v453, %v452
  %v494 = vpack.c.b16 %v455, %v454
  %v495 = vpack.c.b16 %v457, %v456
  %v496 = vpack.c.b16 %v459, %v458
  %v497 = vpack.c.b16 %v461, %v460
  %v498 = vpack.c.b16 %v463, %v462
  %v499 = vpack.c.b16 %v465, %v464
  %v500 = vpack.c.b16 %v467, %v466
  %v501 = vpack.c.b16 %v469, %v468
  %534 = vmatprep.subr.bf16.mxu0 0
  %535 = vmatpush1.bf16.msra.mxu0 %v470
  %536 = vmatprep.subr.bf16.mxu0 0
  %537 = vmatpush1.bf16.msra.mxu0 %v471
  %538 = vmatprep.subr.bf16.mxu0 0
  %539 = vmatpush1.bf16.msra.mxu0 %v472
  %540 = vmatprep.subr.bf16.mxu0 0
  %541 = vmatpush1.bf16.msra.mxu0 %v473
  %542 = vmatprep.subr.bf16.mxu0 0
  %543 = vmatpush1.bf16.msra.mxu0 %v474
  %544 = vmatprep.subr.bf16.mxu0 0
  %545 = vmatpush1.bf16.msra.mxu0 %v475
  %546 = vmatprep.subr.bf16.mxu0 0
  %547 = vmatpush1.bf16.msra.mxu0 %v476
  %548 = vmatprep.subr.bf16.mxu0 0
  %549 = vmatpush1.bf16.msra.mxu0 %v477
  %550 = vmatprep.subr.bf16.mxu0 0
  %551 = vmatpush1.bf16.msra.mxu0 %v478
  %552 = vmatprep.subr.bf16.mxu0 0
  %553 = vmatpush1.bf16.msra.mxu0 %v479
  %554 = vmatprep.subr.bf16.mxu0 0
  %555 = vmatpush1.bf16.msra.mxu0 %v480
  %556 = vmatprep.subr.bf16.mxu0 0
  %557 = vmatpush1.bf16.msra.mxu0 %v481
  %558 = vmatprep.subr.bf16.mxu0 0
  %559 = vmatpush1.bf16.msra.mxu0 %v482
  %560 = vmatprep.subr.bf16.mxu0 0
  %561 = vmatpush1.bf16.msra.mxu0 %v483
  %562 = vmatprep.subr.bf16.mxu0 0
  %563 = vmatpush1.bf16.msra.mxu0 %v484
  %564 = vmatprep.subr.bf16.mxu0 0
  %565 = vmatpush1.bf16.msra.mxu0 %v485
  %566 = vmatprep.mubr.bf16.mxu0 %v255
  %567 = vmatmul.mubr.bf16.gmra.mrb[0].mxu0 %v254
  %v568 = vpop.f32.mrb[0].mxu0
  %v569 = vadd.f32 %v126, %v568
  %v570 = vpop.f32.mrb[0].mxu0
  %v571 = vpop.f32.mrb[0].mxu0
  %v572 = vadd.f32 %v126, %v571
  %v573 = vpop.f32.mrb[0].mxu0
  %574 = vmatprep.mubr.bf16.mxu0 %v259
  %575 = vmatmul.mubr.bf16.gmra.mrb[0].mxu0 %v258
  %v576 = vpop.f32.mrb[0].mxu0
  %v577 = vadd.f32 %v126, %v576
  %v578 = vpop.f32.mrb[0].mxu0
  %v579 = vpop.f32.mrb[0].mxu0
  %v580 = vadd.f32 %v126, %v579
  %v581 = vpop.f32.mrb[0].mxu0
  %582 = vmatprep.mubr.bf16.mxu0 %v263
  %583 = vmatmul.mubr.bf16.gmra.mrb[0].mxu0 %v262
  %v584 = vpop.f32.mrb[0].mxu0
  %v585 = vadd.f32 %v126, %v584
  %v586 = vpop.f32.mrb[0].mxu0
  %v587 = vpop.f32.mrb[0].mxu0
  %v588 = vadd.f32 %v126, %v587
  %v589 = vpop.f32.mrb[0].mxu0
  %590 = vmatprep.mubr.bf16.mxu0 %v267
  %591 = vmatmul.mubr.bf16.gmra.mrb[0].mxu0 %v266
  %v592 = vpop.f32.mrb[0].mxu0
  %v593 = vadd.f32 %v126, %v592
  %v594 = vpop.f32.mrb[0].mxu0
  %v595 = vpop.f32.mrb[0].mxu0
  %v596 = vadd.f32 %v126, %v595
  %v597 = vpop.f32.mrb[0].mxu0
  %598 = vmatprep.mubr.bf16.mxu0 %v271
  %599 = vmatmul.mubr.bf16.gmra.mrb[0].mxu0 %v270
  %v600 = vpop.f32.mrb[0].mxu0
  %v601 = vadd.f32 %v126, %v600
  %v602 = vpop.f32.mrb[0].mxu0
  %v603 = vpop.f32.mrb[0].mxu0
  %v604 = vadd.f32 %v126, %v603
  %v605 = vpop.f32.mrb[0].mxu0
  %606 = vmatprep.mubr.bf16.mxu0 %v275
  %607 = vmatmul.mubr.bf16.gmra.mrb[0].mxu0 %v274
  %v608 = vpop.f32.mrb[0].mxu0
  %v609 = vadd.f32 %v126, %v608
  %v610 = vpop.f32.mrb[0].mxu0
  %v611 = vpop.f32.mrb[0].mxu0
  %v612 = vadd.f32 %v126, %v611
  %v613 = vpop.f32.mrb[0].mxu0
  %614 = vmatprep.mubr.bf16.mxu0 %v279
  %615 = vmatmul.mubr.bf16.gmra.mrb[0].mxu0 %v278
  %v616 = vpop.f32.mrb[0].mxu0
  %v617 = vadd.f32 %v126, %v616
  %v618 = vpop.f32.mrb[0].mxu0
  %v619 = vpop.f32.mrb[0].mxu0
  %v620 = vadd.f32 %v126, %v619
  %v621 = vpop.f32.mrb[0].mxu0
  %622 = vmatprep.mubr.bf16.mxu0 %v283
  %623 = vmatmul.mubr.bf16.gmra.mrb[0].mxu0 %v282
  %v624 = vpop.f32.mrb[0].mxu0
  %v625 = vadd.f32 %v126, %v624
  %v626 = vpop.f32.mrb[0].mxu0
  %v627 = vpop.f32.mrb[0].mxu0
  %v628 = vadd.f32 %v126, %v627
  %v629 = vpop.f32.mrb[0].mxu0
  %630 = vmatprep.mubr.bf16.mxu0 %v287
  %631 = vmatmul.mubr.bf16.gmra.mrb[0].mxu0 %v286
  %v632 = vpop.f32.mrb[0].mxu0
  %v633 = vadd.f32 %v126, %v632
  %v634 = vpop.f32.mrb[0].mxu0
  %v635 = vpop.f32.mrb[0].mxu0
  %v636 = vadd.f32 %v126, %v635
  %v637 = vpop.f32.mrb[0].mxu0
  %638 = vmatprep.mubr.bf16.mxu0 %v291
  %639 = vmatmul.mubr.bf16.gmra.mrb[0].mxu0 %v290
  %v640 = vpop.f32.mrb[0].mxu0
  %v641 = vadd.f32 %v126, %v640
  %v642 = vpop.f32.mrb[0].mxu0
  %v643 = vpop.f32.mrb[0].mxu0
  %v644 = vadd.f32 %v126, %v643
  %v645 = vpop.f32.mrb[0].mxu0
  %646 = vmatprep.mubr.bf16.mxu0 %v295
  %647 = vmatmul.mubr.bf16.gmra.mrb[0].mxu0 %v294
  %v648 = vpop.f32.mrb[0].mxu0
  %v649 = vadd.f32 %v126, %v648
  %v650 = vpop.f32.mrb[0].mxu0
  %v651 = vpop.f32.mrb[0].mxu0
  %v652 = vpop.f32.mrb[0].mxu0
  %653 = vdwg.mxu0
  %654 = vmatprep.subr.bf16.mxu0 0
  %655 = vmatpush1.bf16.msra.mxu0 %v486
  %656 = vmatprep.subr.bf16.mxu0 0
  %657 = vmatpush1.bf16.msra.mxu0 %v487
  %658 = vmatprep.subr.bf16.mxu0 0
  %659 = vmatpush1.bf16.msra.mxu0 %v488
  %660 = vmatprep.subr.bf16.mxu0 0
  %661 = vmatpush1.bf16.msra.mxu0 %v489
  %662 = vmatprep.subr.bf16.mxu0 0
  %663 = vmatpush1.bf16.msra.mxu0 %v490
  %664 = vmatprep.subr.bf16.mxu0 0
  %665 = vmatpush1.bf16.msra.mxu0 %v491
  %666 = vmatprep.subr.bf16.mxu0 0
  %667 = vmatpush1.bf16.msra.mxu0 %v492
  %668 = vmatprep.subr.bf16.mxu0 0
  %669 = vmatpush1.bf16.msra.mxu0 %v493
  %670 = vmatprep.subr.bf16.mxu0 0
  %671 = vmatpush1.bf16.msra.mxu0 %v494
  %672 = vmatprep.subr.bf16.mxu0 0
  %673 = vmatpush1.bf16.msra.mxu0 %v495
  %674 = vmatprep.subr.bf16.mxu0 0
  %675 = vmatpush1.bf16.msra.mxu0 %v496
  %676 = vmatprep.subr.bf16.mxu0 0
  %677 = vmatpush1.bf16.msra.mxu0 %v497
  %678 = vmatprep.subr.bf16.mxu0 0
  %679 = vmatpush1.bf16.msra.mxu0 %v498
  %680 = vmatprep.subr.bf16.mxu0 0
  %681 = vmatpush1.bf16.msra.mxu0 %v499
  %682 = vmatprep.subr.bf16.mxu0 0
  %683 = vmatpush1.bf16.msra.mxu0 %v500
  %684 = vmatprep.subr.bf16.mxu0 0
  %685 = vmatpush1.bf16.msra.mxu0 %v501
  %686 = vmatprep.mubr.bf16.mxu0 %v257
  %687 = vmatmul.mubr.bf16.gmra.mrb[0].mxu0 %v256
  %v688 = vpop.f32.mrb[0].mxu0
  %v689 = vadd.f32 %v569, %v688
  %v690 = vpop.f32.mrb[0].mxu0
  %v691 = vpop.f32.mrb[0].mxu0
  %v692 = vadd.f32 %v572, %v691
  %v693 = vpop.f32.mrb[0].mxu0
  %694 = vmatprep.mubr.bf16.mxu0 %v261
  %695 = vmatmul.mubr.bf16.gmra.mrb[0].mxu0 %v260
  %v696 = vpop.f32.mrb[0].mxu0
  %v697 = vadd.f32 %v577, %v696
  %v698 = vpop.f32.mrb[0].mxu0
  %v699 = vpop.f32.mrb[0].mxu0
  %v700 = vadd.f32 %v580, %v699
  %v701 = vpop.f32.mrb[0].mxu0
  %702 = vmatprep.mubr.bf16.mxu0 %v265
  %703 = vmatmul.mubr.bf16.gmra.mrb[0].mxu0 %v264
  %v704 = vpop.f32.mrb[0].mxu0
  %v705 = vadd.f32 %v585, %v704
  %v706 = vpop.f32.mrb[0].mxu0
  %v707 = vpop.f32.mrb[0].mxu0
  %v708 = vadd.f32 %v588, %v707
  %v709 = vpop.f32.mrb[0].mxu0
  %710 = vmatprep.mubr.bf16.mxu0 %v269
  %711 = vmatmul.mubr.bf16.gmra.mrb[0].mxu0 %v268
  %v712 = vpop.f32.mrb[0].mxu0
  %v713 = vadd.f32 %v593, %v712
  %v714 = vpop.f32.mrb[0].mxu0
  %v715 = vpop.f32.mrb[0].mxu0
  %v716 = vadd.f32 %v596, %v715
  %v717 = vpop.f32.mrb[0].mxu0
  %718 = vmatprep.mubr.bf16.mxu0 %v273
  %719 = vmatmul.mubr.bf16.gmra.mrb[0].mxu0 %v272
  %v720 = vpop.f32.mrb[0].mxu0
  %v721 = vadd.f32 %v601, %v720
  %v722 = vpop.f32.mrb[0].mxu0
  %v723 = vpop.f32.mrb[0].mxu0
  %v724 = vadd.f32 %v604, %v723
  %v725 = vpop.f32.mrb[0].mxu0
  %726 = vmatprep.mubr.bf16.mxu0 %v277
  %727 = vmatmul.mubr.bf16.gmra.mrb[0].mxu0 %v276
  %v728 = vpop.f32.mrb[0].mxu0
  %v729 = vadd.f32 %v609, %v728
  %v730 = vpop.f32.mrb[0].mxu0
  %v731 = vpop.f32.mrb[0].mxu0
  %v732 = vadd.f32 %v612, %v731
  %v733 = vpop.f32.mrb[0].mxu0
  %734 = vmatprep.mubr.bf16.mxu0 %v281
  %735 = vmatmul.mubr.bf16.gmra.mrb[0].mxu0 %v280
  %v736 = vpop.f32.mrb[0].mxu0
  %v737 = vadd.f32 %v617, %v736
  %v738 = vpop.f32.mrb[0].mxu0
  %v739 = vpop.f32.mrb[0].mxu0
  %v740 = vadd.f32 %v620, %v739
  %v741 = vpop.f32.mrb[0].mxu0
  %742 = vmatprep.mubr.bf16.mxu0 %v285
  %743 = vmatmul.mubr.bf16.gmra.mrb[0].mxu0 %v284
  %v744 = vpop.f32.mrb[0].mxu0
  %v745 = vadd.f32 %v625, %v744
  %v746 = vpop.f32.mrb[0].mxu0
  %v747 = vpop.f32.mrb[0].mxu0
  %v748 = vadd.f32 %v628, %v747
  %v749 = vpop.f32.mrb[0].mxu0
  %750 = vmatprep.mubr.bf16.mxu0 %v289
  %751 = vmatmul.mubr.bf16.gmra.mrb[0].mxu0 %v288
  %v752 = vpop.f32.mrb[0].mxu0
  %v753 = vadd.f32 %v633, %v752
  %v754 = vpop.f32.mrb[0].mxu0
  %v755 = vpop.f32.mrb[0].mxu0
  %v756 = vadd.f32 %v636, %v755
  %v757 = vpop.f32.mrb[0].mxu0
  %758 = vmatprep.mubr.bf16.mxu0 %v293
  %759 = vmatmul.mubr.bf16.gmra.mrb[0].mxu0 %v292
  %v760 = vpop.f32.mrb[0].mxu0
  %v761 = vadd.f32 %v641, %v760
  %v762 = vpop.f32.mrb[0].mxu0
  %v763 = vpop.f32.mrb[0].mxu0
  %v764 = vadd.f32 %v644, %v763
  %v765 = vpop.f32.mrb[0].mxu0
  %766 = vmatprep.mubr.bf16.mxu0 %v297
  %767 = vmatmul.mubr.bf16.gmra.mrb[0].mxu0 %v296
  %v768 = vpop.f32.mrb[0].mxu0
  %v769 = vadd.f32 %v649, %v768
  %v770 = vpop.f32.mrb[0].mxu0
  %v771 = vpop.f32.mrb[0].mxu0
  %v772 = vpop.f32.mrb[0].mxu0
  %773 = vdwg.mxu0
  %v774 = vmax.f32 %v689, 0.0
  %v775 = vmax.f32 %v692, 0.0
  %v776 = vmax.f32 %v697, 0.0
  %v777 = vmax.f32 %v700, 0.0
  %v778 = vmax.f32 %v705, 0.0
  %v779 = vmax.f32 %v708, 0.0
  %v780 = vmax.f32 %v713, 0.0
  %v781 = vmax.f32 %v716, 0.0
  %v782 = vmax.f32 %v721, 0.0
  %v783 = vmax.f32 %v724, 0.0
  %v784 = vmax.f32 %v729, 0.0
  %v785 = vmax.f32 %v732, 0.0
  %v786 = vmax.f32 %v737, 0.0
  %v787 = vmax.f32 %v740, 0.0
  %v788 = vmax.f32 %v745, 0.0
  %v789 = vmax.f32 %v748, 0.0
  %v790 = vmax.f32 %v753, 0.0
  %v791 = vmax.f32 %v756, 0.0
  %v792 = vmax.f32 %v761, 0.0
  %v793 = vmax.f32 %v764, 0.0
  %v794 = vmax.f32 %v769, 0.0
  %v795 = vpack.c.bf16 %v775, %v774
  %v796 = vpack.c.bf16 %v777, %v776
  %v797 = vpack.c.bf16 %v779, %v778
  %v798 = vpack.c.bf16 %v781, %v780
  %v799 = vpack.c.bf16 %v783, %v782
  %v800 = vpack.c.bf16 %v785, %v784
  %v801 = vpack.c.bf16 %v787, %v786
  %v802 = vpack.c.bf16 %v789, %v788
  %v803 = vpack.c.bf16 %v791, %v790
  %v804 = vpack.c.bf16 %v793, %v792
  %v805 = vpack.c.bf16 %v794, %v794
  %v817 = vunpack.c.l.b16 %v795
  %v818 = vunpack.c.h.b16 %v795
  %v819 = vunpack.c.l.b16 %v796
  %v820 = vunpack.c.h.b16 %v796
  %v821 = vunpack.c.l.b16 %v797
  %v822 = vunpack.c.h.b16 %v797
  %v823 = vunpack.c.l.b16 %v798
  %v824 = vunpack.c.h.b16 %v798
  %v825 = vunpack.c.l.b16 %v799
  %v826 = vunpack.c.h.b16 %v799
  %v827 = vunpack.c.l.b16 %v800
  %v828 = vunpack.c.h.b16 %v800
  %v829 = vunpack.c.l.b16 %v801
  %v830 = vunpack.c.h.b16 %v801
  %v831 = vunpack.c.l.b16 %v802
  %v832 = vunpack.c.h.b16 %v802
  %v833 = vunpack.c.l.b16 %v803
  %v834 = vunpack.c.h.b16 %v803
  %v835 = vunpack.c.l.b16 %v804
  %v836 = vunpack.c.h.b16 %v804
  %v837 = vunpack.c.l.b16 %v805
  %v838 = vpack.c.b16 %v817, %v817
  %v839 = vpack.c.b16 %v818, %v818
  %v840 = vpack.c.b16 %v819, %v819
  %v841 = vpack.c.b16 %v820, %v820
  %v842 = vpack.c.b16 %v821, %v821
  %v843 = vpack.c.b16 %v822, %v822
  %v844 = vpack.c.b16 %v823, %v823
  %v845 = vpack.c.b16 %v824, %v824
  %v846 = vpack.c.b16 %v825, %v825
  %v847 = vpack.c.b16 %v826, %v826
  %v848 = vpack.c.b16 %v827, %v827
  %v849 = vpack.c.b16 %v828, %v828
  %v850 = vpack.c.b16 %v829, %v829
  %v851 = vpack.c.b16 %v830, %v830
  %v852 = vpack.c.b16 %v831, %v831
  %v853 = vpack.c.b16 %v832, %v832
  %v854 = vpack.c.b16 %v833, %v833
  %v855 = vpack.c.b16 %v834, %v834
  %v856 = vpack.c.b16 %v835, %v835
  %v857 = vpack.c.b16 %v836, %v836
  %v858 = vpack.c.b16 %v837, %v837
  %vm880 = vcmask 519168
  %881 = vst.msk [vmem:[%s3] sm:$0xf] %vm880, %v838
  %882 = vst.msk [vmem:[%s3 + $0x4] sm:$0xf] %vm880, %v839
  %883 = vst.msk [vmem:[%s3 + $0x8] sm:$0xf] %vm880, %v840
  %884 = vst.msk [vmem:[%s3 + $0xc] sm:$0xf] %vm880, %v841
  %885 = vst.msk [vmem:[%s3 + $0x10] sm:$0xf] %vm880, %v842
  %886 = vst.msk [vmem:[%s3 + $0x14] sm:$0xf] %vm880, %v843
  %887 = vst.msk [vmem:[%s3 + $0x18] sm:$0xf] %vm880, %v844
  %888 = vst.msk [vmem:[%s3 + $0x1c] sm:$0xf] %vm880, %v845
  %889 = vst.msk [vmem:[%s3 + $0x20] sm:$0xf] %vm880, %v846
  %890 = vst.msk [vmem:[%s3 + $0x24] sm:$0xf] %vm880, %v847
  %891 = vst.msk [vmem:[%s3 + $0x28] sm:$0xf] %vm880, %v848
  %892 = vst.msk [vmem:[%s3 + $0x2c] sm:$0xf] %vm880, %v849
  %893 = vst.msk [vmem:[%s3 + $0x30] sm:$0xf] %vm880, %v850
  %894 = vst.msk [vmem:[%s3 + $0x34] sm:$0xf] %vm880, %v851
  %895 = vst.msk [vmem:[%s3 + $0x38] sm:$0xf] %vm880, %v852
  %896 = vst.msk [vmem:[%s3 + $0x3c] sm:$0xf] %vm880, %v853
  %897 = vst.msk [vmem:[%s3 + $0x40] sm:$0xf] %vm880, %v854
  %898 = vst.msk [vmem:[%s3 + $0x44] sm:$0xf] %vm880, %v855
  %899 = vst.msk [vmem:[%s3 + $0x48] sm:$0xf] %vm880, %v856
  %900 = vst.msk [vmem:[%s3 + $0x4c] sm:$0xf] %vm880, %v857
  %vm901 = vcmask 516096
  %902 = vst.msk [vmem:[%s3 + $0x50] sm:$0x1] %vm901, %v858
  // Predicated region
  $region14: #{model_forward.5} parent=0 // pred_check
    _
  $region15: #{model_forward.5} parent=0 // pred_check_branch
    %904 = sbr.rel (0) target = $region17
  $region16: #{model_forward.5} parent=0 // pred_region
    _
  $region17: #{model_forward.5} parent=0 // pred_fallthru
    _
  // Predicated region
  $region18: #{model_forward.5} parent=0 // pred_check
    _
  $region19: #{model_forward.5} parent=0 // pred_check_branch
    %906 = sbr.rel (0) target = $region21
  $region20: #{model_forward.5} parent=0 // pred_region
    _
  $region21: #{model_forward.5} parent=0 // pred_fallthru
    _

// kernel: model_forward.6
$region0: #{model_forward.6}
  #allocation0 [shape = 'u32[]', space=smem, size = 0x4, offset = 0x4, fixed_abs, tag = 'smem constant byte address 0x4 - core index']
  #allocation1 [shape = 'u32[144,128]{1,0:T(1,128)}', space=vmem, size = 0x12000, scoped, tag = 'internal scratch']
  %s0 = inlined_call_operand.vmem [shape: bf16[98,576], index: 0, kind: input, shape index: {}]
  %s1 = inlined_call_operand.vmem [shape: bf16[576,64], index: 1, kind: input, shape index: {}]
  %s2 = inlined_call_operand.vmem [shape: f32[1,64], index: 2, kind: input, shape index: {}]
  %s3 = inlined_call_operand.vmem [shape: bf16[98,64], index: 3, kind: output, shape index: {}]
  %s4 = sld [smem:[#allocation0]]
  $region22: #{model_forward.6} parent=0
    _
  %s6 = ssub.s32 1, %s4
  %s7 = scalar_select 0, %s6, %s4
  // Predicated region
  $region2: #{model_forward.6} parent=0 // pred_check
    _
  $region3: #{model_forward.6} parent=0 // pred_check_branch
    %9 = sbr.rel (0) target = $region5
  $region4: #{model_forward.6} parent=0 // pred_region
    _
  $region5: #{model_forward.6} parent=0 // pred_fallthru
    _
  // Predicated region
  $region6: #{model_forward.6} parent=0 // pred_check
    _
  $region7: #{model_forward.6} parent=0 // pred_check_branch
    %11 = sbr.rel (0) target = $region9
  $region8: #{model_forward.6} parent=0 // pred_region
    _
  $region9: #{model_forward.6} parent=0 // pred_fallthru
    _
  // Predicated region
  $region10: #{model_forward.6} parent=0 // pred_check
    _
  $region11: #{model_forward.6} parent=0 // pred_check_branch
    %13 = sbr.rel (0) target = $region13
  $region12: #{model_forward.6} parent=0 // pred_region
    _
  $region13: #{model_forward.6} parent=0 // pred_fallthru
    _
  %v15 = vld [vmem:[%s0] sm:$0xff]
  %v16 = vld [vmem:[%s0 + $0x8] sm:$0xff]
  %v17 = vld [vmem:[%s0 + $0x10] sm:$0xf]
  %v18 = vld [vmem:[%s0 + $0x14] sm:$0xff]
  %v19 = vld [vmem:[%s0 + $0x1c] sm:$0xff]
  %v20 = vld [vmem:[%s0 + $0x24] sm:$0xf]
  %v21 = vld [vmem:[%s0 + $0x28] sm:$0xff]
  %v22 = vld [vmem:[%s0 + $0x30] sm:$0xff]
  %v23 = vld [vmem:[%s0 + $0x38] sm:$0xf]
  %v24 = vld [vmem:[%s0 + $0x3c] sm:$0xff]
  %v25 = vld [vmem:[%s0 + $0x44] sm:$0xff]
  %v26 = vld [vmem:[%s0 + $0x4c] sm:$0xf]
  %v27 = vld [vmem:[%s0 + $0x50] sm:$0xff]
  %v28 = vld [vmem:[%s0 + $0x58] sm:$0xff]
  %v29 = vld [vmem:[%s0 + $0x60] sm:$0xf]
  %v30 = vld [vmem:[%s0 + $0x64] sm:$0xff]
  %v31 = vld [vmem:[%s0 + $0x6c] sm:$0xff]
  %v32 = vld [vmem:[%s0 + $0x74] sm:$0xf]
  %v33 = vld [vmem:[%s0 + $0x78] sm:$0xff]
  %v34 = vld [vmem:[%s0 + $0x80] sm:$0xff]
  %v35 = vld [vmem:[%s0 + $0x88] sm:$0xf]
  %v36 = vld [vmem:[%s0 + $0x8c] sm:$0xff]
  %v37 = vld [vmem:[%s0 + $0x94] sm:$0xff]
  %v38 = vld [vmem:[%s0 + $0x9c] sm:$0xf]
  %v39 = vld [vmem:[%s0 + $0xa0] sm:$0xff]
  %v40 = vld [vmem:[%s0 + $0xa8] sm:$0xff]
  %v41 = vld [vmem:[%s0 + $0xb0] sm:$0xf]
  %v42 = vld [vmem:[%s0 + $0xb4] sm:$0xff]
  %v43 = vld [vmem:[%s0 + $0xbc] sm:$0xff]
  %v44 = vld [vmem:[%s0 + $0xc4] sm:$0xf]
  %v45 = vld [vmem:[%s0 + $0xc8] sm:$0xff]
  %v46 = vld [vmem:[%s0 + $0xd0] sm:$0xff]
  %v47 = vld [vmem:[%s0 + $0xd8] sm:$0xf]
  %v48 = vld [vmem:[%s0 + $0xdc] sm:$0xff]
  %v49 = vld [vmem:[%s0 + $0xe4] sm:$0xff]
  %v50 = vld [vmem:[%s0 + $0xec] sm:$0xf]
  %v51 = vld [vmem:[%s0 + $0xf0] sm:$0x11]
  %v52 = vld [vmem:[%s0 + $0xf8] sm:$0x11]
  %v53 = vld [vmem:[%s0 + $0x100] sm:$0x1]
  %v54 = vld [vmem:[%s1] sm:$0xf]
  %v55 = vld [vmem:[%s1 + $0x4] sm:$0xf]
  %v56 = vld [vmem:[%s1 + $0x8] sm:$0xf]
  %v57 = vld [vmem:[%s1 + $0xc] sm:$0xf]
  %v58 = vld [vmem:[%s1 + $0x10] sm:$0xf]
  %v59 = vld [vmem:[%s1 + $0x14] sm:$0xf]
  %v60 = vld [vmem:[%s1 + $0x18] sm:$0xf]
  %v61 = vld [vmem:[%s1 + $0x1c] sm:$0xf]
  %v62 = vld [vmem:[%s1 + $0x20] sm:$0xf]
  %v63 = vld [vmem:[%s1 + $0x24] sm:$0xf]
  %v64 = vld [vmem:[%s1 + $0x28] sm:$0xf]
  %v65 = vld [vmem:[%s1 + $0x2c] sm:$0xf]
  %v66 = vld [vmem:[%s1 + $0x30] sm:$0xf]
  %v67 = vld [vmem:[%s1 + $0x34] sm:$0xf]
  %v68 = vld [vmem:[%s1 + $0x38] sm:$0xf]
  %v69 = vld [vmem:[%s1 + $0x3c] sm:$0xf]
  %v70 = vld [vmem:[%s1 + $0x40] sm:$0xf]
  %v71 = vld [vmem:[%s1 + $0x44] sm:$0xf]
  %v72 = vld [vmem:[%s1 + $0x48] sm:$0xf]
  %v73 = vld [vmem:[%s1 + $0x4c] sm:$0xf]
  %v74 = vld [vmem:[%s1 + $0x50] sm:$0xf]
  %v75 = vld [vmem:[%s1 + $0x54] sm:$0xf]
  %v76 = vld [vmem:[%s1 + $0x58] sm:$0xf]
  %v77 = vld [vmem:[%s1 + $0x5c] sm:$0xf]
  %v78 = vld [vmem:[%s1 + $0x60] sm:$0xf]
  %v79 = vld [vmem:[%s1 + $0x64] sm:$0xf]
  %v80 = vld [vmem:[%s1 + $0x68] sm:$0xf]
  %v81 = vld [vmem:[%s1 + $0x6c] sm:$0xf]
  %v82 = vld [vmem:[%s1 + $0x70] sm:$0xf]
  %v83 = vld [vmem:[%s1 + $0x74] sm:$0xf]
  %v84 = vld [vmem:[%s1 + $0x78] sm:$0xf]
  %v85 = vld [vmem:[%s1 + $0x7c] sm:$0xf]
  %v86 = vld [vmem:[%s1 + $0x80] sm:$0xf]
  %v87 = vld [vmem:[%s1 + $0x84] sm:$0xf]
  %v88 = vld [vmem:[%s1 + $0x88] sm:$0xf]
  %v89 = vld [vmem:[%s1 + $0x8c] sm:$0xf]
  %v90 = vld [vmem:[%s1 + $0x90] sm:$0xf]
  %v91 = vld [vmem:[%s1 + $0x94] sm:$0xf]
  %v92 = vld [vmem:[%s1 + $0x98] sm:$0xf]
  %v93 = vld [vmem:[%s1 + $0x9c] sm:$0xf]
  %v94 = vld [vmem:[%s1 + $0xa0] sm:$0xf]
  %v95 = vld [vmem:[%s1 + $0xa4] sm:$0xf]
  %v96 = vld [vmem:[%s1 + $0xa8] sm:$0xf]
  %v97 = vld [vmem:[%s1 + $0xac] sm:$0xf]
  %v98 = vld [vmem:[%s1 + $0xb0] sm:$0xf]
  %v99 = vld [vmem:[%s1 + $0xb4] sm:$0xf]
  %v100 = vld [vmem:[%s1 + $0xb8] sm:$0xf]
  %v101 = vld [vmem:[%s1 + $0xbc] sm:$0xf]
  %v102 = vld [vmem:[%s1 + $0xc0] sm:$0xf]
  %v103 = vld [vmem:[%s1 + $0xc4] sm:$0xf]
  %v104 = vld [vmem:[%s1 + $0xc8] sm:$0xf]
  %v105 = vld [vmem:[%s1 + $0xcc] sm:$0xf]
  %v106 = vld [vmem:[%s1 + $0xd0] sm:$0xf]
  %v107 = vld [vmem:[%s1 + $0xd4] sm:$0xf]
  %v108 = vld [vmem:[%s1 + $0xd8] sm:$0xf]
  %v109 = vld [vmem:[%s1 + $0xdc] sm:$0xf]
  %v110 = vld [vmem:[%s1 + $0xe0] sm:$0xf]
  %v111 = vld [vmem:[%s1 + $0xe4] sm:$0xf]
  %v112 = vld [vmem:[%s1 + $0xe8] sm:$0xf]
  %v113 = vld [vmem:[%s1 + $0xec] sm:$0xf]
  %v114 = vld [vmem:[%s1 + $0xf0] sm:$0xf]
  %v115 = vld [vmem:[%s1 + $0xf4] sm:$0xf]
  %v116 = vld [vmem:[%s1 + $0xf8] sm:$0xf]
  %v117 = vld [vmem:[%s1 + $0xfc] sm:$0xf]
  %v118 = vld [vmem:[%s1 + $0x100] sm:$0xf]
  %v119 = vld [vmem:[%s1 + $0x104] sm:$0xf]
  %v120 = vld [vmem:[%s1 + $0x108] sm:$0xf]
  %v121 = vld [vmem:[%s1 + $0x10c] sm:$0xf]
  %v122 = vld [vmem:[%s1 + $0x110] sm:$0xf]
  %v123 = vld [vmem:[%s1 + $0x114] sm:$0xf]
  %v124 = vld [vmem:[%s1 + $0x118] sm:$0xf]
  %v125 = vld [vmem:[%s1 + $0x11c] sm:$0xf]
  %v126 = vld [vmem:[%s2] sm:$0x1]
  %v128 = vlaneseq
  %v129 = vshrl.u32 %v128, 7
  %v130 = vsub.s32 0, %v129
  %v131 = vrot.slane %v126, %v130
  %v172 = vunpack.c.l.b16 %v15
  %v173 = vunpack.c.h.b16 %v15
  %v174 = vunpack.c.l.b16 %v16
  %v175 = vunpack.c.h.b16 %v16
  %v176 = vunpack.c.l.b16 %v17
  %v177 = vunpack.c.l.b16 %v18
  %v178 = vunpack.c.h.b16 %v18
  %v179 = vunpack.c.l.b16 %v19
  %v180 = vunpack.c.h.b16 %v19
  %v181 = vunpack.c.l.b16 %v20
  %v182 = vunpack.c.l.b16 %v21
  %v183 = vunpack.c.h.b16 %v21
  %v184 = vunpack.c.l.b16 %v22
  %v185 = vunpack.c.h.b16 %v22
  %v186 = vunpack.c.l.b16 %v23
  %v187 = vunpack.c.l.b16 %v24
  %v188 = vunpack.c.h.b16 %v24
  %v189 = vunpack.c.l.b16 %v25
  %v190 = vunpack.c.h.b16 %v25
  %v191 = vunpack.c.l.b16 %v26
  %v192 = vunpack.c.l.b16 %v27
  %v193 = vunpack.c.h.b16 %v27
  %v194 = vunpack.c.l.b16 %v28
  %v195 = vunpack.c.h.b16 %v28
  %v196 = vunpack.c.l.b16 %v29
  %v197 = vunpack.c.l.b16 %v30
  %v198 = vunpack.c.h.b16 %v30
  %v199 = vunpack.c.l.b16 %v31
  %v200 = vunpack.c.h.b16 %v31
  %v201 = vunpack.c.l.b16 %v32
  %v202 = vunpack.c.l.b16 %v33
  %v203 = vunpack.c.h.b16 %v33
  %v204 = vunpack.c.l.b16 %v34
  %v205 = vunpack.c.h.b16 %v34
  %v206 = vunpack.c.l.b16 %v35
  %v207 = vunpack.c.l.b16 %v36
  %v208 = vunpack.c.h.b16 %v36
  %v209 = vunpack.c.l.b16 %v37
  %v210 = vunpack.c.h.b16 %v37
  %v211 = vunpack.c.l.b16 %v38
  %v212 = vunpack.c.l.b16 %v39
  %v213 = vunpack.c.h.b16 %v39
  %v214 = vunpack.c.l.b16 %v40
  %v215 = vunpack.c.h.b16 %v40
  %v216 = vunpack.c.l.b16 %v41
  %v217 = vunpack.c.l.b16 %v42
  %v218 = vunpack.c.h.b16 %v42
  %v219 = vunpack.c.l.b16 %v43
  %v220 = vunpack.c.h.b16 %v43
  %v221 = vunpack.c.l.b16 %v44
  %v222 = vunpack.c.l.b16 %v45
  %v223 = vunpack.c.h.b16 %v45
  %v224 = vunpack.c.l.b16 %v46
  %v225 = vunpack.c.h.b16 %v46
  %v226 = vunpack.c.l.b16 %v47
  %v227 = vunpack.c.l.b16 %v48
  %v228 = vunpack.c.h.b16 %v48
  %v229 = vunpack.c.l.b16 %v49
  %v230 = vunpack.c.h.b16 %v49
  %v231 = vunpack.c.l.b16 %v50
  %v232 = vunpack.c.l.b16 %v51
  %v233 = vunpack.c.h.b16 %v51
  %v234 = vunpack.c.l.b16 %v52
  %v235 = vunpack.c.h.b16 %v52
  %v236 = vunpack.c.l.b16 %v53
  %v237 = vpack.c.b16 %v177, %v172
  %v238 = vpack.c.b16 %v178, %v173
  %v239 = vpack.c.b16 %v179, %v174
  %v240 = vpack.c.b16 %v180, %v175
  %v241 = vpack.c.b16 %v181, %v176
  %v242 = vpack.c.b16 %v187, %v182
  %v243 = vpack.c.b16 %v188, %v183
  %v244 = vpack.c.b16 %v189, %v184
  %v245 = vpack.c.b16 %v190, %v185
  %v246 = vpack.c.b16 %v191, %v186
  %v247 = vpack.c.b16 %v197, %v192
  %v248 = vpack.c.b16 %v198, %v193
  %v249 = vpack.c.b16 %v199, %v194
  %v250 = vpack.c.b16 %v200, %v195
  %v251 = vpack.c.b16 %v201, %v196
  %v252 = vpack.c.b16 %v207, %v202
  %v253 = vpack.c.b16 %v208, %v203
  %v254 = vpack.c.b16 %v209, %v204
  %v255 = vpack.c.b16 %v210, %v205
  %v256 = vpack.c.b16 %v211, %v206
  %v257 = vpack.c.b16 %v217, %v212
  %v258 = vpack.c.b16 %v218, %v213
  %v259 = vpack.c.b16 %v219, %v214
  %v260 = vpack.c.b16 %v220, %v215
  %v261 = vpack.c.b16 %v221, %v216
  %v262 = vpack.c.b16 %v227, %v222
  %v263 = vpack.c.b16 %v228, %v223
  %v264 = vpack.c.b16 %v229, %v224
  %v265 = vpack.c.b16 %v230, %v225
  %v266 = vpack.c.b16 %v231, %v226
  %v267 = vpack.c.b16 %v232, %v232
  %v268 = vpack.c.b16 %v233, %v233
  %v269 = vpack.c.b16 %v234, %v234
  %v270 = vpack.c.b16 %v235, %v235
  %v271 = vpack.c.b16 %v236, %v236
  %v372 = vunpack.c.l.b16 %v54
  %v373 = vunpack.c.l.b16 %v55
  %v374 = vunpack.c.l.b16 %v56
  %v375 = vunpack.c.l.b16 %v57
  %v376 = vunpack.c.l.b16 %v58
  %v377 = vunpack.c.l.b16 %v59
  %v378 = vunpack.c.l.b16 %v60
  %v379 = vunpack.c.l.b16 %v61
  %v380 = vunpack.c.l.b16 %v62
  %v381 = vunpack.c.l.b16 %v63
  %v382 = vunpack.c.l.b16 %v64
  %v383 = vunpack.c.l.b16 %v65
  %v384 = vunpack.c.l.b16 %v66
  %v385 = vunpack.c.l.b16 %v67
  %v386 = vunpack.c.l.b16 %v68
  %v387 = vunpack.c.l.b16 %v69
  %v388 = vunpack.c.l.b16 %v70
  %v389 = vunpack.c.l.b16 %v71
  %v390 = vunpack.c.l.b16 %v72
  %v391 = vunpack.c.l.b16 %v73
  %v392 = vunpack.c.l.b16 %v74
  %v393 = vunpack.c.l.b16 %v75
  %v394 = vunpack.c.l.b16 %v76
  %v395 = vunpack.c.l.b16 %v77
  %v396 = vunpack.c.l.b16 %v78
  %v397 = vunpack.c.l.b16 %v79
  %v398 = vunpack.c.l.b16 %v80
  %v399 = vunpack.c.l.b16 %v81
  %v400 = vunpack.c.l.b16 %v82
  %v401 = vunpack.c.l.b16 %v83
  %v402 = vunpack.c.l.b16 %v84
  %v403 = vunpack.c.l.b16 %v85
  %v404 = vunpack.c.l.b16 %v86
  %v405 = vunpack.c.l.b16 %v87
  %v406 = vunpack.c.l.b16 %v88
  %v407 = vunpack.c.l.b16 %v89
  %v408 = vunpack.c.l.b16 %v90
  %v409 = vunpack.c.l.b16 %v91
  %v410 = vunpack.c.l.b16 %v92
  %v411 = vunpack.c.l.b16 %v93
  %v412 = vunpack.c.l.b16 %v94
  %v413 = vunpack.c.l.b16 %v95
  %v414 = vunpack.c.l.b16 %v96
  %v415 = vunpack.c.l.b16 %v97
  %v416 = vunpack.c.l.b16 %v98
  %v417 = vunpack.c.l.b16 %v99
  %v418 = vunpack.c.l.b16 %v100
  %v419 = vunpack.c.l.b16 %v101
  %v420 = vunpack.c.l.b16 %v102
  %v421 = vunpack.c.l.b16 %v103
  %v422 = vunpack.c.l.b16 %v104
  %v423 = vunpack.c.l.b16 %v105
  %v424 = vunpack.c.l.b16 %v106
  %v425 = vunpack.c.l.b16 %v107
  %v426 = vunpack.c.l.b16 %v108
  %v427 = vunpack.c.l.b16 %v109
  %v428 = vunpack.c.l.b16 %v110
  %v429 = vunpack.c.l.b16 %v111
  %v430 = vunpack.c.l.b16 %v112
  %v431 = vunpack.c.l.b16 %v113
  %v432 = vunpack.c.l.b16 %v114
  %v433 = vunpack.c.l.b16 %v115
  %v434 = vunpack.c.l.b16 %v116
  %v435 = vunpack.c.l.b16 %v117
  %v436 = vunpack.c.l.b16 %v118
  %v437 = vunpack.c.l.b16 %v119
  %v438 = vunpack.c.l.b16 %v120
  %v439 = vunpack.c.l.b16 %v121
  %v440 = vunpack.c.l.b16 %v122
  %v441 = vunpack.c.l.b16 %v123
  %v442 = vunpack.c.l.b16 %v124
  %v443 = vunpack.c.l.b16 %v125
  %v444 = vpack.c.b16 %v373, %v372
  %v445 = vpack.c.b16 %v375, %v374
  %v446 = vpack.c.b16 %v377, %v376
  %v447 = vpack.c.b16 %v379, %v378
  %v448 = vpack.c.b16 %v381, %v380
  %v449 = vpack.c.b16 %v383, %v382
  %v450 = vpack.c.b16 %v385, %v384
  %v451 = vpack.c.b16 %v387, %v386
  %v452 = vpack.c.b16 %v389, %v388
  %v453 = vpack.c.b16 %v391, %v390
  %v454 = vpack.c.b16 %v393, %v392
  %v455 = vpack.c.b16 %v395, %v394
  %v456 = vpack.c.b16 %v397, %v396
  %v457 = vpack.c.b16 %v399, %v398
  %v458 = vpack.c.b16 %v401, %v400
  %v459 = vpack.c.b16 %v403, %v402
  %v460 = vpack.c.b16 %v405, %v404
  %v461 = vpack.c.b16 %v407, %v406
  %v462 = vpack.c.b16 %v409, %v408
  %v463 = vpack.c.b16 %v411, %v410
  %v464 = vpack.c.b16 %v413, %v412
  %v465 = vpack.c.b16 %v415, %v414
  %v466 = vpack.c.b16 %v417, %v416
  %v467 = vpack.c.b16 %v419, %v418
  %v468 = vpack.c.b16 %v421, %v420
  %v469 = vpack.c.b16 %v423, %v422
  %v470 = vpack.c.b16 %v425, %v424
  %v471 = vpack.c.b16 %v427, %v426
  %v472 = vpack.c.b16 %v429, %v428
  %v473 = vpack.c.b16 %v431, %v430
  %v474 = vpack.c.b16 %v433, %v432
  %v475 = vpack.c.b16 %v435, %v434
  %v476 = vpack.c.b16 %v437, %v436
  %v477 = vpack.c.b16 %v439, %v438
  %v478 = vpack.c.b16 %v441, %v440
  %v479 = vpack.c.b16 %v443, %v442
  %vm516 = vcmask 523264
  %v518 = vsel %vm516, %v241, 0
  %v521 = vsel %vm516, %v246, 0
  %v524 = vsel %vm516, %v251, 0
  %v527 = vsel %vm516, %v256, 0
  %v530 = vsel %vm516, %v261, 0
  %v533 = vsel %vm516, %v266, 0
  %v536 = vsel %vm516, %v271, 0
  %538 = vmatprep.subr.bf16.mxu0 0
  %539 = vmatpush1.bf16.msra.mxu0 %v444
  %540 = vmatprep.subr.bf16.mxu0 0
  %541 = vmatpush1.bf16.msra.mxu0 %v445
  %542 = vmatprep.subr.bf16.mxu0 0
  %543 = vmatpush1.bf16.msra.mxu0 %v446
  %544 = vmatprep.subr.bf16.mxu0 0
  %545 = vmatpush1.bf16.msra.mxu0 %v447
  %546 = vmatprep.subr.bf16.mxu0 0
  %547 = vmatpush1.bf16.msra.mxu0 %v448
  %548 = vmatprep.subr.bf16.mxu0 0
  %549 = vmatpush1.bf16.msra.mxu0 %v449
  %550 = vmatprep.subr.bf16.mxu0 0
  %551 = vmatpush1.bf16.msra.mxu0 %v450
  %552 = vmatprep.subr.bf16.mxu0 0
  %553 = vmatpush1.bf16.msra.mxu0 %v451
  %554 = vmatprep.subr.bf16.mxu0 0
  %555 = vmatpush1.bf16.msra.mxu0 %v452
  %556 = vmatprep.subr.bf16.mxu0 0
  %557 = vmatpush1.bf16.msra.mxu0 %v453
  %558 = vmatprep.subr.bf16.mxu0 0
  %559 = vmatpush1.bf16.msra.mxu0 %v454
  %560 = vmatprep.subr.bf16.mxu0 0
  %561 = vmatpush1.bf16.msra.mxu0 %v455
  %562 = vmatprep.subr.bf16.mxu0 0
  %563 = vmatpush1.bf16.msra.mxu0 %v456
  %564 = vmatprep.subr.bf16.mxu0 0
  %565 = vmatpush1.bf16.msra.mxu0 %v457
  %566 = vmatprep.subr.bf16.mxu0 0
  %567 = vmatpush1.bf16.msra.mxu0 %v458
  %568 = vmatprep.subr.bf16.mxu0 0
  %569 = vmatpush1.bf16.msra.mxu0 %v459
  %570 = vmatprep.mubr.bf16.mxu0 %v238
  %571 = vmatmul.mubr.bf16.gmra.mrb[0].mxu0 %v237
  %v572 = vpop.f32.mrb[0].mxu0
  %v573 = vadd.f32 %v131, %v572
  %v574 = vpop.f32.mrb[0].mxu0
  %v575 = vpop.f32.mrb[0].mxu0
  %v576 = vadd.f32 %v131, %v575
  %v577 = vpop.f32.mrb[0].mxu0
  %578 = vmatprep.mubr.bf16.mxu0 %v243
  %579 = vmatmul.mubr.bf16.gmra.mrb[0].mxu0 %v242
  %v580 = vpop.f32.mrb[0].mxu0
  %v581 = vadd.f32 %v131, %v580
  %v582 = vpop.f32.mrb[0].mxu0
  %v583 = vpop.f32.mrb[0].mxu0
  %v584 = vadd.f32 %v131, %v583
  %v585 = vpop.f32.mrb[0].mxu0
  %586 = vmatprep.mubr.bf16.mxu0 %v248
  %587 = vmatmul.mubr.bf16.gmra.mrb[0].mxu0 %v247
  %v588 = vpop.f32.mrb[0].mxu0
  %v589 = vadd.f32 %v131, %v588
  %v590 = vpop.f32.mrb[0].mxu0
  %v591 = vpop.f32.mrb[0].mxu0
  %v592 = vadd.f32 %v131, %v591
  %v593 = vpop.f32.mrb[0].mxu0
  %594 = vmatprep.mubr.bf16.mxu0 %v253
  %595 = vmatmul.mubr.bf16.gmra.mrb[0].mxu0 %v252
  %v596 = vpop.f32.mrb[0].mxu0
  %v597 = vadd.f32 %v131, %v596
  %v598 = vpop.f32.mrb[0].mxu0
  %v599 = vpop.f32.mrb[0].mxu0
  %v600 = vadd.f32 %v131, %v599
  %v601 = vpop.f32.mrb[0].mxu0
  %602 = vmatprep.mubr.bf16.mxu0 %v258
  %603 = vmatmul.mubr.bf16.gmra.mrb[0].mxu0 %v257
  %v604 = vpop.f32.mrb[0].mxu0
  %v605 = vadd.f32 %v131, %v604
  %v606 = vpop.f32.mrb[0].mxu0
  %v607 = vpop.f32.mrb[0].mxu0
  %v608 = vadd.f32 %v131, %v607
  %v609 = vpop.f32.mrb[0].mxu0
  %610 = vmatprep.mubr.bf16.mxu0 %v263
  %611 = vmatmul.mubr.bf16.gmra.mrb[0].mxu0 %v262
  %v612 = vpop.f32.mrb[0].mxu0
  %v613 = vadd.f32 %v131, %v612
  %v614 = vpop.f32.mrb[0].mxu0
  %v615 = vpop.f32.mrb[0].mxu0
  %v616 = vadd.f32 %v131, %v615
  %v617 = vpop.f32.mrb[0].mxu0
  %618 = vmatprep.mubr.bf16.mxu0 %v268
  %619 = vmatmul.mubr.bf16.gmra.mrb[0].mxu0 %v267
  %v620 = vpop.f32.mrb[0].mxu0
  %v621 = vadd.f32 %v131, %v620
  %v622 = vpop.f32.mrb[0].mxu0
  %v623 = vpop.f32.mrb[0].mxu0
  %v624 = vpop.f32.mrb[0].mxu0
  %625 = vdwg.mxu0
  %626 = vmatprep.subr.bf16.mxu0 0
  %627 = vmatpush1.bf16.msra.mxu0 %v460
  %628 = vmatprep.subr.bf16.mxu0 0
  %629 = vmatpush1.bf16.msra.mxu0 %v461
  %630 = vmatprep.subr.bf16.mxu0 0
  %631 = vmatpush1.bf16.msra.mxu0 %v462
  %632 = vmatprep.subr.bf16.mxu0 0
  %633 = vmatpush1.bf16.msra.mxu0 %v463
  %634 = vmatprep.subr.bf16.mxu0 0
  %635 = vmatpush1.bf16.msra.mxu0 %v464
  %636 = vmatprep.subr.bf16.mxu0 0
  %637 = vmatpush1.bf16.msra.mxu0 %v465
  %638 = vmatprep.subr.bf16.mxu0 0
  %639 = vmatpush1.bf16.msra.mxu0 %v466
  %640 = vmatprep.subr.bf16.mxu0 0
  %641 = vmatpush1.bf16.msra.mxu0 %v467
  %642 = vmatprep.subr.bf16.mxu0 0
  %643 = vmatpush1.bf16.msra.mxu0 %v468
  %644 = vmatprep.subr.bf16.mxu0 0
  %645 = vmatpush1.bf16.msra.mxu0 %v469
  %646 = vmatprep.subr.bf16.mxu0 0
  %647 = vmatpush1.bf16.msra.mxu0 %v470
  %648 = vmatprep.subr.bf16.mxu0 0
  %649 = vmatpush1.bf16.msra.mxu0 %v471
  %650 = vmatprep.subr.bf16.mxu0 0
  %651 = vmatpush1.bf16.msra.mxu0 %v472
  %652 = vmatprep.subr.bf16.mxu0 0
  %653 = vmatpush1.bf16.msra.mxu0 %v473
  %654 = vmatprep.subr.bf16.mxu0 0
  %655 = vmatpush1.bf16.msra.mxu0 %v474
  %656 = vmatprep.subr.bf16.mxu0 0
  %657 = vmatpush1.bf16.msra.mxu0 %v475
  %658 = vmatprep.mubr.bf16.mxu0 %v240
  %659 = vmatmul.mubr.bf16.gmra.mrb[0].mxu0 %v239
  %v660 = vpop.f32.mrb[0].mxu0
  %v661 = vadd.f32 %v573, %v660
  %v662 = vpop.f32.mrb[0].mxu0
  %v663 = vpop.f32.mrb[0].mxu0
  %v664 = vadd.f32 %v576, %v663
  %v665 = vpop.f32.mrb[0].mxu0
  %666 = vmatprep.mubr.bf16.mxu0 %v245
  %667 = vmatmul.mubr.bf16.gmra.mrb[0].mxu0 %v244
  %v668 = vpop.f32.mrb[0].mxu0
  %v669 = vadd.f32 %v581, %v668
  %v670 = vpop.f32.mrb[0].mxu0
  %v671 = vpop.f32.mrb[0].mxu0
  %v672 = vadd.f32 %v584, %v671
  %v673 = vpop.f32.mrb[0].mxu0
  %674 = vmatprep.mubr.bf16.mxu0 %v250
  %675 = vmatmul.mubr.bf16.gmra.mrb[0].mxu0 %v249
  %v676 = vpop.f32.mrb[0].mxu0
  %v677 = vadd.f32 %v589, %v676
  %v678 = vpop.f32.mrb[0].mxu0
  %v679 = vpop.f32.mrb[0].mxu0
  %v680 = vadd.f32 %v592, %v679
  %v681 = vpop.f32.mrb[0].mxu0
  %682 = vmatprep.mubr.bf16.mxu0 %v255
  %683 = vmatmul.mubr.bf16.gmra.mrb[0].mxu0 %v254
  %v684 = vpop.f32.mrb[0].mxu0
  %v685 = vadd.f32 %v597, %v684
  %v686 = vpop.f32.mrb[0].mxu0
  %v687 = vpop.f32.mrb[0].mxu0
  %v688 = vadd.f32 %v600, %v687
  %v689 = vpop.f32.mrb[0].mxu0
  %690 = vmatprep.mubr.bf16.mxu0 %v260
  %691 = vmatmul.mubr.bf16.gmra.mrb[0].mxu0 %v259
  %v692 = vpop.f32.mrb[0].mxu0
  %v693 = vadd.f32 %v605, %v692
  %v694 = vpop.f32.mrb[0].mxu0
  %v695 = vpop.f32.mrb[0].mxu0
  %v696 = vadd.f32 %v608, %v695
  %v697 = vpop.f32.mrb[0].mxu0
  %698 = vmatprep.mubr.bf16.mxu0 %v265
  %699 = vmatmul.mubr.bf16.gmra.mrb[0].mxu0 %v264
  %v700 = vpop.f32.mrb[0].mxu0
  %v701 = vadd.f32 %v613, %v700
  %v702 = vpop.f32.mrb[0].mxu0
  %v703 = vpop.f32.mrb[0].mxu0
  %v704 = vadd.f32 %v616, %v703
  %v705 = vpop.f32.mrb[0].mxu0
  %706 = vmatprep.mubr.bf16.mxu0 %v270
  %707 = vmatmul.mubr.bf16.gmra.mrb[0].mxu0 %v269
  %v708 = vpop.f32.mrb[0].mxu0
  %v709 = vadd.f32 %v621, %v708
  %v710 = vpop.f32.mrb[0].mxu0
  %v711 = vpop.f32.mrb[0].mxu0
  %v712 = vpop.f32.mrb[0].mxu0
  %713 = vdwg.mxu0
  %714 = vmatprep.subr.bf16.mxu0 0
  %715 = vmatpush1.bf16.msra.mxu0 %v476
  %716 = vmatprep.subr.bf16.mxu0 0
  %717 = vmatpush1.bf16.msra.mxu0 %v477
  %718 = vmatprep.subr.bf16.mxu0 0
  %719 = vmatpush1.bf16.msra.mxu0 %v478
  %720 = vmatprep.subr.bf16.mxu0 0
  %721 = vmatpush1.bf16.msra.mxu0 %v479
  %722 = vmatprep.subr.bf16.mxu0 0
  %723 = vmatpush1.bf16.msra.mxu0 0
  %724 = vmatprep.subr.bf16.mxu0 0
  %725 = vmatpush1.bf16.msra.mxu0 0
  %726 = vmatprep.subr.bf16.mxu0 0
  %727 = vmatpush1.bf16.msra.mxu0 0
  %728 = vmatprep.subr.bf16.mxu0 0
  %729 = vmatpush1.bf16.msra.mxu0 0
  %730 = vmatprep.subr.bf16.mxu0 0
  %731 = vmatpush1.bf16.msra.mxu0 0
  %732 = vmatprep.subr.bf16.mxu0 0
  %733 = vmatpush1.bf16.msra.mxu0 0
  %734 = vmatprep.subr.bf16.mxu0 0
  %735 = vmatpush1.bf16.msra.mxu0 0
  %736 = vmatprep.subr.bf16.mxu0 0
  %737 = vmatpush1.bf16.msra.mxu0 0
  %738 = vmatprep.subr.bf16.mxu0 0
  %739 = vmatpush1.bf16.msra.mxu0 0
  %740 = vmatprep.subr.bf16.mxu0 0
  %741 = vmatpush1.bf16.msra.mxu0 0
  %742 = vmatprep.subr.bf16.mxu0 0
  %743 = vmatpush1.bf16.msra.mxu0 0
  %744 = vmatprep.subr.bf16.mxu0 0
  %745 = vmatpush1.bf16.msra.mxu0 0
  %746 = vmatprep.mubr.bf16.mxu0 0
  %747 = vmatmul.mubr.bf16.gmra.mrb[0].mxu0 %v518
  %v748 = vpop.f32.mrb[0].mxu0
  %v749 = vadd.f32 %v661, %v748
  %v750 = vpop.f32.mrb[0].mxu0
  %v751 = vpop.f32.mrb[0].mxu0
  %v752 = vadd.f32 %v664, %v751
  %v753 = vpop.f32.mrb[0].mxu0
  %754 = vmatprep.mubr.bf16.mxu0 0
  %755 = vmatmul.mubr.bf16.gmra.mrb[0].mxu0 %v521
  %v756 = vpop.f32.mrb[0].mxu0
  %v757 = vadd.f32 %v669, %v756
  %v758 = vpop.f32.mrb[0].mxu0
  %v759 = vpop.f32.mrb[0].mxu0
  %v760 = vadd.f32 %v672, %v759
  %v761 = vpop.f32.mrb[0].mxu0
  %762 = vmatprep.mubr.bf16.mxu0 0
  %763 = vmatmul.mubr.bf16.gmra.mrb[0].mxu0 %v524
  %v764 = vpop.f32.mrb[0].mxu0
  %v765 = vadd.f32 %v677, %v764
  %v766 = vpop.f32.mrb[0].mxu0
  %v767 = vpop.f32.mrb[0].mxu0
  %v768 = vadd.f32 %v680, %v767
  %v769 = vpop.f32.mrb[0].mxu0
  %770 = vmatprep.mubr.bf16.mxu0 0
  %771 = vmatmul.mubr.bf16.gmra.mrb[0].mxu0 %v527
  %v772 = vpop.f32.mrb[0].mxu0
  %v773 = vadd.f32 %v685, %v772
  %v774 = vpop.f32.mrb[0].mxu0
  %v775 = vpop.f32.mrb[0].mxu0
  %v776 = vadd.f32 %v688, %v775
  %v777 = vpop.f32.mrb[0].mxu0
  %778 = vmatprep.mubr.bf16.mxu0 0
  %779 = vmatmul.mubr.bf16.gmra.mrb[0].mxu0 %v530
  %v780 = vpop.f32.mrb[0].mxu0
  %v781 = vadd.f32 %v693, %v780
  %v782 = vpop.f32.mrb[0].mxu0
  %v783 = vpop.f32.mrb[0].mxu0
  %v784 = vadd.f32 %v696, %v783
  %v785 = vpop.f32.mrb[0].mxu0
  %786 = vmatprep.mubr.bf16.mxu0 0
  %787 = vmatmul.mubr.bf16.gmra.mrb[0].mxu0 %v533
  %v788 = vpop.f32.mrb[0].mxu0
  %v789 = vadd.f32 %v701, %v788
  %v790 = vpop.f32.mrb[0].mxu0
  %v791 = vpop.f32.mrb[0].mxu0
  %v792 = vadd.f32 %v704, %v791
  %v793 = vpop.f32.mrb[0].mxu0
  %794 = vmatprep.mubr.bf16.mxu0 0
  %795 = vmatmul.mubr.bf16.gmra.mrb[0].mxu0 %v536
  %v796 = vpop.f32.mrb[0].mxu0
  %v797 = vadd.f32 %v709, %v796
  %v798 = vpop.f32.mrb[0].mxu0
  %v799 = vpop.f32.mrb[0].mxu0
  %v800 = vpop.f32.mrb[0].mxu0
  %801 = vdwg.mxu0
  %v802 = vmax.f32 %v749, 0.0
  %v803 = vmax.f32 %v752, 0.0
  %v804 = vmax.f32 %v757, 0.0
  %v805 = vmax.f32 %v760, 0.0
  %v806 = vmax.f32 %v765, 0.0
  %v807 = vmax.f32 %v768, 0.0
  %v808 = vmax.f32 %v773, 0.0
  %v809 = vmax.f32 %v776, 0.0
  %v810 = vmax.f32 %v781, 0.0
  %v811 = vmax.f32 %v784, 0.0
  %v812 = vmax.f32 %v789, 0.0
  %v813 = vmax.f32 %v792, 0.0
  %v814 = vmax.f32 %v797, 0.0
  %v815 = vpack.c.bf16 %v803, %v802
  %v816 = vpack.c.bf16 %v805, %v804
  %v817 = vpack.c.bf16 %v807, %v806
  %v818 = vpack.c.bf16 %v809, %v808
  %v819 = vpack.c.bf16 %v811, %v810
  %v820 = vpack.c.bf16 %v813, %v812
  %v821 = vpack.c.bf16 %v814, %v814
  %v829 = vunpack.c.l.b16 %v815
  %v830 = vunpack.c.h.b16 %v815
  %v831 = vunpack.c.l.b16 %v816
  %v832 = vunpack.c.h.b16 %v816
  %v833 = vunpack.c.l.b16 %v817
  %v834 = vunpack.c.h.b16 %v817
  %v835 = vunpack.c.l.b16 %v818
  %v836 = vunpack.c.h.b16 %v818
  %v837 = vunpack.c.l.b16 %v819
  %v838 = vunpack.c.h.b16 %v819
  %v839 = vunpack.c.l.b16 %v820
  %v840 = vunpack.c.h.b16 %v820
  %v841 = vunpack.c.l.b16 %v821
  %v842 = vpack.c.b16 %v829, %v829
  %v843 = vpack.c.b16 %v830, %v830
  %v844 = vpack.c.b16 %v831, %v831
  %v845 = vpack.c.b16 %v832, %v832
  %v846 = vpack.c.b16 %v833, %v833
  %v847 = vpack.c.b16 %v834, %v834
  %v848 = vpack.c.b16 %v835, %v835
  %v849 = vpack.c.b16 %v836, %v836
  %v850 = vpack.c.b16 %v837, %v837
  %v851 = vpack.c.b16 %v838, %v838
  %v852 = vpack.c.b16 %v839, %v839
  %v853 = vpack.c.b16 %v840, %v840
  %v854 = vpack.c.b16 %v841, %v841
  %vm868 = vcmask 519168
  %869 = vst.msk [vmem:[%s3] sm:$0xf] %vm868, %v842
  %870 = vst.msk [vmem:[%s3 + $0x4] sm:$0xf] %vm868, %v843
  %871 = vst.msk [vmem:[%s3 + $0x8] sm:$0xf] %vm868, %v844
  %872 = vst.msk [vmem:[%s3 + $0xc] sm:$0xf] %vm868, %v845
  %873 = vst.msk [vmem:[%s3 + $0x10] sm:$0xf] %vm868, %v846
  %874 = vst.msk [vmem:[%s3 + $0x14] sm:$0xf] %vm868, %v847
  %875 = vst.msk [vmem:[%s3 + $0x18] sm:$0xf] %vm868, %v848
  %876 = vst.msk [vmem:[%s3 + $0x1c] sm:$0xf] %vm868, %v849
  %877 = vst.msk [vmem:[%s3 + $0x20] sm:$0xf] %vm868, %v850
  %878 = vst.msk [vmem:[%s3 + $0x24] sm:$0xf] %vm868, %v851
  %879 = vst.msk [vmem:[%s3 + $0x28] sm:$0xf] %vm868, %v852
  %880 = vst.msk [vmem:[%s3 + $0x2c] sm:$0xf] %vm868, %v853
  %vm881 = vcmask 516096
  %882 = vst.msk [vmem:[%s3 + $0x30] sm:$0x1] %vm881, %v854
  // Predicated region
  $region14: #{model_forward.6} parent=0 // pred_check
    _
  $region15: #{model_forward.6} parent=0 // pred_check_branch
    %884 = sbr.rel (0) target = $region17
  $region16: #{model_forward.6} parent=0 // pred_region
    _
  $region17: #{model_forward.6} parent=0 // pred_fallthru
    _
  // Predicated region
  $region18: #{model_forward.6} parent=0 // pred_check
    _
  $region19: #{model_forward.6} parent=0 // pred_check_branch
    %886 = sbr.rel (0) target = $region21
  $region20: #{model_forward.6} parent=0 // pred_region
    _
  $region21: #{model_forward.6} parent=0 // pred_fallthru
    _

// kernel: model_forward.7
$region0: #{model_forward.7}
  #allocation0 [shape = 'u32[]', space=smem, size = 0x4, offset = 0x4, fixed_abs, tag = 'smem constant byte address 0x4 - core index']
  #allocation1 [shape = 'u32[144,128]{1,0:T(1,128)}', space=vmem, size = 0x12000, scoped, tag = 'internal scratch']
  %s0 = inlined_call_operand.vmem [shape: bf16[2,3136], index: 0, kind: input, shape index: {}]
  %s1 = inlined_call_operand.vmem [shape: bf16[3136,128], index: 1, kind: input, shape index: {}]
  %s2 = inlined_call_operand.vmem [shape: f32[1,128], index: 2, kind: input, shape index: {}]
  %s3 = inlined_call_operand.vmem [shape: bf16[128,128], index: 3, kind: input, shape index: {}]
  %s4 = inlined_call_operand.vmem [shape: f32[1,128], index: 4, kind: input, shape index: {}]
  %s5 = inlined_call_operand.vmem [shape: f32[2,128], index: 5, kind: output, shape index: {}]
  %s6 = sld [smem:[#allocation0]]
  $region30: #{model_forward.7} parent=0
    _
  %s8 = ssub.s32 1, %s6
  %s9 = scalar_select 0, %s8, %s6
  // Predicated region
  $region2: #{model_forward.7} parent=0 // pred_check
    _
  $region3: #{model_forward.7} parent=0 // pred_check_branch
    %11 = sbr.rel (0) target = $region5
  $region4: #{model_forward.7} parent=0 // pred_region
    _
  $region5: #{model_forward.7} parent=0 // pred_fallthru
    _
  // Predicated region
  $region6: #{model_forward.7} parent=0 // pred_check
    _
  $region7: #{model_forward.7} parent=0 // pred_check_branch
    %13 = sbr.rel (0) target = $region9
  $region8: #{model_forward.7} parent=0 // pred_region
    _
  $region9: #{model_forward.7} parent=0 // pred_fallthru
    _
  // Predicated region
  $region10: #{model_forward.7} parent=0 // pred_check
    _
  $region11: #{model_forward.7} parent=0 // pred_check_branch
    %15 = sbr.rel (0) target = $region13
  $region12: #{model_forward.7} parent=0 // pred_region
    _
  $region13: #{model_forward.7} parent=0 // pred_fallthru
    _
  // Predicated region
  $region14: #{model_forward.7} parent=0 // pred_check
    _
  $region15: #{model_forward.7} parent=0 // pred_check_branch
    %17 = sbr.rel (0) target = $region17
  $region16: #{model_forward.7} parent=0 // pred_region
    _
  $region17: #{model_forward.7} parent=0 // pred_fallthru
    _
  // Predicated region
  $region18: #{model_forward.7} parent=0 // pred_check
    _
  $region19: #{model_forward.7} parent=0 // pred_check_branch
    %19 = sbr.rel (0) target = $region21
  $region20: #{model_forward.7} parent=0 // pred_region
    _
  $region21: #{model_forward.7} parent=0 // pred_fallthru
    _
  %v21 = vld [vmem:[%s0] sm:$0xff]
  %v22 = vld [vmem:[%s0 + $0x8] sm:$0xff]
  %v23 = vld [vmem:[%s0 + $0x10] sm:$0xff]
  %v24 = vld [vmem:[%s0 + $0x18] sm:$0x1]
  %v25 = vld [vmem:[%s1] sm:$0xf]
  %v26 = vld [vmem:[%s1 + $0x4] sm:$0xf]
  %v27 = vld [vmem:[%s1 + $0x8] sm:$0xf]
  %v28 = vld [vmem:[%s1 + $0xc] sm:$0xf]
  %v29 = vld [vmem:[%s1 + $0x10] sm:$0xf]
  %v30 = vld [vmem:[%s1 + $0x14] sm:$0xf]
  %v31 = vld [vmem:[%s1 + $0x18] sm:$0xf]
  %v32 = vld [vmem:[%s1 + $0x1c] sm:$0xf]
  %v33 = vld [vmem:[%s1 + $0x20] sm:$0xf]
  %v34 = vld [vmem:[%s1 + $0x24] sm:$0xf]
  %v35 = vld [vmem:[%s1 + $0x28] sm:$0xf]
  %v36 = vld [vmem:[%s1 + $0x2c] sm:$0xf]
  %v37 = vld [vmem:[%s1 + $0x30] sm:$0xf]
  %v38 = vld [vmem:[%s1 + $0x34] sm:$0xf]
  %v39 = vld [vmem:[%s1 + $0x38] sm:$0xf]
  %v40 = vld [vmem:[%s1 + $0x3c] sm:$0xf]
  %v41 = vld [vmem:[%s1 + $0x40] sm:$0xf]
  %v42 = vld [vmem:[%s1 + $0x44] sm:$0xf]
  %v43 = vld [vmem:[%s1 + $0x48] sm:$0xf]
  %v44 = vld [vmem:[%s1 + $0x4c] sm:$0xf]
  %v45 = vld [vmem:[%s1 + $0x50] sm:$0xf]
  %v46 = vld [vmem:[%s1 + $0x54] sm:$0xf]
  %v47 = vld [vmem:[%s1 + $0x58] sm:$0xf]
  %v48 = vld [vmem:[%s1 + $0x5c] sm:$0xf]
  %v49 = vld [vmem:[%s1 + $0x60] sm:$0xf]
  %v50 = vld [vmem:[%s1 + $0x64] sm:$0xf]
  %v51 = vld [vmem:[%s1 + $0x68] sm:$0xf]
  %v52 = vld [vmem:[%s1 + $0x6c] sm:$0xf]
  %v53 = vld [vmem:[%s1 + $0x70] sm:$0xf]
  %v54 = vld [vmem:[%s1 + $0x74] sm:$0xf]
  %v55 = vld [vmem:[%s1 + $0x78] sm:$0xf]
  %v56 = vld [vmem:[%s1 + $0x7c] sm:$0xf]
  %v57 = vld [vmem:[%s1 + $0x80] sm:$0xf]
  %v58 = vld [vmem:[%s1 + $0x84] sm:$0xf]
  %v59 = vld [vmem:[%s1 + $0x88] sm:$0xf]
  %v60 = vld [vmem:[%s1 + $0x8c] sm:$0xf]
  %v61 = vld [vmem:[%s1 + $0x90] sm:$0xf]
  %v62 = vld [vmem:[%s1 + $0x94] sm:$0xf]
  %v63 = vld [vmem:[%s1 + $0x98] sm:$0xf]
  %v64 = vld [vmem:[%s1 + $0x9c] sm:$0xf]
  %v65 = vld [vmem:[%s1 + $0xa0] sm:$0xf]
  %v66 = vld [vmem:[%s1 + $0xa4] sm:$0xf]
  %v67 = vld [vmem:[%s1 + $0xa8] sm:$0xf]
  %v68 = vld [vmem:[%s1 + $0xac] sm:$0xf]
  %v69 = vld [vmem:[%s1 + $0xb0] sm:$0xf]
  %v70 = vld [vmem:[%s1 + $0xb4] sm:$0xf]
  %v71 = vld [vmem:[%s1 + $0xb8] sm:$0xf]
  %v72 = vld [vmem:[%s1 + $0xbc] sm:$0xf]
  %v73 = vld [vmem:[%s1 + $0xc0] sm:$0xf]
  %v74 = vld [vmem:[%s1 + $0xc4] sm:$0xf]
  %v75 = vld [vmem:[%s1 + $0xc8] sm:$0xf]
  %v76 = vld [vmem:[%s1 + $0xcc] sm:$0xf]
  %v77 = vld [vmem:[%s1 + $0xd0] sm:$0xf]
  %v78 = vld [vmem:[%s1 + $0xd4] sm:$0xf]
  %v79 = vld [vmem:[%s1 + $0xd8] sm:$0xf]
  %v80 = vld [vmem:[%s1 + $0xdc] sm:$0xf]
  %v81 = vld [vmem:[%s1 + $0xe0] sm:$0xf]
  %v82 = vld [vmem:[%s1 + $0xe4] sm:$0xf]
  %v83 = vld [vmem:[%s1 + $0xe8] sm:$0xf]
  %v84 = vld [vmem:[%s1 + $0xec] sm:$0xf]
  %v85 = vld [vmem:[%s1 + $0xf0] sm:$0xf]
  %v86 = vld [vmem:[%s1 + $0xf4] sm:$0xf]
  %v87 = vld [vmem:[%s1 + $0xf8] sm:$0xf]
  %v88 = vld [vmem:[%s1 + $0xfc] sm:$0xf]
  %v89 = vld [vmem:[%s1 + $0x100] sm:$0xf]
  %v90 = vld [vmem:[%s1 + $0x104] sm:$0xf]
  %v91 = vld [vmem:[%s1 + $0x108] sm:$0xf]
  %v92 = vld [vmem:[%s1 + $0x10c] sm:$0xf]
  %v93 = vld [vmem:[%s1 + $0x110] sm:$0xf]
  %v94 = vld [vmem:[%s1 + $0x114] sm:$0xf]
  %v95 = vld [vmem:[%s1 + $0x118] sm:$0xf]
  %v96 = vld [vmem:[%s1 + $0x11c] sm:$0xf]
  %v97 = vld [vmem:[%s1 + $0x120] sm:$0xf]
  %v98 = vld [vmem:[%s1 + $0x124] sm:$0xf]
  %v99 = vld [vmem:[%s1 + $0x128] sm:$0xf]
  %v100 = vld [vmem:[%s1 + $0x12c] sm:$0xf]
  %v101 = vld [vmem:[%s1 + $0x130] sm:$0xf]
  %v102 = vld [vmem:[%s1 + $0x134] sm:$0xf]
  %v103 = vld [vmem:[%s1 + $0x138] sm:$0xf]
  %v104 = vld [vmem:[%s1 + $0x13c] sm:$0xf]
  %v105 = vld [vmem:[%s1 + $0x140] sm:$0xf]
  %v106 = vld [vmem:[%s1 + $0x144] sm:$0xf]
  %v107 = vld [vmem:[%s1 + $0x148] sm:$0xf]
  %v108 = vld [vmem:[%s1 + $0x14c] sm:$0xf]
  %v109 = vld [vmem:[%s1 + $0x150] sm:$0xf]
  %v110 = vld [vmem:[%s1 + $0x154] sm:$0xf]
  %v111 = vld [vmem:[%s1 + $0x158] sm:$0xf]
  %v112 = vld [vmem:[%s1 + $0x15c] sm:$0xf]
  %v113 = vld [vmem:[%s1 + $0x160] sm:$0xf]
  %v114 = vld [vmem:[%s1 + $0x164] sm:$0xf]
  %v115 = vld [vmem:[%s1 + $0x168] sm:$0xf]
  %v116 = vld [vmem:[%s1 + $0x16c] sm:$0xf]
  %v117 = vld [vmem:[%s1 + $0x170] sm:$0xf]
  %v118 = vld [vmem:[%s1 + $0x174] sm:$0xf]
  %v119 = vld [vmem:[%s1 + $0x178] sm:$0xf]
  %v120 = vld [vmem:[%s1 + $0x17c] sm:$0xf]
  %v121 = vld [vmem:[%s1 + $0x180] sm:$0xf]
  %v122 = vld [vmem:[%s1 + $0x184] sm:$0xf]
  %v123 = vld [vmem:[%s1 + $0x188] sm:$0xf]
  %v124 = vld [vmem:[%s1 + $0x18c] sm:$0xf]
  %v125 = vld [vmem:[%s1 + $0x190] sm:$0xf]
  %v126 = vld [vmem:[%s1 + $0x194] sm:$0xf]
  %v127 = vld [vmem:[%s1 + $0x198] sm:$0xf]
  %v128 = vld [vmem:[%s1 + $0x19c] sm:$0xf]
  %v129 = vld [vmem:[%s1 + $0x1a0] sm:$0xf]
  %v130 = vld [vmem:[%s1 + $0x1a4] sm:$0xf]
  %v131 = vld [vmem:[%s1 + $0x1a8] sm:$0xf]
  %v132 = vld [vmem:[%s1 + $0x1ac] sm:$0xf]
  %v133 = vld [vmem:[%s1 + $0x1b0] sm:$0xf]
  %v134 = vld [vmem:[%s1 + $0x1b4] sm:$0xf]
  %v135 = vld [vmem:[%s1 + $0x1b8] sm:$0xf]
  %v136 = vld [vmem:[%s1 + $0x1bc] sm:$0xf]
  %v137 = vld [vmem:[%s1 + $0x1c0] sm:$0xf]
  %v138 = vld [vmem:[%s1 + $0x1c4] sm:$0xf]
  %v139 = vld [vmem:[%s1 + $0x1c8] sm:$0xf]
  %v140 = vld [vmem:[%s1 + $0x1cc] sm:$0xf]
  %v141 = vld [vmem:[%s1 + $0x1d0] sm:$0xf]
  %v142 = vld [vmem:[%s1 + $0x1d4] sm:$0xf]
  %v143 = vld [vmem:[%s1 + $0x1d8] sm:$0xf]
  %v144 = vld [vmem:[%s1 + $0x1dc] sm:$0xf]
  %v145 = vld [vmem:[%s1 + $0x1e0] sm:$0xf]
  %v146 = vld [vmem:[%s1 + $0x1e4] sm:$0xf]
  %v147 = vld [vmem:[%s1 + $0x1e8] sm:$0xf]
  %v148 = vld [vmem:[%s1 + $0x1ec] sm:$0xf]
  %v149 = vld [vmem:[%s1 + $0x1f0] sm:$0xf]
  %v150 = vld [vmem:[%s1 + $0x1f4] sm:$0xf]
  %v151 = vld [vmem:[%s1 + $0x1f8] sm:$0xf]
  %v152 = vld [vmem:[%s1 + $0x1fc] sm:$0xf]
  %v153 = vld [vmem:[%s1 + $0x200] sm:$0xf]
  %v154 = vld [vmem:[%s1 + $0x204] sm:$0xf]
  %v155 = vld [vmem:[%s1 + $0x208] sm:$0xf]
  %v156 = vld [vmem:[%s1 + $0x20c] sm:$0xf]
  %v157 = vld [vmem:[%s1 + $0x210] sm:$0xf]
  %v158 = vld [vmem:[%s1 + $0x214] sm:$0xf]
  %v159 = vld [vmem:[%s1 + $0x218] sm:$0xf]
  %v160 = vld [vmem:[%s1 + $0x21c] sm:$0xf]
  %v161 = vld [vmem:[%s1 + $0x220] sm:$0xf]
  %v162 = vld [vmem:[%s1 + $0x224] sm:$0xf]
  %v163 = vld [vmem:[%s1 + $0x228] sm:$0xf]
  %v164 = vld [vmem:[%s1 + $0x22c] sm:$0xf]
  %v165 = vld [vmem:[%s1 + $0x230] sm:$0xf]
  %v166 = vld [vmem:[%s1 + $0x234] sm:$0xf]
  %v167 = vld [vmem:[%s1 + $0x238] sm:$0xf]
  %v168 = vld [vmem:[%s1 + $0x23c] sm:$0xf]
  %v169 = vld [vmem:[%s1 + $0x240] sm:$0xf]
  %v170 = vld [vmem:[%s1 + $0x244] sm:$0xf]
  %v171 = vld [vmem:[%s1 + $0x248] sm:$0xf]
  %v172 = vld [vmem:[%s1 + $0x24c] sm:$0xf]
  %v173 = vld [vmem:[%s1 + $0x250] sm:$0xf]
  %v174 = vld [vmem:[%s1 + $0x254] sm:$0xf]
  %v175 = vld [vmem:[%s1 + $0x258] sm:$0xf]
  %v176 = vld [vmem:[%s1 + $0x25c] sm:$0xf]
  %v177 = vld [vmem:[%s1 + $0x260] sm:$0xf]
  %v178 = vld [vmem:[%s1 + $0x264] sm:$0xf]
  %v179 = vld [vmem:[%s1 + $0x268] sm:$0xf]
  %v180 = vld [vmem:[%s1 + $0x26c] sm:$0xf]
  %v181 = vld [vmem:[%s1 + $0x270] sm:$0xf]
  %v182 = vld [vmem:[%s1 + $0x274] sm:$0xf]
  %v183 = vld [vmem:[%s1 + $0x278] sm:$0xf]
  %v184 = vld [vmem:[%s1 + $0x27c] sm:$0xf]
  %v185 = vld [vmem:[%s1 + $0x280] sm:$0xf]
  %v186 = vld [vmem:[%s1 + $0x284] sm:$0xf]
  %v187 = vld [vmem:[%s1 + $0x288] sm:$0xf]
  %v188 = vld [vmem:[%s1 + $0x28c] sm:$0xf]
  %v189 = vld [vmem:[%s1 + $0x290] sm:$0xf]
  %v190 = vld [vmem:[%s1 + $0x294] sm:$0xf]
  %v191 = vld [vmem:[%s1 + $0x298] sm:$0xf]
  %v192 = vld [vmem:[%s1 + $0x29c] sm:$0xf]
  %v193 = vld [vmem:[%s1 + $0x2a0] sm:$0xf]
  %v194 = vld [vmem:[%s1 + $0x2a4] sm:$0xf]
  %v195 = vld [vmem:[%s1 + $0x2a8] sm:$0xf]
  %v196 = vld [vmem:[%s1 + $0x2ac] sm:$0xf]
  %v197 = vld [vmem:[%s1 + $0x2b0] sm:$0xf]
  %v198 = vld [vmem:[%s1 + $0x2b4] sm:$0xf]
  %v199 = vld [vmem:[%s1 + $0x2b8] sm:$0xf]
  %v200 = vld [vmem:[%s1 + $0x2bc] sm:$0xf]
  %v201 = vld [vmem:[%s1 + $0x2c0] sm:$0xf]
  %v202 = vld [vmem:[%s1 + $0x2c4] sm:$0xf]
  %v203 = vld [vmem:[%s1 + $0x2c8] sm:$0xf]
  %v204 = vld [vmem:[%s1 + $0x2cc] sm:$0xf]
  %v205 = vld [vmem:[%s1 + $0x2d0] sm:$0xf]
  %v206 = vld [vmem:[%s1 + $0x2d4] sm:$0xf]
  %v207 = vld [vmem:[%s1 + $0x2d8] sm:$0xf]
  %v208 = vld [vmem:[%s1 + $0x2dc] sm:$0xf]
  %v209 = vld [vmem:[%s1 + $0x2e0] sm:$0xf]
  %v210 = vld [vmem:[%s1 + $0x2e4] sm:$0xf]
  %v211 = vld [vmem:[%s1 + $0x2e8] sm:$0xf]
  %v212 = vld [vmem:[%s1 + $0x2ec] sm:$0xf]
  %v213 = vld [vmem:[%s1 + $0x2f0] sm:$0xf]
  %v214 = vld [vmem:[%s1 + $0x2f4] sm:$0xf]
  %v215 = vld [vmem:[%s1 + $0x2f8] sm:$0xf]
  %v216 = vld [vmem:[%s1 + $0x2fc] sm:$0xf]
  %v217 = vld [vmem:[%s1 + $0x300] sm:$0xf]
  %v218 = vld [vmem:[%s1 + $0x304] sm:$0xf]
  %v219 = vld [vmem:[%s1 + $0x308] sm:$0xf]
  %v220 = vld [vmem:[%s1 + $0x30c] sm:$0xf]
  %v221 = vld [vmem:[%s1 + $0x310] sm:$0xf]
  %v222 = vld [vmem:[%s1 + $0x314] sm:$0xf]
  %v223 = vld [vmem:[%s1 + $0x318] sm:$0xf]
  %v224 = vld [vmem:[%s1 + $0x31c] sm:$0xf]
  %v225 = vld [vmem:[%s1 + $0x320] sm:$0xf]
  %v226 = vld [vmem:[%s1 + $0x324] sm:$0xf]
  %v227 = vld [vmem:[%s1 + $0x328] sm:$0xf]
  %v228 = vld [vmem:[%s1 + $0x32c] sm:$0xf]
  %v229 = vld [vmem:[%s1 + $0x330] sm:$0xf]
  %v230 = vld [vmem:[%s1 + $0x334] sm:$0xf]
  %v231 = vld [vmem:[%s1 + $0x338] sm:$0xf]
  %v232 = vld [vmem:[%s1 + $0x33c] sm:$0xf]
  %v233 = vld [vmem:[%s1 + $0x340] sm:$0xf]
  %v234 = vld [vmem:[%s1 + $0x344] sm:$0xf]
  %v235 = vld [vmem:[%s1 + $0x348] sm:$0xf]
  %v236 = vld [vmem:[%s1 + $0x34c] sm:$0xf]
  %v237 = vld [vmem:[%s1 + $0x350] sm:$0xf]
  %v238 = vld [vmem:[%s1 + $0x354] sm:$0xf]
  %v239 = vld [vmem:[%s1 + $0x358] sm:$0xf]
  %v240 = vld [vmem:[%s1 + $0x35c] sm:$0xf]
  %v241 = vld [vmem:[%s1 + $0x360] sm:$0xf]
  %v242 = vld [vmem:[%s1 + $0x364] sm:$0xf]
  %v243 = vld [vmem:[%s1 + $0x368] sm:$0xf]
  %v244 = vld [vmem:[%s1 + $0x36c] sm:$0xf]
  %v245 = vld [vmem:[%s1 + $0x370] sm:$0xf]
  %v246 = vld [vmem:[%s1 + $0x374] sm:$0xf]
  %v247 = vld [vmem:[%s1 + $0x378] sm:$0xf]
  %v248 = vld [vmem:[%s1 + $0x37c] sm:$0xf]
  %v249 = vld [vmem:[%s1 + $0x380] sm:$0xf]
  %v250 = vld [vmem:[%s1 + $0x384] sm:$0xf]
  %v251 = vld [vmem:[%s1 + $0x388] sm:$0xf]
  %v252 = vld [vmem:[%s1 + $0x38c] sm:$0xf]
  %v253 = vld [vmem:[%s1 + $0x390] sm:$0xf]
  %v254 = vld [vmem:[%s1 + $0x394] sm:$0xf]
  %v255 = vld [vmem:[%s1 + $0x398] sm:$0xf]
  %v256 = vld [vmem:[%s1 + $0x39c] sm:$0xf]
  %v257 = vld [vmem:[%s1 + $0x3a0] sm:$0xf]
  %v258 = vld [vmem:[%s1 + $0x3a4] sm:$0xf]
  %v259 = vld [vmem:[%s1 + $0x3a8] sm:$0xf]
  %v260 = vld [vmem:[%s1 + $0x3ac] sm:$0xf]
  %v261 = vld [vmem:[%s1 + $0x3b0] sm:$0xf]
  %v262 = vld [vmem:[%s1 + $0x3b4] sm:$0xf]
  %v263 = vld [vmem:[%s1 + $0x3b8] sm:$0xf]
  %v264 = vld [vmem:[%s1 + $0x3bc] sm:$0xf]
  %v265 = vld [vmem:[%s1 + $0x3c0] sm:$0xf]
  %v266 = vld [vmem:[%s1 + $0x3c4] sm:$0xf]
  %v267 = vld [vmem:[%s1 + $0x3c8] sm:$0xf]
  %v268 = vld [vmem:[%s1 + $0x3cc] sm:$0xf]
  %v269 = vld [vmem:[%s1 + $0x3d0] sm:$0xf]
  %v270 = vld [vmem:[%s1 + $0x3d4] sm:$0xf]
  %v271 = vld [vmem:[%s1 + $0x3d8] sm:$0xf]
  %v272 = vld [vmem:[%s1 + $0x3dc] sm:$0xf]
  %v273 = vld [vmem:[%s1 + $0x3e0] sm:$0xf]
  %v274 = vld [vmem:[%s1 + $0x3e4] sm:$0xf]
  %v275 = vld [vmem:[%s1 + $0x3e8] sm:$0xf]
  %v276 = vld [vmem:[%s1 + $0x3ec] sm:$0xf]
  %v277 = vld [vmem:[%s1 + $0x3f0] sm:$0xf]
  %v278 = vld [vmem:[%s1 + $0x3f4] sm:$0xf]
  %v279 = vld [vmem:[%s1 + $0x3f8] sm:$0xf]
  %v280 = vld [vmem:[%s1 + $0x3fc] sm:$0xf]
  %v281 = vld [vmem:[%s1 + $0x400] sm:$0xf]
  %v282 = vld [vmem:[%s1 + $0x404] sm:$0xf]
  %v283 = vld [vmem:[%s1 + $0x408] sm:$0xf]
  %v284 = vld [vmem:[%s1 + $0x40c] sm:$0xf]
  %v285 = vld [vmem:[%s1 + $0x410] sm:$0xf]
  %v286 = vld [vmem:[%s1 + $0x414] sm:$0xf]
  %v287 = vld [vmem:[%s1 + $0x418] sm:$0xf]
  %v288 = vld [vmem:[%s1 + $0x41c] sm:$0xf]
  %v289 = vld [vmem:[%s1 + $0x420] sm:$0xf]
  %v290 = vld [vmem:[%s1 + $0x424] sm:$0xf]
  %v291 = vld [vmem:[%s1 + $0x428] sm:$0xf]
  %v292 = vld [vmem:[%s1 + $0x42c] sm:$0xf]
  %v293 = vld [vmem:[%s1 + $0x430] sm:$0xf]
  %v294 = vld [vmem:[%s1 + $0x434] sm:$0xf]
  %v295 = vld [vmem:[%s1 + $0x438] sm:$0xf]
  %v296 = vld [vmem:[%s1 + $0x43c] sm:$0xf]
  %v297 = vld [vmem:[%s1 + $0x440] sm:$0xf]
  %v298 = vld [vmem:[%s1 + $0x444] sm:$0xf]
  %v299 = vld [vmem:[%s1 + $0x448] sm:$0xf]
  %v300 = vld [vmem:[%s1 + $0x44c] sm:$0xf]
  %v301 = vld [vmem:[%s1 + $0x450] sm:$0xf]
  %v302 = vld [vmem:[%s1 + $0x454] sm:$0xf]
  %v303 = vld [vmem:[%s1 + $0x458] sm:$0xf]
  %v304 = vld [vmem:[%s1 + $0x45c] sm:$0xf]
  %v305 = vld [vmem:[%s1 + $0x460] sm:$0xf]
  %v306 = vld [vmem:[%s1 + $0x464] sm:$0xf]
  %v307 = vld [vmem:[%s1 + $0x468] sm:$0xf]
  %v308 = vld [vmem:[%s1 + $0x46c] sm:$0xf]
  %v309 = vld [vmem:[%s1 + $0x470] sm:$0xf]
  %v310 = vld [vmem:[%s1 + $0x474] sm:$0xf]
  %v311 = vld [vmem:[%s1 + $0x478] sm:$0xf]
  %v312 = vld [vmem:[%s1 + $0x47c] sm:$0xf]
  %v313 = vld [vmem:[%s1 + $0x480] sm:$0xf]
  %v314 = vld [vmem:[%s1 + $0x484] sm:$0xf]
  %v315 = vld [vmem:[%s1 + $0x488] sm:$0xf]
  %v316 = vld [vmem:[%s1 + $0x48c] sm:$0xf]
  %v317 = vld [vmem:[%s1 + $0x490] sm:$0xf]
  %v318 = vld [vmem:[%s1 + $0x494] sm:$0xf]
  %v319 = vld [vmem:[%s1 + $0x498] sm:$0xf]
  %v320 = vld [vmem:[%s1 + $0x49c] sm:$0xf]
  %v321 = vld [vmem:[%s1 + $0x4a0] sm:$0xf]
  %v322 = vld [vmem:[%s1 + $0x4a4] sm:$0xf]
  %v323 = vld [vmem:[%s1 + $0x4a8] sm:$0xf]
  %v324 = vld [vmem:[%s1 + $0x4ac] sm:$0xf]
  %v325 = vld [vmem:[%s1 + $0x4b0] sm:$0xf]
  %v326 = vld [vmem:[%s1 + $0x4b4] sm:$0xf]
  %v327 = vld [vmem:[%s1 + $0x4b8] sm:$0xf]
  %v328 = vld [vmem:[%s1 + $0x4bc] sm:$0xf]
  %v329 = vld [vmem:[%s1 + $0x4c0] sm:$0xf]
  %v330 = vld [vmem:[%s1 + $0x4c4] sm:$0xf]
  %v331 = vld [vmem:[%s1 + $0x4c8] sm:$0xf]
  %v332 = vld [vmem:[%s1 + $0x4cc] sm:$0xf]
  %v333 = vld [vmem:[%s1 + $0x4d0] sm:$0xf]
  %v334 = vld [vmem:[%s1 + $0x4d4] sm:$0xf]
  %v335 = vld [vmem:[%s1 + $0x4d8] sm:$0xf]
  %v336 = vld [vmem:[%s1 + $0x4dc] sm:$0xf]
  %v337 = vld [vmem:[%s1 + $0x4e0] sm:$0xf]
  %v338 = vld [vmem:[%s1 + $0x4e4] sm:$0xf]
  %v339 = vld [vmem:[%s1 + $0x4e8] sm:$0xf]
  %v340 = vld [vmem:[%s1 + $0x4ec] sm:$0xf]
  %v341 = vld [vmem:[%s1 + $0x4f0] sm:$0xf]
  %v342 = vld [vmem:[%s1 + $0x4f4] sm:$0xf]
  %v343 = vld [vmem:[%s1 + $0x4f8] sm:$0xf]
  %v344 = vld [vmem:[%s1 + $0x4fc] sm:$0xf]
  %v345 = vld [vmem:[%s1 + $0x500] sm:$0xf]
  %v346 = vld [vmem:[%s1 + $0x504] sm:$0xf]
  %v347 = vld [vmem:[%s1 + $0x508] sm:$0xf]
  %v348 = vld [vmem:[%s1 + $0x50c] sm:$0xf]
  %v349 = vld [vmem:[%s1 + $0x510] sm:$0xf]
  %v350 = vld [vmem:[%s1 + $0x514] sm:$0xf]
  %v351 = vld [vmem:[%s1 + $0x518] sm:$0xf]
  %v352 = vld [vmem:[%s1 + $0x51c] sm:$0xf]
  %v353 = vld [vmem:[%s1 + $0x520] sm:$0xf]
  %v354 = vld [vmem:[%s1 + $0x524] sm:$0xf]
  %v355 = vld [vmem:[%s1 + $0x528] sm:$0xf]
  %v356 = vld [vmem:[%s1 + $0x52c] sm:$0xf]
  %v357 = vld [vmem:[%s1 + $0x530] sm:$0xf]
  %v358 = vld [vmem:[%s1 + $0x534] sm:$0xf]
  %v359 = vld [vmem:[%s1 + $0x538] sm:$0xf]
  %v360 = vld [vmem:[%s1 + $0x53c] sm:$0xf]
  %v361 = vld [vmem:[%s1 + $0x540] sm:$0xf]
  %v362 = vld [vmem:[%s1 + $0x544] sm:$0xf]
  %v363 = vld [vmem:[%s1 + $0x548] sm:$0xf]
  %v364 = vld [vmem:[%s1 + $0x54c] sm:$0xf]
  %v365 = vld [vmem:[%s1 + $0x550] sm:$0xf]
  %v366 = vld [vmem:[%s1 + $0x554] sm:$0xf]
  %v367 = vld [vmem:[%s1 + $0x558] sm:$0xf]
  %v368 = vld [vmem:[%s1 + $0x55c] sm:$0xf]
  %v369 = vld [vmem:[%s1 + $0x560] sm:$0xf]
  %v370 = vld [vmem:[%s1 + $0x564] sm:$0xf]
  %v371 = vld [vmem:[%s1 + $0x568] sm:$0xf]
  %v372 = vld [vmem:[%s1 + $0x56c] sm:$0xf]
  %v373 = vld [vmem:[%s1 + $0x570] sm:$0xf]
  %v374 = vld [vmem:[%s1 + $0x574] sm:$0xf]
  %v375 = vld [vmem:[%s1 + $0x578] sm:$0xf]
  %v376 = vld [vmem:[%s1 + $0x57c] sm:$0xf]
  %v377 = vld [vmem:[%s1 + $0x580] sm:$0xf]
  %v378 = vld [vmem:[%s1 + $0x584] sm:$0xf]
  %v379 = vld [vmem:[%s1 + $0x588] sm:$0xf]
  %v380 = vld [vmem:[%s1 + $0x58c] sm:$0xf]
  %v381 = vld [vmem:[%s1 + $0x590] sm:$0xf]
  %v382 = vld [vmem:[%s1 + $0x594] sm:$0xf]
  %v383 = vld [vmem:[%s1 + $0x598] sm:$0xf]
  %v384 = vld [vmem:[%s1 + $0x59c] sm:$0xf]
  %v385 = vld [vmem:[%s1 + $0x5a0] sm:$0xf]
  %v386 = vld [vmem:[%s1 + $0x5a4] sm:$0xf]
  %v387 = vld [vmem:[%s1 + $0x5a8] sm:$0xf]
  %v388 = vld [vmem:[%s1 + $0x5ac] sm:$0xf]
  %v389 = vld [vmem:[%s1 + $0x5b0] sm:$0xf]
  %v390 = vld [vmem:[%s1 + $0x5b4] sm:$0xf]
  %v391 = vld [vmem:[%s1 + $0x5b8] sm:$0xf]
  %v392 = vld [vmem:[%s1 + $0x5bc] sm:$0xf]
  %v393 = vld [vmem:[%s1 + $0x5c0] sm:$0xf]
  %v394 = vld [vmem:[%s1 + $0x5c4] sm:$0xf]
  %v395 = vld [vmem:[%s1 + $0x5c8] sm:$0xf]
  %v396 = vld [vmem:[%s1 + $0x5cc] sm:$0xf]
  %v397 = vld [vmem:[%s1 + $0x5d0] sm:$0xf]
  %v398 = vld [vmem:[%s1 + $0x5d4] sm:$0xf]
  %v399 = vld [vmem:[%s1 + $0x5d8] sm:$0xf]
  %v400 = vld [vmem:[%s1 + $0x5dc] sm:$0xf]
  %v401 = vld [vmem:[%s1 + $0x5e0] sm:$0xf]
  %v402 = vld [vmem:[%s1 + $0x5e4] sm:$0xf]
  %v403 = vld [vmem:[%s1 + $0x5e8] sm:$0xf]
  %v404 = vld [vmem:[%s1 + $0x5ec] sm:$0xf]
  %v405 = vld [vmem:[%s1 + $0x5f0] sm:$0xf]
  %v406 = vld [vmem:[%s1 + $0x5f4] sm:$0xf]
  %v407 = vld [vmem:[%s1 + $0x5f8] sm:$0xf]
  %v408 = vld [vmem:[%s1 + $0x5fc] sm:$0xf]
  %v409 = vld [vmem:[%s1 + $0x600] sm:$0xf]
  %v410 = vld [vmem:[%s1 + $0x604] sm:$0xf]
  %v411 = vld [vmem:[%s1 + $0x608] sm:$0xf]
  %v412 = vld [vmem:[%s1 + $0x60c] sm:$0xf]
  %v413 = vld [vmem:[%s1 + $0x610] sm:$0xf]
  %v414 = vld [vmem:[%s1 + $0x614] sm:$0xf]
  %v415 = vld [vmem:[%s1 + $0x618] sm:$0xf]
  %v416 = vld [vmem:[%s1 + $0x61c] sm:$0xf]
  %v417 = vld [vmem:[%s2] sm:$0x1]
  %v419 = vlaneseq
  %v420 = vshrl.u32 %v419, 7
  %v421 = vsub.s32 0, %v420
  %v422 = vrot.slane %v417, %v421
  %v428 = vcombine.high %v21, %v21
  %v430 = vunpack.c.l.s4 1966171168
  %v431 = vunpack.c.0.s8 %v430
  %v432 = vlaneseq
  %v433 = vshrl.u32 %v432, 7
  %v434 = vsub.s32 %v431, %v433
  %v435 = vrot.slane %v21, %v434
  %v437 = vunpack.c.l.s4 1966171168
  %v438 = vunpack.c.0.s8 %v437
  %v439 = vlaneseq
  %v440 = vshrl.u32 %v439, 7
  %v441 = vsub.s32 %v438, %v440
  %v442 = vrot.slane %v428, %v441
  %v443 = vcombine.high %v435, %v435
  %v444 = vcombine.high %v442, %v442
  %v446 = vunpack.c.l.s4 1966171168
  %v447 = vunpack.c.0.s8 %v446
  %v448 = vlaneseq
  %v449 = vshrl.u32 %v448, 7
  %v450 = vsub.s32 %v447, %v449
  %v451 = vrot.slane %v435, %v450
  %v453 = vunpack.c.l.s4 1966171168
  %v454 = vunpack.c.0.s8 %v453
  %v455 = vlaneseq
  %v456 = vshrl.u32 %v455, 7
  %v457 = vsub.s32 %v454, %v456
  %v458 = vrot.slane %v442, %v457
  %v460 = vunpack.c.l.s4 1966171168
  %v461 = vunpack.c.0.s8 %v460
  %v462 = vlaneseq
  %v463 = vshrl.u32 %v462, 7
  %v464 = vsub.s32 %v461, %v463
  %v465 = vrot.slane %v443, %v464
  %v467 = vunpack.c.l.s4 1966171168
  %v468 = vunpack.c.0.s8 %v467
  %v469 = vlaneseq
  %v470 = vshrl.u32 %v469, 7
  %v471 = vsub.s32 %v468, %v470
  %v472 = vrot.slane %v444, %v471
  %v473 = vcombine.high %v451, %v451
  %v474 = vcombine.high %v458, %v458
  %v475 = vcombine.high %v465, %v465
  %v476 = vcombine.high %v472, %v472
  %v477 = vcombine.high %v22, %v22
  %v479 = vunpack.c.l.s4 1966171168
  %v480 = vunpack.c.0.s8 %v479
  %v481 = vlaneseq
  %v482 = vshrl.u32 %v481, 7
  %v483 = vsub.s32 %v480, %v482
  %v484 = vrot.slane %v22, %v483
  %v486 = vunpack.c.l.s4 1966171168
  %v487 = vunpack.c.0.s8 %v486
  %v488 = vlaneseq
  %v489 = vshrl.u32 %v488, 7
  %v490 = vsub.s32 %v487, %v489
  %v491 = vrot.slane %v477, %v490
  %v492 = vcombine.high %v484, %v484
  %v493 = vcombine.high %v491, %v491
  %v495 = vunpack.c.l.s4 1966171168
  %v496 = vunpack.c.0.s8 %v495
  %v497 = vlaneseq
  %v498 = vshrl.u32 %v497, 7
  %v499 = vsub.s32 %v496, %v498
  %v500 = vrot.slane %v484, %v499
  %v502 = vunpack.c.l.s4 1966171168
  %v503 = vunpack.c.0.s8 %v502
  %v504 = vlaneseq
  %v505 = vshrl.u32 %v504, 7
  %v506 = vsub.s32 %v503, %v505
  %v507 = vrot.slane %v491, %v506
  %v509 = vunpack.c.l.s4 1966171168
  %v510 = vunpack.c.0.s8 %v509
  %v511 = vlaneseq
  %v512 = vshrl.u32 %v511, 7
  %v513 = vsub.s32 %v510, %v512
  %v514 = vrot.slane %v492, %v513
  %v516 = vunpack.c.l.s4 1966171168
  %v517 = vunpack.c.0.s8 %v516
  %v518 = vlaneseq
  %v519 = vshrl.u32 %v518, 7
  %v520 = vsub.s32 %v517, %v519
  %v521 = vrot.slane %v493, %v520
  %v522 = vcombine.high %v500, %v500
  %v523 = vcombine.high %v507, %v507
  %v524 = vcombine.high %v514, %v514
  %v525 = vcombine.high %v521, %v521
  %v526 = vcombine.high %v23, %v23
  %v528 = vunpack.c.l.s4 1966171168
  %v529 = vunpack.c.0.s8 %v528
  %v530 = vlaneseq
  %v531 = vshrl.u32 %v530, 7
  %v532 = vsub.s32 %v529, %v531
  %v533 = vrot.slane %v23, %v532
  %v535 = vunpack.c.l.s4 1966171168
  %v536 = vunpack.c.0.s8 %v535
  %v537 = vlaneseq
  %v538 = vshrl.u32 %v537, 7
  %v539 = vsub.s32 %v536, %v538
  %v540 = vrot.slane %v526, %v539
  %v541 = vcombine.high %v533, %v533
  %v542 = vcombine.high %v540, %v540
  %v544 = vunpack.c.l.s4 1966171168
  %v545 = vunpack.c.0.s8 %v544
  %v546 = vlaneseq
  %v547 = vshrl.u32 %v546, 7
  %v548 = vsub.s32 %v545, %v547
  %v549 = vrot.slane %v533, %v548
  %v551 = vunpack.c.l.s4 1966171168
  %v552 = vunpack.c.0.s8 %v551
  %v553 = vlaneseq
  %v554 = vshrl.u32 %v553, 7
  %v555 = vsub.s32 %v552, %v554
  %v556 = vrot.slane %v540, %v555
  %v558 = vunpack.c.l.s4 1966171168
  %v559 = vunpack.c.0.s8 %v558
  %v560 = vlaneseq
  %v561 = vshrl.u32 %v560, 7
  %v562 = vsub.s32 %v559, %v561
  %v563 = vrot.slane %v541, %v562
  %v565 = vunpack.c.l.s4 1966171168
  %v566 = vunpack.c.0.s8 %v565
  %v567 = vlaneseq
  %v568 = vshrl.u32 %v567, 7
  %v569 = vsub.s32 %v566, %v568
  %v570 = vrot.slane %v542, %v569
  %v571 = vcombine.high %v549, %v549
  %v572 = vcombine.high %v556, %v556
  %v573 = vcombine.high %v563, %v563
  %v574 = vcombine.high %v570, %v570
  %v576 = vunpack.c.l.s4 1966171168
  %v577 = vunpack.c.0.s8 %v576
  %v578 = vlaneseq
  %v579 = vshrl.u32 %v578, 7
  %v580 = vsub.s32 %v577, %v579
  %v581 = vrot.slane %v24, %v580
  %v583 = vunpack.c.l.s4 1966171168
  %v584 = vunpack.c.0.s8 %v583
  %v585 = vlaneseq
  %v586 = vshrl.u32 %v585, 7
  %v587 = vsub.s32 %v584, %v586
  %v588 = vrot.slane %v581, %v587
  %v1005 = vunpack.c.l.b16 %v25
  %v1006 = vunpack.c.l.b16 %v26
  %v1007 = vunpack.c.l.b16 %v27
  %v1008 = vunpack.c.l.b16 %v28
  %v1009 = vunpack.c.l.b16 %v29
  %v1010 = vunpack.c.l.b16 %v30
  %v1011 = vunpack.c.l.b16 %v31
  %v1012 = vunpack.c.l.b16 %v32
  %v1013 = vunpack.c.l.b16 %v33
  %v1014 = vunpack.c.l.b16 %v34
  %v1015 = vunpack.c.l.b16 %v35
  %v1016 = vunpack.c.l.b16 %v36
  %v1017 = vunpack.c.l.b16 %v37
  %v1018 = vunpack.c.l.b16 %v38
  %v1019 = vunpack.c.l.b16 %v39
  %v1020 = vunpack.c.l.b16 %v40
  %v1021 = vunpack.c.l.b16 %v41
  %v1022 = vunpack.c.l.b16 %v42
  %v1023 = vunpack.c.l.b16 %v43
  %v1024 = vunpack.c.l.b16 %v44
  %v1025 = vunpack.c.l.b16 %v45
  %v1026 = vunpack.c.l.b16 %v46
  %v1027 = vunpack.c.l.b16 %v47
  %v1028 = vunpack.c.l.b16 %v48
  %v1029 = vunpack.c.l.b16 %v49
  %v1030 = vunpack.c.l.b16 %v50
  %v1031 = vunpack.c.l.b16 %v51
  %v1032 = vunpack.c.l.b16 %v52
  %v1033 = vunpack.c.l.b16 %v53
  %v1034 = vunpack.c.l.b16 %v54
  %v1035 = vunpack.c.l.b16 %v55
  %v1036 = vunpack.c.l.b16 %v56
  %v1037 = vunpack.c.l.b16 %v57
  %v1038 = vunpack.c.l.b16 %v58
  %v1039 = vunpack.c.l.b16 %v59
  %v1040 = vunpack.c.l.b16 %v60
  %v1041 = vunpack.c.l.b16 %v61
  %v1042 = vunpack.c.l.b16 %v62
  %v1043 = vunpack.c.l.b16 %v63
  %v1044 = vunpack.c.l.b16 %v64
  %v1045 = vunpack.c.l.b16 %v65
  %v1046 = vunpack.c.l.b16 %v66
  %v1047 = vunpack.c.l.b16 %v67
  %v1048 = vunpack.c.l.b16 %v68
  %v1049 = vunpack.c.l.b16 %v69
  %v1050 = vunpack.c.l.b16 %v70
  %v1051 = vunpack.c.l.b16 %v71
  %v1052 = vunpack.c.l.b16 %v72
  %v1053 = vunpack.c.l.b16 %v73
  %v1054 = vunpack.c.l.b16 %v74
  %v1055 = vunpack.c.l.b16 %v75
  %v1056 = vunpack.c.l.b16 %v76
  %v1057 = vunpack.c.l.b16 %v77
  %v1058 = vunpack.c.l.b16 %v78
  %v1059 = vunpack.c.l.b16 %v79
  %v1060 = vunpack.c.l.b16 %v80
  %v1061 = vunpack.c.l.b16 %v81
  %v1062 = vunpack.c.l.b16 %v82
  %v1063 = vunpack.c.l.b16 %v83
  %v1064 = vunpack.c.l.b16 %v84
  %v1065 = vunpack.c.l.b16 %v85
  %v1066 = vunpack.c.l.b16 %v86
  %v1067 = vunpack.c.l.b16 %v87
  %v1068 = vunpack.c.l.b16 %v88
  %v1069 = vunpack.c.l.b16 %v89
  %v1070 = vunpack.c.l.b16 %v90
  %v1071 = vunpack.c.l.b16 %v91
  %v1072 = vunpack.c.l.b16 %v92
  %v1073 = vunpack.c.l.b16 %v93
  %v1074 = vunpack.c.l.b16 %v94
  %v1075 = vunpack.c.l.b16 %v95
  %v1076 = vunpack.c.l.b16 %v96
  %v1077 = vunpack.c.l.b16 %v97
  %v1078 = vunpack.c.l.b16 %v98
  %v1079 = vunpack.c.l.b16 %v99
  %v1080 = vunpack.c.l.b16 %v100
  %v1081 = vunpack.c.l.b16 %v101
  %v1082 = vunpack.c.l.b16 %v102
  %v1083 = vunpack.c.l.b16 %v103
  %v1084 = vunpack.c.l.b16 %v104
  %v1085 = vunpack.c.l.b16 %v105
  %v1086 = vunpack.c.l.b16 %v106
  %v1087 = vunpack.c.l.b16 %v107
  %v1088 = vunpack.c.l.b16 %v108
  %v1089 = vunpack.c.l.b16 %v109
  %v1090 = vunpack.c.l.b16 %v110
  %v1091 = vunpack.c.l.b16 %v111
  %v1092 = vunpack.c.l.b16 %v112
  %v1093 = vunpack.c.l.b16 %v113
  %v1094 = vunpack.c.l.b16 %v114
  %v1095 = vunpack.c.l.b16 %v115
  %v1096 = vunpack.c.l.b16 %v116
  %v1097 = vunpack.c.l.b16 %v117
  %v1098 = vunpack.c.l.b16 %v118
  %v1099 = vunpack.c.l.b16 %v119
  %v1100 = vunpack.c.l.b16 %v120
  %v1101 = vunpack.c.l.b16 %v121
  %v1102 = vunpack.c.l.b16 %v122
  %v1103 = vunpack.c.l.b16 %v123
  %v1104 = vunpack.c.l.b16 %v124
  %v1105 = vunpack.c.l.b16 %v125
  %v1106 = vunpack.c.l.b16 %v126
  %v1107 = vunpack.c.l.b16 %v127
  %v1108 = vunpack.c.l.b16 %v128
  %v1109 = vunpack.c.l.b16 %v129
  %v1110 = vunpack.c.l.b16 %v130
  %v1111 = vunpack.c.l.b16 %v131
  %v1112 = vunpack.c.l.b16 %v132
  %v1113 = vunpack.c.l.b16 %v133
  %v1114 = vunpack.c.l.b16 %v134
  %v1115 = vunpack.c.l.b16 %v135
  %v1116 = vunpack.c.l.b16 %v136
  %v1117 = vunpack.c.l.b16 %v137
  %v1118 = vunpack.c.l.b16 %v138
  %v1119 = vunpack.c.l.b16 %v139
  %v1120 = vunpack.c.l.b16 %v140
  %v1121 = vunpack.c.l.b16 %v141
  %v1122 = vunpack.c.l.b16 %v142
  %v1123 = vunpack.c.l.b16 %v143
  %v1124 = vunpack.c.l.b16 %v144
  %v1125 = vunpack.c.l.b16 %v145
  %v1126 = vunpack.c.l.b16 %v146
  %v1127 = vunpack.c.l.b16 %v147
  %v1128 = vunpack.c.l.b16 %v148
  %v1129 = vunpack.c.l.b16 %v149
  %v1130 = vunpack.c.l.b16 %v150
  %v1131 = vunpack.c.l.b16 %v151
  %v1132 = vunpack.c.l.b16 %v152
  %v1133 = vunpack.c.l.b16 %v153
  %v1134 = vunpack.c.l.b16 %v154
  %v1135 = vunpack.c.l.b16 %v155
  %v1136 = vunpack.c.l.b16 %v156
  %v1137 = vunpack.c.l.b16 %v157
  %v1138 = vunpack.c.l.b16 %v158
  %v1139 = vunpack.c.l.b16 %v159
  %v1140 = vunpack.c.l.b16 %v160
  %v1141 = vunpack.c.l.b16 %v161
  %v1142 = vunpack.c.l.b16 %v162
  %v1143 = vunpack.c.l.b16 %v163
  %v1144 = vunpack.c.l.b16 %v164
  %v1145 = vunpack.c.l.b16 %v165
  %v1146 = vunpack.c.l.b16 %v166
  %v1147 = vunpack.c.l.b16 %v167
  %v1148 = vunpack.c.l.b16 %v168
  %v1149 = vunpack.c.l.b16 %v169
  %v1150 = vunpack.c.l.b16 %v170
  %v1151 = vunpack.c.l.b16 %v171
  %v1152 = vunpack.c.l.b16 %v172
  %v1153 = vunpack.c.l.b16 %v173
  %v1154 = vunpack.c.l.b16 %v174
  %v1155 = vunpack.c.l.b16 %v175
  %v1156 = vunpack.c.l.b16 %v176
  %v1157 = vunpack.c.l.b16 %v177
  %v1158 = vunpack.c.l.b16 %v178
  %v1159 = vunpack.c.l.b16 %v179
  %v1160 = vunpack.c.l.b16 %v180
  %v1161 = vunpack.c.l.b16 %v181
  %v1162 = vunpack.c.l.b16 %v182
  %v1163 = vunpack.c.l.b16 %v183
  %v1164 = vunpack.c.l.b16 %v184
  %v1165 = vunpack.c.l.b16 %v185
  %v1166 = vunpack.c.l.b16 %v186
  %v1167 = vunpack.c.l.b16 %v187
  %v1168 = vunpack.c.l.b16 %v188
  %v1169 = vunpack.c.l.b16 %v189
  %v1170 = vunpack.c.l.b16 %v190
  %v1171 = vunpack.c.l.b16 %v191
  %v1172 = vunpack.c.l.b16 %v192
  %v1173 = vunpack.c.l.b16 %v193
  %v1174 = vunpack.c.l.b16 %v194
  %v1175 = vunpack.c.l.b16 %v195
  %v1176 = vunpack.c.l.b16 %v196
  %v1177 = vunpack.c.l.b16 %v197
  %v1178 = vunpack.c.l.b16 %v198
  %v1179 = vunpack.c.l.b16 %v199
  %v1180 = vunpack.c.l.b16 %v200
  %v1181 = vunpack.c.l.b16 %v201
  %v1182 = vunpack.c.l.b16 %v202
  %v1183 = vunpack.c.l.b16 %v203
  %v1184 = vunpack.c.l.b16 %v204
  %v1185 = vunpack.c.l.b16 %v205
  %v1186 = vunpack.c.l.b16 %v206
  %v1187 = vunpack.c.l.b16 %v207
  %v1188 = vunpack.c.l.b16 %v208
  %v1189 = vunpack.c.l.b16 %v209
  %v1190 = vunpack.c.l.b16 %v210
  %v1191 = vunpack.c.l.b16 %v211
  %v1192 = vunpack.c.l.b16 %v212
  %v1193 = vunpack.c.l.b16 %v213
  %v1194 = vunpack.c.l.b16 %v214
  %v1195 = vunpack.c.l.b16 %v215
  %v1196 = vunpack.c.l.b16 %v216
  %v1197 = vunpack.c.l.b16 %v217
  %v1198 = vunpack.c.l.b16 %v218
  %v1199 = vunpack.c.l.b16 %v219
  %v1200 = vunpack.c.l.b16 %v220
  %v1201 = vunpack.c.l.b16 %v221
  %v1202 = vunpack.c.l.b16 %v222
  %v1203 = vunpack.c.l.b16 %v223
  %v1204 = vunpack.c.l.b16 %v224
  %v1205 = vunpack.c.l.b16 %v225
  %v1206 = vunpack.c.l.b16 %v226
  %v1207 = vunpack.c.l.b16 %v227
  %v1208 = vunpack.c.l.b16 %v228
  %v1209 = vunpack.c.l.b16 %v229
  %v1210 = vunpack.c.l.b16 %v230
  %v1211 = vunpack.c.l.b16 %v231
  %v1212 = vunpack.c.l.b16 %v232
  %v1213 = vunpack.c.l.b16 %v233
  %v1214 = vunpack.c.l.b16 %v234
  %v1215 = vunpack.c.l.b16 %v235
  %v1216 = vunpack.c.l.b16 %v236
  %v1217 = vunpack.c.l.b16 %v237
  %v1218 = vunpack.c.l.b16 %v238
  %v1219 = vunpack.c.l.b16 %v239
  %v1220 = vunpack.c.l.b16 %v240
  %v1221 = vunpack.c.l.b16 %v241
  %v1222 = vunpack.c.l.b16 %v242
  %v1223 = vunpack.c.l.b16 %v243
  %v1224 = vunpack.c.l.b16 %v244
  %v1225 = vunpack.c.l.b16 %v245
  %v1226 = vunpack.c.l.b16 %v246
  %v1227 = vunpack.c.l.b16 %v247
  %v1228 = vunpack.c.l.b16 %v248
  %v1229 = vunpack.c.l.b16 %v249
  %v1230 = vunpack.c.l.b16 %v250
  %v1231 = vunpack.c.l.b16 %v251
  %v1232 = vunpack.c.l.b16 %v252
  %v1233 = vunpack.c.l.b16 %v253
  %v1234 = vunpack.c.l.b16 %v254
  %v1235 = vunpack.c.l.b16 %v255
  %v1236 = vunpack.c.l.b16 %v256
  %v1237 = vunpack.c.l.b16 %v257
  %v1238 = vunpack.c.l.b16 %v258
  %v1239 = vunpack.c.l.b16 %v259
  %v1240 = vunpack.c.l.b16 %v260
  %v1241 = vunpack.c.l.b16 %v261
  %v1242 = vunpack.c.l.b16 %v262
  %v1243 = vunpack.c.l.b16 %v263
  %v1244 = vunpack.c.l.b16 %v264
  %v1245 = vunpack.c.l.b16 %v265
  %v1246 = vunpack.c.l.b16 %v266
  %v1247 = vunpack.c.l.b16 %v267
  %v1248 = vunpack.c.l.b16 %v268
  %v1249 = vunpack.c.l.b16 %v269
  %v1250 = vunpack.c.l.b16 %v270
  %v1251 = vunpack.c.l.b16 %v271
  %v1252 = vunpack.c.l.b16 %v272
  %v1253 = vunpack.c.l.b16 %v273
  %v1254 = vunpack.c.l.b16 %v274
  %v1255 = vunpack.c.l.b16 %v275
  %v1256 = vunpack.c.l.b16 %v276
  %v1257 = vunpack.c.l.b16 %v277
  %v1258 = vunpack.c.l.b16 %v278
  %v1259 = vunpack.c.l.b16 %v279
  %v1260 = vunpack.c.l.b16 %v280
  %v1261 = vunpack.c.l.b16 %v281
  %v1262 = vunpack.c.l.b16 %v282
  %v1263 = vunpack.c.l.b16 %v283
  %v1264 = vunpack.c.l.b16 %v284
  %v1265 = vunpack.c.l.b16 %v285
  %v1266 = vunpack.c.l.b16 %v286
  %v1267 = vunpack.c.l.b16 %v287
  %v1268 = vunpack.c.l.b16 %v288
  %v1269 = vunpack.c.l.b16 %v289
  %v1270 = vunpack.c.l.b16 %v290
  %v1271 = vunpack.c.l.b16 %v291
  %v1272 = vunpack.c.l.b16 %v292
  %v1273 = vunpack.c.l.b16 %v293
  %v1274 = vunpack.c.l.b16 %v294
  %v1275 = vunpack.c.l.b16 %v295
  %v1276 = vunpack.c.l.b16 %v296
  %v1277 = vunpack.c.l.b16 %v297
  %v1278 = vunpack.c.l.b16 %v298
  %v1279 = vunpack.c.l.b16 %v299
  %v1280 = vunpack.c.l.b16 %v300
  %v1281 = vunpack.c.l.b16 %v301
  %v1282 = vunpack.c.l.b16 %v302
  %v1283 = vunpack.c.l.b16 %v303
  %v1284 = vunpack.c.l.b16 %v304
  %v1285 = vunpack.c.l.b16 %v305
  %v1286 = vunpack.c.l.b16 %v306
  %v1287 = vunpack.c.l.b16 %v307
  %v1288 = vunpack.c.l.b16 %v308
  %v1289 = vunpack.c.l.b16 %v309
  %v1290 = vunpack.c.l.b16 %v310
  %v1291 = vunpack.c.l.b16 %v311
  %v1292 = vunpack.c.l.b16 %v312
  %v1293 = vunpack.c.l.b16 %v313
  %v1294 = vunpack.c.l.b16 %v314
  %v1295 = vunpack.c.l.b16 %v315
  %v1296 = vunpack.c.l.b16 %v316
  %v1297 = vunpack.c.l.b16 %v317
  %v1298 = vunpack.c.l.b16 %v318
  %v1299 = vunpack.c.l.b16 %v319
  %v1300 = vunpack.c.l.b16 %v320
  %v1301 = vunpack.c.l.b16 %v321
  %v1302 = vunpack.c.l.b16 %v322
  %v1303 = vunpack.c.l.b16 %v323
  %v1304 = vunpack.c.l.b16 %v324
  %v1305 = vunpack.c.l.b16 %v325
  %v1306 = vunpack.c.l.b16 %v326
  %v1307 = vunpack.c.l.b16 %v327
  %v1308 = vunpack.c.l.b16 %v328
  %v1309 = vunpack.c.l.b16 %v329
  %v1310 = vunpack.c.l.b16 %v330
  %v1311 = vunpack.c.l.b16 %v331
  %v1312 = vunpack.c.l.b16 %v332
  %v1313 = vunpack.c.l.b16 %v333
  %v1314 = vunpack.c.l.b16 %v334
  %v1315 = vunpack.c.l.b16 %v335
  %v1316 = vunpack.c.l.b16 %v336
  %v1317 = vunpack.c.l.b16 %v337
  %v1318 = vunpack.c.l.b16 %v338
  %v1319 = vunpack.c.l.b16 %v339
  %v1320 = vunpack.c.l.b16 %v340
  %v1321 = vunpack.c.l.b16 %v341
  %v1322 = vunpack.c.l.b16 %v342
  %v1323 = vunpack.c.l.b16 %v343
  %v1324 = vunpack.c.l.b16 %v344
  %v1325 = vunpack.c.l.b16 %v345
  %v1326 = vunpack.c.l.b16 %v346
  %v1327 = vunpack.c.l.b16 %v347
  %v1328 = vunpack.c.l.b16 %v348
  %v1329 = vunpack.c.l.b16 %v349
  %v1330 = vunpack.c.l.b16 %v350
  %v1331 = vunpack.c.l.b16 %v351
  %v1332 = vunpack.c.l.b16 %v352
  %v1333 = vunpack.c.l.b16 %v353
  %v1334 = vunpack.c.l.b16 %v354
  %v1335 = vunpack.c.l.b16 %v355
  %v1336 = vunpack.c.l.b16 %v356
  %v1337 = vunpack.c.l.b16 %v357
  %v1338 = vunpack.c.l.b16 %v358
  %v1339 = vunpack.c.l.b16 %v359
  %v1340 = vunpack.c.l.b16 %v360
  %v1341 = vunpack.c.l.b16 %v361
  %v1342 = vunpack.c.l.b16 %v362
  %v1343 = vunpack.c.l.b16 %v363
  %v1344 = vunpack.c.l.b16 %v364
  %v1345 = vunpack.c.l.b16 %v365
  %v1346 = vunpack.c.l.b16 %v366
  %v1347 = vunpack.c.l.b16 %v367
  %v1348 = vunpack.c.l.b16 %v368
  %v1349 = vunpack.c.l.b16 %v369
  %v1350 = vunpack.c.l.b16 %v370
  %v1351 = vunpack.c.l.b16 %v371
  %v1352 = vunpack.c.l.b16 %v372
  %v1353 = vunpack.c.l.b16 %v373
  %v1354 = vunpack.c.l.b16 %v374
  %v1355 = vunpack.c.l.b16 %v375
  %v1356 = vunpack.c.l.b16 %v376
  %v1357 = vunpack.c.l.b16 %v377
  %v1358 = vunpack.c.l.b16 %v378
  %v1359 = vunpack.c.l.b16 %v379
  %v1360 = vunpack.c.l.b16 %v380
  %v1361 = vunpack.c.l.b16 %v381
  %v1362 = vunpack.c.l.b16 %v382
  %v1363 = vunpack.c.l.b16 %v383
  %v1364 = vunpack.c.l.b16 %v384
  %v1365 = vunpack.c.l.b16 %v385
  %v1366 = vunpack.c.l.b16 %v386
  %v1367 = vunpack.c.l.b16 %v387
  %v1368 = vunpack.c.l.b16 %v388
  %v1369 = vunpack.c.l.b16 %v389
  %v1370 = vunpack.c.l.b16 %v390
  %v1371 = vunpack.c.l.b16 %v391
  %v1372 = vunpack.c.l.b16 %v392
  %v1373 = vunpack.c.l.b16 %v393
  %v1374 = vunpack.c.l.b16 %v394
  %v1375 = vunpack.c.l.b16 %v395
  %v1376 = vunpack.c.l.b16 %v396
  %v1377 = vunpack.c.l.b16 %v397
  %v1378 = vunpack.c.l.b16 %v398
  %v1379 = vunpack.c.l.b16 %v399
  %v1380 = vunpack.c.l.b16 %v400
  %v1381 = vunpack.c.l.b16 %v401
  %v1382 = vunpack.c.l.b16 %v402
  %v1383 = vunpack.c.l.b16 %v403
  %v1384 = vunpack.c.l.b16 %v404
  %v1385 = vunpack.c.l.b16 %v405
  %v1386 = vunpack.c.l.b16 %v406
  %v1387 = vunpack.c.l.b16 %v407
  %v1388 = vunpack.c.l.b16 %v408
  %v1389 = vunpack.c.l.b16 %v409
  %v1390 = vunpack.c.l.b16 %v410
  %v1391 = vunpack.c.l.b16 %v411
  %v1392 = vunpack.c.l.b16 %v412
  %v1393 = vunpack.c.l.b16 %v413
  %v1394 = vunpack.c.l.b16 %v414
  %v1395 = vunpack.c.l.b16 %v415
  %v1396 = vunpack.c.l.b16 %v416
  %v1397 = vpack.c.b16 %v1006, %v1005
  %v1398 = vpack.c.b16 %v1008, %v1007
  %v1399 = vpack.c.b16 %v1010, %v1009
  %v1400 = vpack.c.b16 %v1012, %v1011
  %v1401 = vpack.c.b16 %v1014, %v1013
  %v1402 = vpack.c.b16 %v1016, %v1015
  %v1403 = vpack.c.b16 %v1018, %v1017
  %v1404 = vpack.c.b16 %v1020, %v1019
  %v1405 = vpack.c.b16 %v1022, %v1021
  %v1406 = vpack.c.b16 %v1024, %v1023
  %v1407 = vpack.c.b16 %v1026, %v1025
  %v1408 = vpack.c.b16 %v1028, %v1027
  %v1409 = vpack.c.b16 %v1030, %v1029
  %v1410 = vpack.c.b16 %v1032, %v1031
  %v1411 = vpack.c.b16 %v1034, %v1033
  %v1412 = vpack.c.b16 %v1036, %v1035
  %v1413 = vpack.c.b16 %v1038, %v1037
  %v1414 = vpack.c.b16 %v1040, %v1039
  %v1415 = vpack.c.b16 %v1042, %v1041
  %v1416 = vpack.c.b16 %v1044, %v1043
  %v1417 = vpack.c.b16 %v1046, %v1045
  %v1418 = vpack.c.b16 %v1048, %v1047
  %v1419 = vpack.c.b16 %v1050, %v1049
  %v1420 = vpack.c.b16 %v1052, %v1051
  %v1421 = vpack.c.b16 %v1054, %v1053
  %v1422 = vpack.c.b16 %v1056, %v1055
  %v1423 = vpack.c.b16 %v1058, %v1057
  %v1424 = vpack.c.b16 %v1060, %v1059
  %v1425 = vpack.c.b16 %v1062, %v1061
  %v1426 = vpack.c.b16 %v1064, %v1063
  %v1427 = vpack.c.b16 %v1066, %v1065
  %v1428 = vpack.c.b16 %v1068, %v1067
  %v1429 = vpack.c.b16 %v1070, %v1069
  %v1430 = vpack.c.b16 %v1072, %v1071
  %v1431 = vpack.c.b16 %v1074, %v1073
  %v1432 = vpack.c.b16 %v1076, %v1075
  %v1433 = vpack.c.b16 %v1078, %v1077
  %v1434 = vpack.c.b16 %v1080, %v1079
  %v1435 = vpack.c.b16 %v1082, %v1081
  %v1436 = vpack.c.b16 %v1084, %v1083
  %v1437 = vpack.c.b16 %v1086, %v1085
  %v1438 = vpack.c.b16 %v1088, %v1087
  %v1439 = vpack.c.b16 %v1090, %v1089
  %v1440 = vpack.c.b16 %v1092, %v1091
  %v1441 = vpack.c.b16 %v1094, %v1093
  %v1442 = vpack.c.b16 %v1096, %v1095
  %v1443 = vpack.c.b16 %v1098, %v1097
  %v1444 = vpack.c.b16 %v1100, %v1099
  %v1445 = vpack.c.b16 %v1102, %v1101
  %v1446 = vpack.c.b16 %v1104, %v1103
  %v1447 = vpack.c.b16 %v1106, %v1105
  %v1448 = vpack.c.b16 %v1108, %v1107
  %v1449 = vpack.c.b16 %v1110, %v1109
  %v1450 = vpack.c.b16 %v1112, %v1111
  %v1451 = vpack.c.b16 %v1114, %v1113
  %v1452 = vpack.c.b16 %v1116, %v1115
  %v1453 = vpack.c.b16 %v1118, %v1117
  %v1454 = vpack.c.b16 %v1120, %v1119
  %v1455 = vpack.c.b16 %v1122, %v1121
  %v1456 = vpack.c.b16 %v1124, %v1123
  %v1457 = vpack.c.b16 %v1126, %v1125
  %v1458 = vpack.c.b16 %v1128, %v1127
  %v1459 = vpack.c.b16 %v1130, %v1129
  %v1460 = vpack.c.b16 %v1132, %v1131
  %v1461 = vpack.c.b16 %v1134, %v1133
  %v1462 = vpack.c.b16 %v1136, %v1135
  %v1463 = vpack.c.b16 %v1138, %v1137
  %v1464 = vpack.c.b16 %v1140, %v1139
  %v1465 = vpack.c.b16 %v1142, %v1141
  %v1466 = vpack.c.b16 %v1144, %v1143
  %v1467 = vpack.c.b16 %v1146, %v1145
  %v1468 = vpack.c.b16 %v1148, %v1147
  %v1469 = vpack.c.b16 %v1150, %v1149
  %v1470 = vpack.c.b16 %v1152, %v1151
  %v1471 = vpack.c.b16 %v1154, %v1153
  %v1472 = vpack.c.b16 %v1156, %v1155
  %v1473 = vpack.c.b16 %v1158, %v1157
  %v1474 = vpack.c.b16 %v1160, %v1159
  %v1475 = vpack.c.b16 %v1162, %v1161
  %v1476 = vpack.c.b16 %v1164, %v1163
  %v1477 = vpack.c.b16 %v1166, %v1165
  %v1478 = vpack.c.b16 %v1168, %v1167
  %v1479 = vpack.c.b16 %v1170, %v1169
  %v1480 = vpack.c.b16 %v1172, %v1171
  %v1481 = vpack.c.b16 %v1174, %v1173
  %v1482 = vpack.c.b16 %v1176, %v1175
  %v1483 = vpack.c.b16 %v1178, %v1177
  %v1484 = vpack.c.b16 %v1180, %v1179
  %v1485 = vpack.c.b16 %v1182, %v1181
  %v1486 = vpack.c.b16 %v1184, %v1183
  %v1487 = vpack.c.b16 %v1186, %v1185
  %v1488 = vpack.c.b16 %v1188, %v1187
  %v1489 = vpack.c.b16 %v1190, %v1189
  %v1490 = vpack.c.b16 %v1192, %v1191
  %v1491 = vpack.c.b16 %v1194, %v1193
  %v1492 = vpack.c.b16 %v1196, %v1195
  %v1493 = vpack.c.b16 %v1198, %v1197
  %v1494 = vpack.c.b16 %v1200, %v1199
  %v1495 = vpack.c.b16 %v1202, %v1201
  %v1496 = vpack.c.b16 %v1204, %v1203
  %v1497 = vpack.c.b16 %v1206, %v1205
  %v1498 = vpack.c.b16 %v1208, %v1207
  %v1499 = vpack.c.b16 %v1210, %v1209
  %v1500 = vpack.c.b16 %v1212, %v1211
  %v1501 = vpack.c.b16 %v1214, %v1213
  %v1502 = vpack.c.b16 %v1216, %v1215
  %v1503 = vpack.c.b16 %v1218, %v1217
  %v1504 = vpack.c.b16 %v1220, %v1219
  %v1505 = vpack.c.b16 %v1222, %v1221
  %v1506 = vpack.c.b16 %v1224, %v1223
  %v1507 = vpack.c.b16 %v1226, %v1225
  %v1508 = vpack.c.b16 %v1228, %v1227
  %v1509 = vpack.c.b16 %v1230, %v1229
  %v1510 = vpack.c.b16 %v1232, %v1231
  %v1511 = vpack.c.b16 %v1234, %v1233
  %v1512 = vpack.c.b16 %v1236, %v1235
  %v1513 = vpack.c.b16 %v1238, %v1237
  %v1514 = vpack.c.b16 %v1240, %v1239
  %v1515 = vpack.c.b16 %v1242, %v1241
  %v1516 = vpack.c.b16 %v1244, %v1243
  %v1517 = vpack.c.b16 %v1246, %v1245
  %v1518 = vpack.c.b16 %v1248, %v1247
  %v1519 = vpack.c.b16 %v1250, %v1249
  %v1520 = vpack.c.b16 %v1252, %v1251
  %v1521 = vpack.c.b16 %v1254, %v1253
  %v1522 = vpack.c.b16 %v1256, %v1255
  %v1523 = vpack.c.b16 %v1258, %v1257
  %v1524 = vpack.c.b16 %v1260, %v1259
  %v1525 = vpack.c.b16 %v1262, %v1261
  %v1526 = vpack.c.b16 %v1264, %v1263
  %v1527 = vpack.c.b16 %v1266, %v1265
  %v1528 = vpack.c.b16 %v1268, %v1267
  %v1529 = vpack.c.b16 %v1270, %v1269
  %v1530 = vpack.c.b16 %v1272, %v1271
  %v1531 = vpack.c.b16 %v1274, %v1273
  %v1532 = vpack.c.b16 %v1276, %v1275
  %v1533 = vpack.c.b16 %v1278, %v1277
  %v1534 = vpack.c.b16 %v1280, %v1279
  %v1535 = vpack.c.b16 %v1282, %v1281
  %v1536 = vpack.c.b16 %v1284, %v1283
  %v1537 = vpack.c.b16 %v1286, %v1285
  %v1538 = vpack.c.b16 %v1288, %v1287
  %v1539 = vpack.c.b16 %v1290, %v1289
  %v1540 = vpack.c.b16 %v1292, %v1291
  %v1541 = vpack.c.b16 %v1294, %v1293
  %v1542 = vpack.c.b16 %v1296, %v1295
  %v1543 = vpack.c.b16 %v1298, %v1297
  %v1544 = vpack.c.b16 %v1300, %v1299
  %v1545 = vpack.c.b16 %v1302, %v1301
  %v1546 = vpack.c.b16 %v1304, %v1303
  %v1547 = vpack.c.b16 %v1306, %v1305
  %v1548 = vpack.c.b16 %v1308, %v1307
  %v1549 = vpack.c.b16 %v1310, %v1309
  %v1550 = vpack.c.b16 %v1312, %v1311
  %v1551 = vpack.c.b16 %v1314, %v1313
  %v1552 = vpack.c.b16 %v1316, %v1315
  %v1553 = vpack.c.b16 %v1318, %v1317
  %v1554 = vpack.c.b16 %v1320, %v1319
  %v1555 = vpack.c.b16 %v1322, %v1321
  %v1556 = vpack.c.b16 %v1324, %v1323
  %v1557 = vpack.c.b16 %v1326, %v1325
  %v1558 = vpack.c.b16 %v1328, %v1327
  %v1559 = vpack.c.b16 %v1330, %v1329
  %v1560 = vpack.c.b16 %v1332, %v1331
  %v1561 = vpack.c.b16 %v1334, %v1333
  %v1562 = vpack.c.b16 %v1336, %v1335
  %v1563 = vpack.c.b16 %v1338, %v1337
  %v1564 = vpack.c.b16 %v1340, %v1339
  %v1565 = vpack.c.b16 %v1342, %v1341
  %v1566 = vpack.c.b16 %v1344, %v1343
  %v1567 = vpack.c.b16 %v1346, %v1345
  %v1568 = vpack.c.b16 %v1348, %v1347
  %v1569 = vpack.c.b16 %v1350, %v1349
  %v1570 = vpack.c.b16 %v1352, %v1351
  %v1571 = vpack.c.b16 %v1354, %v1353
  %v1572 = vpack.c.b16 %v1356, %v1355
  %v1573 = vpack.c.b16 %v1358, %v1357
  %v1574 = vpack.c.b16 %v1360, %v1359
  %v1575 = vpack.c.b16 %v1362, %v1361
  %v1576 = vpack.c.b16 %v1364, %v1363
  %v1577 = vpack.c.b16 %v1366, %v1365
  %v1578 = vpack.c.b16 %v1368, %v1367
  %v1579 = vpack.c.b16 %v1370, %v1369
  %v1580 = vpack.c.b16 %v1372, %v1371
  %v1581 = vpack.c.b16 %v1374, %v1373
  %v1582 = vpack.c.b16 %v1376, %v1375
  %v1583 = vpack.c.b16 %v1378, %v1377
  %v1584 = vpack.c.b16 %v1380, %v1379
  %v1585 = vpack.c.b16 %v1382, %v1381
  %v1586 = vpack.c.b16 %v1384, %v1383
  %v1587 = vpack.c.b16 %v1386, %v1385
  %v1588 = vpack.c.b16 %v1388, %v1387
  %v1589 = vpack.c.b16 %v1390, %v1389
  %v1590 = vpack.c.b16 %v1392, %v1391
  %v1591 = vpack.c.b16 %v1394, %v1393
  %v1592 = vpack.c.b16 %v1396, %v1395
  %vm1789 = vcmask 523264
  %v1791 = vsel %vm1789, %v588, 0
  %1793 = vmatprep.subr.bf16.mxu0 0
  %1794 = vmatpush1.bf16.msra.mxu0 %v1397
  %1795 = vmatprep.subr.bf16.mxu0 0
  %1796 = vmatpush1.bf16.msra.mxu0 %v1398
  %1797 = vmatprep.subr.bf16.mxu0 0
  %1798 = vmatpush1.bf16.msra.mxu0 %v1399
  %1799 = vmatprep.subr.bf16.mxu0 0
  %1800 = vmatpush1.bf16.msra.mxu0 %v1400
  %1801 = vmatprep.subr.bf16.mxu0 0
  %1802 = vmatpush1.bf16.msra.mxu0 %v1401
  %1803 = vmatprep.subr.bf16.mxu0 0
  %1804 = vmatpush1.bf16.msra.mxu0 %v1402
  %1805 = vmatprep.subr.bf16.mxu0 0
  %1806 = vmatpush1.bf16.msra.mxu0 %v1403
  %1807 = vmatprep.subr.bf16.mxu0 0
  %1808 = vmatpush1.bf16.msra.mxu0 %v1404
  %1809 = vmatprep.subr.bf16.mxu0 0
  %1810 = vmatpush1.bf16.msra.mxu0 %v1405
  %1811 = vmatprep.subr.bf16.mxu0 0
  %1812 = vmatpush1.bf16.msra.mxu0 %v1406
  %1813 = vmatprep.subr.bf16.mxu0 0
  %1814 = vmatpush1.bf16.msra.mxu0 %v1407
  %1815 = vmatprep.subr.bf16.mxu0 0
  %1816 = vmatpush1.bf16.msra.mxu0 %v1408
  %1817 = vmatprep.subr.bf16.mxu0 0
  %1818 = vmatpush1.bf16.msra.mxu0 %v1409
  %1819 = vmatprep.subr.bf16.mxu0 0
  %1820 = vmatpush1.bf16.msra.mxu0 %v1410
  %1821 = vmatprep.subr.bf16.mxu0 0
  %1822 = vmatpush1.bf16.msra.mxu0 %v1411
  %1823 = vmatprep.subr.bf16.mxu0 0
  %1824 = vmatpush1.bf16.msra.mxu0 %v1412
  %1825 = vmatprep.mubr.bf16.mxu0 %v465
  %1826 = vmatmul.mubr.bf16.gmra.mrb[0].mxu0 %v451
  %v1827 = vpop.f32.mrb[0].mxu0
  %v1828 = vadd.f32 %v422, %v1827
  %v1829 = vpop.f32.mrb[0].mxu0
  %v1830 = vpop.f32.mrb[0].mxu0
  %v1831 = vpop.f32.mrb[0].mxu0
  %1832 = vdwg.mxu0
  %1833 = vmatprep.subr.bf16.mxu0 0
  %1834 = vmatpush1.bf16.msra.mxu0 %v1413
  %1835 = vmatprep.subr.bf16.mxu0 0
  %1836 = vmatpush1.bf16.msra.mxu0 %v1414
  %1837 = vmatprep.subr.bf16.mxu0 0
  %1838 = vmatpush1.bf16.msra.mxu0 %v1415
  %1839 = vmatprep.subr.bf16.mxu0 0
  %1840 = vmatpush1.bf16.msra.mxu0 %v1416
  %1841 = vmatprep.subr.bf16.mxu0 0
  %1842 = vmatpush1.bf16.msra.mxu0 %v1417
  %1843 = vmatprep.subr.bf16.mxu0 0
  %1844 = vmatpush1.bf16.msra.mxu0 %v1418
  %1845 = vmatprep.subr.bf16.mxu0 0
  %1846 = vmatpush1.bf16.msra.mxu0 %v1419
  %1847 = vmatprep.subr.bf16.mxu0 0
  %1848 = vmatpush1.bf16.msra.mxu0 %v1420
  %1849 = vmatprep.subr.bf16.mxu0 0
  %1850 = vmatpush1.bf16.msra.mxu0 %v1421
  %1851 = vmatprep.subr.bf16.mxu0 0
  %1852 = vmatpush1.bf16.msra.mxu0 %v1422
  %1853 = vmatprep.subr.bf16.mxu0 0
  %1854 = vmatpush1.bf16.msra.mxu0 %v1423
  %1855 = vmatprep.subr.bf16.mxu0 0
  %1856 = vmatpush1.bf16.msra.mxu0 %v1424
  %1857 = vmatprep.subr.bf16.mxu0 0
  %1858 = vmatpush1.bf16.msra.mxu0 %v1425
  %1859 = vmatprep.subr.bf16.mxu0 0
  %1860 = vmatpush1.bf16.msra.mxu0 %v1426
  %1861 = vmatprep.subr.bf16.mxu0 0
  %1862 = vmatpush1.bf16.msra.mxu0 %v1427
  %1863 = vmatprep.subr.bf16.mxu0 0
  %1864 = vmatpush1.bf16.msra.mxu0 %v1428
  %1865 = vmatprep.mubr.bf16.mxu0 %v475
  %1866 = vmatmul.mubr.bf16.gmra.mrb[0].mxu0 %v473
  %v1867 = vpop.f32.mrb[0].mxu0
  %v1868 = vadd.f32 %v1828, %v1867
  %v1869 = vpop.f32.mrb[0].mxu0
  %v1870 = vpop.f32.mrb[0].mxu0
  %v1871 = vpop.f32.mrb[0].mxu0
  %1872 = vdwg.mxu0
  %1873 = vmatprep.subr.bf16.mxu0 0
  %1874 = vmatpush1.bf16.msra.mxu0 %v1429
  %1875 = vmatprep.subr.bf16.mxu0 0
  %1876 = vmatpush1.bf16.msra.mxu0 %v1430
  %1877 = vmatprep.subr.bf16.mxu0 0
  %1878 = vmatpush1.bf16.msra.mxu0 %v1431
  %1879 = vmatprep.subr.bf16.mxu0 0
  %1880 = vmatpush1.bf16.msra.mxu0 %v1432
  %1881 = vmatprep.subr.bf16.mxu0 0
  %1882 = vmatpush1.bf16.msra.mxu0 %v1433
  %1883 = vmatprep.subr.bf16.mxu0 0
  %1884 = vmatpush1.bf16.msra.mxu0 %v1434
  %1885 = vmatprep.subr.bf16.mxu0 0
  %1886 = vmatpush1.bf16.msra.mxu0 %v1435
  %1887 = vmatprep.subr.bf16.mxu0 0
  %1888 = vmatpush1.bf16.msra.mxu0 %v1436
  %1889 = vmatprep.subr.bf16.mxu0 0
  %1890 = vmatpush1.bf16.msra.mxu0 %v1437
  %1891 = vmatprep.subr.bf16.mxu0 0
  %1892 = vmatpush1.bf16.msra.mxu0 %v1438
  %1893 = vmatprep.subr.bf16.mxu0 0
  %1894 = vmatpush1.bf16.msra.mxu0 %v1439
  %1895 = vmatprep.subr.bf16.mxu0 0
  %1896 = vmatpush1.bf16.msra.mxu0 %v1440
  %1897 = vmatprep.subr.bf16.mxu0 0
  %1898 = vmatpush1.bf16.msra.mxu0 %v1441
  %1899 = vmatprep.subr.bf16.mxu0 0
  %1900 = vmatpush1.bf16.msra.mxu0 %v1442
  %1901 = vmatprep.subr.bf16.mxu0 0
  %1902 = vmatpush1.bf16.msra.mxu0 %v1443
  %1903 = vmatprep.subr.bf16.mxu0 0
  %1904 = vmatpush1.bf16.msra.mxu0 %v1444
  %1905 = vmatprep.mubr.bf16.mxu0 %v472
  %1906 = vmatmul.mubr.bf16.gmra.mrb[0].mxu0 %v458
  %v1907 = vpop.f32.mrb[0].mxu0
  %v1908 = vadd.f32 %v1868, %v1907
  %v1909 = vpop.f32.mrb[0].mxu0
  %v1910 = vpop.f32.mrb[0].mxu0
  %v1911 = vpop.f32.mrb[0].mxu0
  %1912 = vdwg.mxu0
  %1913 = vmatprep.subr.bf16.mxu0 0
  %1914 = vmatpush1.bf16.msra.mxu0 %v1445
  %1915 = vmatprep.subr.bf16.mxu0 0
  %1916 = vmatpush1.bf16.msra.mxu0 %v1446
  %1917 = vmatprep.subr.bf16.mxu0 0
  %1918 = vmatpush1.bf16.msra.mxu0 %v1447
  %1919 = vmatprep.subr.bf16.mxu0 0
  %1920 = vmatpush1.bf16.msra.mxu0 %v1448
  %1921 = vmatprep.subr.bf16.mxu0 0
  %1922 = vmatpush1.bf16.msra.mxu0 %v1449
  %1923 = vmatprep.subr.bf16.mxu0 0
  %1924 = vmatpush1.bf16.msra.mxu0 %v1450
  %1925 = vmatprep.subr.bf16.mxu0 0
  %1926 = vmatpush1.bf16.msra.mxu0 %v1451
  %1927 = vmatprep.subr.bf16.mxu0 0
  %1928 = vmatpush1.bf16.msra.mxu0 %v1452
  %1929 = vmatprep.subr.bf16.mxu0 0
  %1930 = vmatpush1.bf16.msra.mxu0 %v1453
  %1931 = vmatprep.subr.bf16.mxu0 0
  %1932 = vmatpush1.bf16.msra.mxu0 %v1454
  %1933 = vmatprep.subr.bf16.mxu0 0
  %1934 = vmatpush1.bf16.msra.mxu0 %v1455
  %1935 = vmatprep.subr.bf16.mxu0 0
  %1936 = vmatpush1.bf16.msra.mxu0 %v1456
  %1937 = vmatprep.subr.bf16.mxu0 0
  %1938 = vmatpush1.bf16.msra.mxu0 %v1457
  %1939 = vmatprep.subr.bf16.mxu0 0
  %1940 = vmatpush1.bf16.msra.mxu0 %v1458
  %1941 = vmatprep.subr.bf16.mxu0 0
  %1942 = vmatpush1.bf16.msra.mxu0 %v1459
  %1943 = vmatprep.subr.bf16.mxu0 0
  %1944 = vmatpush1.bf16.msra.mxu0 %v1460
  %1945 = vmatprep.mubr.bf16.mxu0 %v476
  %1946 = vmatmul.mubr.bf16.gmra.mrb[0].mxu0 %v474
  %v1947 = vpop.f32.mrb[0].mxu0
  %v1948 = vadd.f32 %v1908, %v1947
  %v1949 = vpop.f32.mrb[0].mxu0
  %v1950 = vpop.f32.mrb[0].mxu0
  %v1951 = vpop.f32.mrb[0].mxu0
  %1952 = vdwg.mxu0
  %1953 = vmatprep.subr.bf16.mxu0 0
  %1954 = vmatpush1.bf16.msra.mxu0 %v1461
  %1955 = vmatprep.subr.bf16.mxu0 0
  %1956 = vmatpush1.bf16.msra.mxu0 %v1462
  %1957 = vmatprep.subr.bf16.mxu0 0
  %1958 = vmatpush1.bf16.msra.mxu0 %v1463
  %1959 = vmatprep.subr.bf16.mxu0 0
  %1960 = vmatpush1.bf16.msra.mxu0 %v1464
  %1961 = vmatprep.subr.bf16.mxu0 0
  %1962 = vmatpush1.bf16.msra.mxu0 %v1465
  %1963 = vmatprep.subr.bf16.mxu0 0
  %1964 = vmatpush1.bf16.msra.mxu0 %v1466
  %1965 = vmatprep.subr.bf16.mxu0 0
  %1966 = vmatpush1.bf16.msra.mxu0 %v1467
  %1967 = vmatprep.subr.bf16.mxu0 0
  %1968 = vmatpush1.bf16.msra.mxu0 %v1468
  %1969 = vmatprep.subr.bf16.mxu0 0
  %1970 = vmatpush1.bf16.msra.mxu0 %v1469
  %1971 = vmatprep.subr.bf16.mxu0 0
  %1972 = vmatpush1.bf16.msra.mxu0 %v1470
  %1973 = vmatprep.subr.bf16.mxu0 0
  %1974 = vmatpush1.bf16.msra.mxu0 %v1471
  %1975 = vmatprep.subr.bf16.mxu0 0
  %1976 = vmatpush1.bf16.msra.mxu0 %v1472
  %1977 = vmatprep.subr.bf16.mxu0 0
  %1978 = vmatpush1.bf16.msra.mxu0 %v1473
  %1979 = vmatprep.subr.bf16.mxu0 0
  %1980 = vmatpush1.bf16.msra.mxu0 %v1474
  %1981 = vmatprep.subr.bf16.mxu0 0
  %1982 = vmatpush1.bf16.msra.mxu0 %v1475
  %1983 = vmatprep.subr.bf16.mxu0 0
  %1984 = vmatpush1.bf16.msra.mxu0 %v1476
  %1985 = vmatprep.mubr.bf16.mxu0 %v514
  %1986 = vmatmul.mubr.bf16.gmra.mrb[0].mxu0 %v500
  %v1987 = vpop.f32.mrb[0].mxu0
  %v1988 = vadd.f32 %v1948, %v1987
  %v1989 = vpop.f32.mrb[0].mxu0
  %v1990 = vpop.f32.mrb[0].mxu0
  %v1991 = vpop.f32.mrb[0].mxu0
  %1992 = vdwg.mxu0
  %1993 = vmatprep.subr.bf16.mxu0 0
  %1994 = vmatpush1.bf16.msra.mxu0 %v1477
  %1995 = vmatprep.subr.bf16.mxu0 0
  %1996 = vmatpush1.bf16.msra.mxu0 %v1478
  %1997 = vmatprep.subr.bf16.mxu0 0
  %1998 = vmatpush1.bf16.msra.mxu0 %v1479
  %1999 = vmatprep.subr.bf16.mxu0 0
  %2000 = vmatpush1.bf16.msra.mxu0 %v1480
  %2001 = vmatprep.subr.bf16.mxu0 0
  %2002 = vmatpush1.bf16.msra.mxu0 %v1481
  %2003 = vmatprep.subr.bf16.mxu0 0
  %2004 = vmatpush1.bf16.msra.mxu0 %v1482
  %2005 = vmatprep.subr.bf16.mxu0 0
  %2006 = vmatpush1.bf16.msra.mxu0 %v1483
  %2007 = vmatprep.subr.bf16.mxu0 0
  %2008 = vmatpush1.bf16.msra.mxu0 %v1484
  %2009 = vmatprep.subr.bf16.mxu0 0
  %2010 = vmatpush1.bf16.msra.mxu0 %v1485
  %2011 = vmatprep.subr.bf16.mxu0 0
  %2012 = vmatpush1.bf16.msra.mxu0 %v1486
  %2013 = vmatprep.subr.bf16.mxu0 0
  %2014 = vmatpush1.bf16.msra.mxu0 %v1487
  %2015 = vmatprep.subr.bf16.mxu0 0
  %2016 = vmatpush1.bf16.msra.mxu0 %v1488
  %2017 = vmatprep.subr.bf16.mxu0 0
  %2018 = vmatpush1.bf16.msra.mxu0 %v1489
  %2019 = vmatprep.subr.bf16.mxu0 0
  %2020 = vmatpush1.bf16.msra.mxu0 %v1490
  %2021 = vmatprep.subr.bf16.mxu0 0
  %2022 = vmatpush1.bf16.msra.mxu0 %v1491
  %2023 = vmatprep.subr.bf16.mxu0 0
  %2024 = vmatpush1.bf16.msra.mxu0 %v1492
  %2025 = vmatprep.mubr.bf16.mxu0 %v524
  %2026 = vmatmul.mubr.bf16.gmra.mrb[0].mxu0 %v522
  %v2027 = vpop.f32.mrb[0].mxu0
  %v2028 = vadd.f32 %v1988, %v2027
  %v2029 = vpop.f32.mrb[0].mxu0
  %v2030 = vpop.f32.mrb[0].mxu0
  %v2031 = vpop.f32.mrb[0].mxu0
  %2032 = vdwg.mxu0
  %2033 = vmatprep.subr.bf16.mxu0 0
  %2034 = vmatpush1.bf16.msra.mxu0 %v1493
  %2035 = vmatprep.subr.bf16.mxu0 0
  %2036 = vmatpush1.bf16.msra.mxu0 %v1494
  %2037 = vmatprep.subr.bf16.mxu0 0
  %2038 = vmatpush1.bf16.msra.mxu0 %v1495
  %2039 = vmatprep.subr.bf16.mxu0 0
  %2040 = vmatpush1.bf16.msra.mxu0 %v1496
  %2041 = vmatprep.subr.bf16.mxu0 0
  %2042 = vmatpush1.bf16.msra.mxu0 %v1497
  %2043 = vmatprep.subr.bf16.mxu0 0
  %2044 = vmatpush1.bf16.msra.mxu0 %v1498
  %2045 = vmatprep.subr.bf16.mxu0 0
  %2046 = vmatpush1.bf16.msra.mxu0 %v1499
  %2047 = vmatprep.subr.bf16.mxu0 0
  %2048 = vmatpush1.bf16.msra.mxu0 %v1500
  %2049 = vmatprep.subr.bf16.mxu0 0
  %2050 = vmatpush1.bf16.msra.mxu0 %v1501
  %2051 = vmatprep.subr.bf16.mxu0 0
  %2052 = vmatpush1.bf16.msra.mxu0 %v1502
  %2053 = vmatprep.subr.bf16.mxu0 0
  %2054 = vmatpush1.bf16.msra.mxu0 %v1503
  %2055 = vmatprep.subr.bf16.mxu0 0
  %2056 = vmatpush1.bf16.msra.mxu0 %v1504
  %2057 = vmatprep.subr.bf16.mxu0 0
  %2058 = vmatpush1.bf16.msra.mxu0 %v1505
  %2059 = vmatprep.subr.bf16.mxu0 0
  %2060 = vmatpush1.bf16.msra.mxu0 %v1506
  %2061 = vmatprep.subr.bf16.mxu0 0
  %2062 = vmatpush1.bf16.msra.mxu0 %v1507
  %2063 = vmatprep.subr.bf16.mxu0 0
  %2064 = vmatpush1.bf16.msra.mxu0 %v1508
  %2065 = vmatprep.mubr.bf16.mxu0 %v521
  %2066 = vmatmul.mubr.bf16.gmra.mrb[0].mxu0 %v507
  %v2067 = vpop.f32.mrb[0].mxu0
  %v2068 = vadd.f32 %v2028, %v2067
  %v2069 = vpop.f32.mrb[0].mxu0
  %v2070 = vpop.f32.mrb[0].mxu0
  %v2071 = vpop.f32.mrb[0].mxu0
  %2072 = vdwg.mxu0
  %2073 = vmatprep.subr.bf16.mxu0 0
  %2074 = vmatpush1.bf16.msra.mxu0 %v1509
  %2075 = vmatprep.subr.bf16.mxu0 0
  %2076 = vmatpush1.bf16.msra.mxu0 %v1510
  %2077 = vmatprep.subr.bf16.mxu0 0
  %2078 = vmatpush1.bf16.msra.mxu0 %v1511
  %2079 = vmatprep.subr.bf16.mxu0 0
  %2080 = vmatpush1.bf16.msra.mxu0 %v1512
  %2081 = vmatprep.subr.bf16.mxu0 0
  %2082 = vmatpush1.bf16.msra.mxu0 %v1513
  %2083 = vmatprep.subr.bf16.mxu0 0
  %2084 = vmatpush1.bf16.msra.mxu0 %v1514
  %2085 = vmatprep.subr.bf16.mxu0 0
  %2086 = vmatpush1.bf16.msra.mxu0 %v1515
  %2087 = vmatprep.subr.bf16.mxu0 0
  %2088 = vmatpush1.bf16.msra.mxu0 %v1516
  %2089 = vmatprep.subr.bf16.mxu0 0
  %2090 = vmatpush1.bf16.msra.mxu0 %v1517
  %2091 = vmatprep.subr.bf16.mxu0 0
  %2092 = vmatpush1.bf16.msra.mxu0 %v1518
  %2093 = vmatprep.subr.bf16.mxu0 0
  %2094 = vmatpush1.bf16.msra.mxu0 %v1519
  %2095 = vmatprep.subr.bf16.mxu0 0
  %2096 = vmatpush1.bf16.msra.mxu0 %v1520
  %2097 = vmatprep.subr.bf16.mxu0 0
  %2098 = vmatpush1.bf16.msra.mxu0 %v1521
  %2099 = vmatprep.subr.bf16.mxu0 0
  %2100 = vmatpush1.bf16.msra.mxu0 %v1522
  %2101 = vmatprep.subr.bf16.mxu0 0
  %2102 = vmatpush1.bf16.msra.mxu0 %v1523
  %2103 = vmatprep.subr.bf16.mxu0 0
  %2104 = vmatpush1.bf16.msra.mxu0 %v1524
  %2105 = vmatprep.mubr.bf16.mxu0 %v525
  %2106 = vmatmul.mubr.bf16.gmra.mrb[0].mxu0 %v523
  %v2107 = vpop.f32.mrb[0].mxu0
  %v2108 = vadd.f32 %v2068, %v2107
  %v2109 = vpop.f32.mrb[0].mxu0
  %v2110 = vpop.f32.mrb[0].mxu0
  %v2111 = vpop.f32.mrb[0].mxu0
  %2112 = vdwg.mxu0
  %2113 = vmatprep.subr.bf16.mxu0 0
  %2114 = vmatpush1.bf16.msra.mxu0 %v1525
  %2115 = vmatprep.subr.bf16.mxu0 0
  %2116 = vmatpush1.bf16.msra.mxu0 %v1526
  %2117 = vmatprep.subr.bf16.mxu0 0
  %2118 = vmatpush1.bf16.msra.mxu0 %v1527
  %2119 = vmatprep.subr.bf16.mxu0 0
  %2120 = vmatpush1.bf16.msra.mxu0 %v1528
  %2121 = vmatprep.subr.bf16.mxu0 0
  %2122 = vmatpush1.bf16.msra.mxu0 %v1529
  %2123 = vmatprep.subr.bf16.mxu0 0
  %2124 = vmatpush1.bf16.msra.mxu0 %v1530
  %2125 = vmatprep.subr.bf16.mxu0 0
  %2126 = vmatpush1.bf16.msra.mxu0 %v1531
  %2127 = vmatprep.subr.bf16.mxu0 0
  %2128 = vmatpush1.bf16.msra.mxu0 %v1532
  %2129 = vmatprep.subr.bf16.mxu0 0
  %2130 = vmatpush1.bf16.msra.mxu0 %v1533
  %2131 = vmatprep.subr.bf16.mxu0 0
  %2132 = vmatpush1.bf16.msra.mxu0 %v1534
  %2133 = vmatprep.subr.bf16.mxu0 0
  %2134 = vmatpush1.bf16.msra.mxu0 %v1535
  %2135 = vmatprep.subr.bf16.mxu0 0
  %2136 = vmatpush1.bf16.msra.mxu0 %v1536
  %2137 = vmatprep.subr.bf16.mxu0 0
  %2138 = vmatpush1.bf16.msra.mxu0 %v1537
  %2139 = vmatprep.subr.bf16.mxu0 0
  %2140 = vmatpush1.bf16.msra.mxu0 %v1538
  %2141 = vmatprep.subr.bf16.mxu0 0
  %2142 = vmatpush1.bf16.msra.mxu0 %v1539
  %2143 = vmatprep.subr.bf16.mxu0 0
  %2144 = vmatpush1.bf16.msra.mxu0 %v1540
  %2145 = vmatprep.mubr.bf16.mxu0 %v563
  %2146 = vmatmul.mubr.bf16.gmra.mrb[0].mxu0 %v549
  %v2147 = vpop.f32.mrb[0].mxu0
  %v2148 = vadd.f32 %v2108, %v2147
  %v2149 = vpop.f32.mrb[0].mxu0
  %v2150 = vpop.f32.mrb[0].mxu0
  %v2151 = vpop.f32.mrb[0].mxu0
  %2152 = vdwg.mxu0
  %2153 = vmatprep.subr.bf16.mxu0 0
  %2154 = vmatpush1.bf16.msra.mxu0 %v1541
  %2155 = vmatprep.subr.bf16.mxu0 0
  %2156 = vmatpush1.bf16.msra.mxu0 %v1542
  %2157 = vmatprep.subr.bf16.mxu0 0
  %2158 = vmatpush1.bf16.msra.mxu0 %v1543
  %2159 = vmatprep.subr.bf16.mxu0 0
  %2160 = vmatpush1.bf16.msra.mxu0 %v1544
  %2161 = vmatprep.subr.bf16.mxu0 0
  %2162 = vmatpush1.bf16.msra.mxu0 %v1545
  %2163 = vmatprep.subr.bf16.mxu0 0
  %2164 = vmatpush1.bf16.msra.mxu0 %v1546
  %2165 = vmatprep.subr.bf16.mxu0 0
  %2166 = vmatpush1.bf16.msra.mxu0 %v1547
  %2167 = vmatprep.subr.bf16.mxu0 0
  %2168 = vmatpush1.bf16.msra.mxu0 %v1548
  %2169 = vmatprep.subr.bf16.mxu0 0
  %2170 = vmatpush1.bf16.msra.mxu0 %v1549
  %2171 = vmatprep.subr.bf16.mxu0 0
  %2172 = vmatpush1.bf16.msra.mxu0 %v1550
  %2173 = vmatprep.subr.bf16.mxu0 0
  %2174 = vmatpush1.bf16.msra.mxu0 %v1551
  %2175 = vmatprep.subr.bf16.mxu0 0
  %2176 = vmatpush1.bf16.msra.mxu0 %v1552
  %2177 = vmatprep.subr.bf16.mxu0 0
  %2178 = vmatpush1.bf16.msra.mxu0 %v1553
  %2179 = vmatprep.subr.bf16.mxu0 0
  %2180 = vmatpush1.bf16.msra.mxu0 %v1554
  %2181 = vmatprep.subr.bf16.mxu0 0
  %2182 = vmatpush1.bf16.msra.mxu0 %v1555
  %2183 = vmatprep.subr.bf16.mxu0 0
  %2184 = vmatpush1.bf16.msra.mxu0 %v1556
  %2185 = vmatprep.mubr.bf16.mxu0 %v573
  %2186 = vmatmul.mubr.bf16.gmra.mrb[0].mxu0 %v571
  %v2187 = vpop.f32.mrb[0].mxu0
  %v2188 = vadd.f32 %v2148, %v2187
  %v2189 = vpop.f32.mrb[0].mxu0
  %v2190 = vpop.f32.mrb[0].mxu0
  %v2191 = vpop.f32.mrb[0].mxu0
  %2192 = vdwg.mxu0
  %2193 = vmatprep.subr.bf16.mxu0 0
  %2194 = vmatpush1.bf16.msra.mxu0 %v1557
  %2195 = vmatprep.subr.bf16.mxu0 0
  %2196 = vmatpush1.bf16.msra.mxu0 %v1558
  %2197 = vmatprep.subr.bf16.mxu0 0
  %2198 = vmatpush1.bf16.msra.mxu0 %v1559
  %2199 = vmatprep.subr.bf16.mxu0 0
  %2200 = vmatpush1.bf16.msra.mxu0 %v1560
  %2201 = vmatprep.subr.bf16.mxu0 0
  %2202 = vmatpush1.bf16.msra.mxu0 %v1561
  %2203 = vmatprep.subr.bf16.mxu0 0
  %2204 = vmatpush1.bf16.msra.mxu0 %v1562
  %2205 = vmatprep.subr.bf16.mxu0 0
  %2206 = vmatpush1.bf16.msra.mxu0 %v1563
  %2207 = vmatprep.subr.bf16.mxu0 0
  %2208 = vmatpush1.bf16.msra.mxu0 %v1564
  %2209 = vmatprep.subr.bf16.mxu0 0
  %2210 = vmatpush1.bf16.msra.mxu0 %v1565
  %2211 = vmatprep.subr.bf16.mxu0 0
  %2212 = vmatpush1.bf16.msra.mxu0 %v1566
  %2213 = vmatprep.subr.bf16.mxu0 0
  %2214 = vmatpush1.bf16.msra.mxu0 %v1567
  %2215 = vmatprep.subr.bf16.mxu0 0
  %2216 = vmatpush1.bf16.msra.mxu0 %v1568
  %2217 = vmatprep.subr.bf16.mxu0 0
  %2218 = vmatpush1.bf16.msra.mxu0 %v1569
  %2219 = vmatprep.subr.bf16.mxu0 0
  %2220 = vmatpush1.bf16.msra.mxu0 %v1570
  %2221 = vmatprep.subr.bf16.mxu0 0
  %2222 = vmatpush1.bf16.msra.mxu0 %v1571
  %2223 = vmatprep.subr.bf16.mxu0 0
  %2224 = vmatpush1.bf16.msra.mxu0 %v1572
  %2225 = vmatprep.mubr.bf16.mxu0 %v570
  %2226 = vmatmul.mubr.bf16.gmra.mrb[0].mxu0 %v556
  %v2227 = vpop.f32.mrb[0].mxu0
  %v2228 = vadd.f32 %v2188, %v2227
  %v2229 = vpop.f32.mrb[0].mxu0
  %v2230 = vpop.f32.mrb[0].mxu0
  %v2231 = vpop.f32.mrb[0].mxu0
  %2232 = vdwg.mxu0
  %2233 = vmatprep.subr.bf16.mxu0 0
  %2234 = vmatpush1.bf16.msra.mxu0 %v1573
  %2235 = vmatprep.subr.bf16.mxu0 0
  %2236 = vmatpush1.bf16.msra.mxu0 %v1574
  %2237 = vmatprep.subr.bf16.mxu0 0
  %2238 = vmatpush1.bf16.msra.mxu0 %v1575
  %2239 = vmatprep.subr.bf16.mxu0 0
  %2240 = vmatpush1.bf16.msra.mxu0 %v1576
  %2241 = vmatprep.subr.bf16.mxu0 0
  %2242 = vmatpush1.bf16.msra.mxu0 %v1577
  %2243 = vmatprep.subr.bf16.mxu0 0
  %2244 = vmatpush1.bf16.msra.mxu0 %v1578
  %2245 = vmatprep.subr.bf16.mxu0 0
  %2246 = vmatpush1.bf16.msra.mxu0 %v1579
  %2247 = vmatprep.subr.bf16.mxu0 0
  %2248 = vmatpush1.bf16.msra.mxu0 %v1580
  %2249 = vmatprep.subr.bf16.mxu0 0
  %2250 = vmatpush1.bf16.msra.mxu0 %v1581
  %2251 = vmatprep.subr.bf16.mxu0 0
  %2252 = vmatpush1.bf16.msra.mxu0 %v1582
  %2253 = vmatprep.subr.bf16.mxu0 0
  %2254 = vmatpush1.bf16.msra.mxu0 %v1583
  %2255 = vmatprep.subr.bf16.mxu0 0
  %2256 = vmatpush1.bf16.msra.mxu0 %v1584
  %2257 = vmatprep.subr.bf16.mxu0 0
  %2258 = vmatpush1.bf16.msra.mxu0 %v1585
  %2259 = vmatprep.subr.bf16.mxu0 0
  %2260 = vmatpush1.bf16.msra.mxu0 %v1586
  %2261 = vmatprep.subr.bf16.mxu0 0
  %2262 = vmatpush1.bf16.msra.mxu0 %v1587
  %2263 = vmatprep.subr.bf16.mxu0 0
  %2264 = vmatpush1.bf16.msra.mxu0 %v1588
  %2265 = vmatprep.mubr.bf16.mxu0 %v574
  %2266 = vmatmul.mubr.bf16.gmra.mrb[0].mxu0 %v572
  %v2267 = vpop.f32.mrb[0].mxu0
  %v2268 = vadd.f32 %v2228, %v2267
  %v2269 = vpop.f32.mrb[0].mxu0
  %v2270 = vpop.f32.mrb[0].mxu0
  %v2271 = vpop.f32.mrb[0].mxu0
  %2272 = vdwg.mxu0
  %2273 = vmatprep.subr.bf16.mxu0 0
  %2274 = vmatpush1.bf16.msra.mxu0 %v1589
  %2275 = vmatprep.subr.bf16.mxu0 0
  %2276 = vmatpush1.bf16.msra.mxu0 %v1590
  %2277 = vmatprep.subr.bf16.mxu0 0
  %2278 = vmatpush1.bf16.msra.mxu0 %v1591
  %2279 = vmatprep.subr.bf16.mxu0 0
  %2280 = vmatpush1.bf16.msra.mxu0 %v1592
  %2281 = vmatprep.subr.bf16.mxu0 0
  %2282 = vmatpush1.bf16.msra.mxu0 0
  %2283 = vmatprep.subr.bf16.mxu0 0
  %2284 = vmatpush1.bf16.msra.mxu0 0
  %2285 = vmatprep.subr.bf16.mxu0 0
  %2286 = vmatpush1.bf16.msra.mxu0 0
  %2287 = vmatprep.subr.bf16.mxu0 0
  %2288 = vmatpush1.bf16.msra.mxu0 0
  %2289 = vmatprep.subr.bf16.mxu0 0
  %2290 = vmatpush1.bf16.msra.mxu0 0
  %2291 = vmatprep.subr.bf16.mxu0 0
  %2292 = vmatpush1.bf16.msra.mxu0 0
  %2293 = vmatprep.subr.bf16.mxu0 0
  %2294 = vmatpush1.bf16.msra.mxu0 0
  %2295 = vmatprep.subr.bf16.mxu0 0
  %2296 = vmatpush1.bf16.msra.mxu0 0
  %2297 = vmatprep.subr.bf16.mxu0 0
  %2298 = vmatpush1.bf16.msra.mxu0 0
  %2299 = vmatprep.subr.bf16.mxu0 0
  %2300 = vmatpush1.bf16.msra.mxu0 0
  %2301 = vmatprep.subr.bf16.mxu0 0
  %2302 = vmatpush1.bf16.msra.mxu0 0
  %2303 = vmatprep.subr.bf16.mxu0 0
  %2304 = vmatpush1.bf16.msra.mxu0 0
  %2305 = vmatprep.mubr.bf16.mxu0 0
  %2306 = vmatmul.mubr.bf16.gmra.mrb[0].mxu0 %v1791
  %v2307 = vpop.f32.mrb[0].mxu0
  %v2308 = vadd.f32 %v2268, %v2307
  %v2309 = vpop.f32.mrb[0].mxu0
  %v2310 = vpop.f32.mrb[0].mxu0
  %v2311 = vpop.f32.mrb[0].mxu0
  %2312 = vdwg.mxu0
  %v2313 = vmax.f32 %v2308, 0.0
  %v2314 = vpack.c.bf16 %v2313, %v2313
  %v2315 = vld [vmem:[%s3] sm:$0xf]
  %v2316 = vld [vmem:[%s3 + $0x4] sm:$0xf]
  %v2317 = vld [vmem:[%s3 + $0x8] sm:$0xf]
  %v2318 = vld [vmem:[%s3 + $0xc] sm:$0xf]
  %v2319 = vld [vmem:[%s3 + $0x10] sm:$0xf]
  %v2320 = vld [vmem:[%s3 + $0x14] sm:$0xf]
  %v2321 = vld [vmem:[%s3 + $0x18] sm:$0xf]
  %v2322 = vld [vmem:[%s3 + $0x1c] sm:$0xf]
  %v2323 = vld [vmem:[%s3 + $0x20] sm:$0xf]
  %v2324 = vld [vmem:[%s3 + $0x24] sm:$0xf]
  %v2325 = vld [vmem:[%s3 + $0x28] sm:$0xf]
  %v2326 = vld [vmem:[%s3 + $0x2c] sm:$0xf]
  %v2327 = vld [vmem:[%s3 + $0x30] sm:$0xf]
  %v2328 = vld [vmem:[%s3 + $0x34] sm:$0xf]
  %v2329 = vld [vmem:[%s3 + $0x38] sm:$0xf]
  %v2330 = vld [vmem:[%s3 + $0x3c] sm:$0xf]
  %v2331 = vld [vmem:[%s4] sm:$0x1]
  %v2333 = vlaneseq
  %v2334 = vshrl.u32 %v2333, 7
  %v2335 = vsub.s32 0, %v2334
  %v2336 = vrot.slane %v2331, %v2335
  %v2354 = vunpack.c.l.b16 %v2315
  %v2355 = vunpack.c.l.b16 %v2316
  %v2356 = vunpack.c.l.b16 %v2317
  %v2357 = vunpack.c.l.b16 %v2318
  %v2358 = vunpack.c.l.b16 %v2319
  %v2359 = vunpack.c.l.b16 %v2320
  %v2360 = vunpack.c.l.b16 %v2321
  %v2361 = vunpack.c.l.b16 %v2322
  %v2362 = vunpack.c.l.b16 %v2323
  %v2363 = vunpack.c.l.b16 %v2324
  %v2364 = vunpack.c.l.b16 %v2325
  %v2365 = vunpack.c.l.b16 %v2326
  %v2366 = vunpack.c.l.b16 %v2327
  %v2367 = vunpack.c.l.b16 %v2328
  %v2368 = vunpack.c.l.b16 %v2329
  %v2369 = vunpack.c.l.b16 %v2330
  %v2370 = vpack.c.b16 %v2355, %v2354
  %v2371 = vpack.c.b16 %v2357, %v2356
  %v2372 = vpack.c.b16 %v2359, %v2358
  %v2373 = vpack.c.b16 %v2361, %v2360
  %v2374 = vpack.c.b16 %v2363, %v2362
  %v2375 = vpack.c.b16 %v2365, %v2364
  %v2376 = vpack.c.b16 %v2367, %v2366
  %v2377 = vpack.c.b16 %v2369, %v2368
  %2386 = vmatprep.subr.bf16.mxu0 0
  %2387 = vmatpush1.bf16.msra.mxu0 %v2370
  %2388 = vmatprep.subr.bf16.mxu0 0
  %2389 = vmatpush1.bf16.msra.mxu0 %v2371
  %2390 = vmatprep.subr.bf16.mxu0 0
  %2391 = vmatpush1.bf16.msra.mxu0 %v2372
  %2392 = vmatprep.subr.bf16.mxu0 0
  %2393 = vmatpush1.bf16.msra.mxu0 %v2373
  %2394 = vmatprep.subr.bf16.mxu0 0
  %2395 = vmatpush1.bf16.msra.mxu0 %v2374
  %2396 = vmatprep.subr.bf16.mxu0 0
  %2397 = vmatpush1.bf16.msra.mxu0 %v2375
  %2398 = vmatprep.subr.bf16.mxu0 0
  %2399 = vmatpush1.bf16.msra.mxu0 %v2376
  %2400 = vmatprep.subr.bf16.mxu0 0
  %2401 = vmatpush1.bf16.msra.mxu0 %v2377
  %2402 = vmatprep.subr.bf16.mxu0 0
  %2403 = vmatpush1.bf16.msra.mxu0 0
  %2404 = vmatprep.subr.bf16.mxu0 0
  %2405 = vmatpush1.bf16.msra.mxu0 0
  %2406 = vmatprep.subr.bf16.mxu0 0
  %2407 = vmatpush1.bf16.msra.mxu0 0
  %2408 = vmatprep.subr.bf16.mxu0 0
  %2409 = vmatpush1.bf16.msra.mxu0 0
  %2410 = vmatprep.subr.bf16.mxu0 0
  %2411 = vmatpush1.bf16.msra.mxu0 0
  %2412 = vmatprep.subr.bf16.mxu0 0
  %2413 = vmatpush1.bf16.msra.mxu0 0
  %2414 = vmatprep.subr.bf16.mxu0 0
  %2415 = vmatpush1.bf16.msra.mxu0 0
  %2416 = vmatprep.subr.bf16.mxu0 0
  %2417 = vmatpush1.bf16.msra.mxu0 0
  %2418 = vmatprep.mubr.bf16.mxu0 0
  %2419 = vmatmul.mubr.bf16.gmra.mrb[0].mxu0 %v2314
  %v2420 = vpop.f32.mrb[0].mxu0
  %v2421 = vadd.f32 %v2336, %v2420
  %v2422 = vpop.f32.mrb[0].mxu0
  %v2423 = vpop.f32.mrb[0].mxu0
  %v2424 = vpop.f32.mrb[0].mxu0
  %2425 = vdwg.mxu0
  %2426 = vst [vmem:[%s5] sm:$0x3] %v2421
  // Predicated region
  $region22: #{model_forward.7} parent=0 // pred_check
    _
  $region23: #{model_forward.7} parent=0 // pred_check_branch
    %2428 = sbr.rel (0) target = $region25
  $region24: #{model_forward.7} parent=0 // pred_region
    _
  $region25: #{model_forward.7} parent=0 // pred_fallthru
    _
  // Predicated region
  $region26: #{model_forward.7} parent=0 // pred_check
    _
  $region27: #{model_forward.7} parent=0 // pred_check_branch
    %2430 = sbr.rel (0) target = $region29
  $region28: #{model_forward.7} parent=0 // pred_region
    _
  $region29: #{model_forward.7} parent=0 // pred_fallthru
    _

</llo_original>
